<compile_context>
chip_gen: v6e
topology: v6e:2x2x1
jax: 0.10.0
libtpu: 0.0.40
codegen_flags: <defaults>
</compile_context>

<pallas_src>
import numpy as np
import jax
import jax.numpy as jnp
from jax.experimental import pallas as pl
from jax.experimental.pallas import tpu as pltpu

# ---- module hyper-parameters (MLPNet_linear defaults) ----
D_IN = 3
D_MID = 256
D_OUT = 1
N_MID = 8
BIAS = 0.5
SKIP = N_MID // 2          # skip-concat happens at layer l == 4
INV_SQRT2 = float(1.0 / np.sqrt(2.0))


def mlp_kernel(pos_ref, w0_ref, b0_ref, wmid_ref, bmid_ref, w4b_ref,
               w8_ref, b8_ref, out_ref):
    pos = pos_ref[...]                                     # (TM, 3) f32
    w0 = w0_ref[...]                                       # (3, D_MID) f32
    w4b = w4b_ref[...]                                     # (3, D_MID) f32

    # ---- layer 0: K=3 -> three VPU broadcast multiply-adds (skip the MXU) ----
    x = (pos[:, 0:1] * w0[0:1, :]
         + pos[:, 1:2] * w0[1:2, :]
         + pos[:, 2:3] * w0[2:3, :]
         + b0_ref[...])
    # ReLU + downcast fused: activations stay bf16 between layers (MXU input
    # dtype), so no per-layer f32->bf16 cast pass and half the spill traffic.
    x = jnp.maximum(x, 0.0).astype(jnp.bfloat16)           # (TM, D_MID) bf16

    # ---- layers 1..7: bf16 MXU matmuls, f32 accumulation / bias / relu ----
    for i in range(N_MID - 1):
        l = i + 1
        y = jnp.dot(x, wmid_ref[i], preferred_element_type=jnp.float32)
        if l == SKIP:
            # cat([x, pos], -1)/sqrt(2) @ W4  ==  (x @ W4a + pos @ W4b) / sqrt(2)
            pos_c = (pos[:, 0:1] * w4b[0:1, :]
                     + pos[:, 1:2] * w4b[1:2, :]
                     + pos[:, 2:3] * w4b[2:3, :])
            y = (y + pos_c) * INV_SQRT2
        y = y + bmid_ref[i, :][None, :]
        x = jnp.maximum(y, 0.0).astype(jnp.bfloat16)

    # ---- layer 8: N=1 -> elementwise mul by the W8 row + lane-sum on XLU ----
    out = jnp.sum(x * w8_ref[...], axis=-1, keepdims=True) + b8_ref[...]
    out_ref[...] = out                                     # (TM, 1), no relu


def init_params(key):
    """Deterministic geometric init (geometric_init=True, inside_grad=True).
    Weights stored as (in, out), i.e. already transposed vs torch.nn.Linear."""
    keys = jax.random.split(key, N_MID + 1)

    def w(k, din, dout, mean, std):
        return (mean + std * jax.random.normal(k, (din, dout))).astype(jnp.float32)

    W0 = w(keys[0], D_IN, D_MID, 0.0, np.sqrt(2.0) / np.sqrt(D_MID))
    b0 = jnp.zeros((D_MID,), jnp.float32)
    Ws, bs = [], []
    for l in range(1, N_MID):                      # lin1 .. lin7
        dout = D_MID - D_IN if (l + 1) == SKIP else D_MID
        Ws.append(w(keys[l], D_MID, dout, 0.0, np.sqrt(2.0) / np.sqrt(dout)))
        bs.append(jnp.zeros((dout,), jnp.float32))
    W8 = w(keys[N_MID], D_MID, D_OUT, -np.sqrt(np.pi) / np.sqrt(D_MID), 1e-4)
    b8 = jnp.full((D_OUT,), BIAS, jnp.float32)
    return W0, b0, Ws, bs, W8, b8


def ref_forward(pos, params):
    """Pure-JAX f32 reference mirroring the torch forward()."""
    W0, b0, Ws, bs, W8, b8 = params
    x = jnp.maximum(pos @ W0 + b0, 0.0)
    for i in range(N_MID - 1):
        l = i + 1
        if l == SKIP:
            x = jnp.concatenate([x, pos], axis=-1) / np.sqrt(2.0)
        x = jnp.maximum(x @ Ws[i] + bs[i], 0.0)
    return x @ W8 + b8


def prepare_params(params):
    """One-time repack into kernel-friendly shapes (hoisted out of the forward):
    hidden weights stacked + bf16, lin3 padded 253->256, lin4 split into the
    256-row part (stack) and the 3-row pos part (VPU)."""
    W0, b0, Ws, bs, W8, b8 = params
    W0p = W0.astype(jnp.float32)                              # (3, 256)
    b0p = b0.reshape(1, D_MID).astype(jnp.float32)
    wmid, bmid, W4b = [], [], None
    for i in range(N_MID - 1):
        l = i + 1
        Wl, bl = Ws[i], bs[i]
        if l + 1 == SKIP:
            # lin3: output 253 -> pad columns to 256 (padded cols stay zero)
            Wl = jnp.zeros((D_MID, D_MID), jnp.float32).at[:, :D_MID - D_IN].set(Wl)
            bl = jnp.zeros((D_MID,), jnp.float32).at[:D_MID - D_IN].set(bl)
        elif l == SKIP:
            # lin4: first 253 rows act on x (zero-padded to 256), last 3 on pos
            Wa = jnp.zeros((D_MID, D_MID), jnp.float32).at[:D_MID - D_IN].set(
                Wl[:D_MID - D_IN])
            W4b = Wl[D_MID - D_IN:].astype(jnp.float32)        # (3, 256)
            Wl = Wa
        wmid.append(Wl)
        bmid.append(bl)
    wmid = jnp.stack(wmid).astype(jnp.bfloat16)                # (7, 256, 256) bf16
    bmid = jnp.stack(bmid).astype(jnp.float32)                 # (7, 256) f32
    W8p = W8.reshape(1, D_MID).astype(jnp.float32)             # (1, 256) row
    b8p = b8.reshape(1, 1).astype(jnp.float32)                 # (1, 1)
    return W0p, b0p, wmid, bmid, W4b, W8p, b8p


def mlp_pallas(pos, prepared, tm=1024):
    W0p, b0p, wmid, bmid, W4b, W8p, b8p = prepared
    lead = pos.shape[:-1]
    pos2 = pos.reshape(-1, D_IN).astype(jnp.float32)
    n = pos2.shape[0]

    # Row tile: large (1024 default) to amortize per-grid-step overhead and
    # keep the MXU pipe full, clamped to the (8-aligned) problem size for
    # small inputs.
    tm_eff = max(8, min(tm, ((n + 7) // 8) * 8))
    n_pad = ((n + tm_eff - 1) // tm_eff) * tm_eff
    if n_pad != n:
        pos2 = jnp.zeros((n_pad, D_IN), jnp.float32).at[:n].set(pos2)

    grid = (n_pad // tm_eff,)
    out = pl.pallas_call(
        mlp_kernel,
        out_shape=jax.ShapeDtypeStruct((n_pad, D_OUT), jnp.float32),
        grid_spec=pltpu.PrefetchScalarGridSpec(
            num_scalar_prefetch=0,
            grid=grid,
            in_specs=[
                pl.BlockSpec((tm_eff, D_IN), lambda i: (i, 0)),          # pos rows
                pl.BlockSpec((D_IN, D_MID), lambda i: (0, 0)),           # W0 (3,256)
                pl.BlockSpec((1, D_MID), lambda i: (0, 0)),              # b0
                pl.BlockSpec((N_MID - 1, D_MID, D_MID),
                             lambda i: (0, 0, 0)),                       # W1..7 bf16
                pl.BlockSpec((N_MID - 1, D_MID), lambda i: (0, 0)),      # b1..7
                pl.BlockSpec((D_IN, D_MID), lambda i: (0, 0)),           # W4 pos part
                pl.BlockSpec((1, D_MID), lambda i: (0, 0)),              # W8 row
                pl.BlockSpec((1, 1), lambda i: (0, 0)),                  # b8
            ],
            out_specs=pl.BlockSpec((tm_eff, D_OUT), lambda i: (i, 0)),
        ),
        compiler_params=pltpu.CompilerParams(
            dimension_semantics=("parallel",),
            vmem_limit_bytes=32 * 1024 * 1024,
        ),
    )(pos2, W0p, b0p, wmid, bmid, W4b, W8p, b8p)

    return out[:n].reshape(*lead, D_OUT)


if __name__ == "__main__":
    key = jax.random.PRNGKey(0)
    k_param, k_pos = jax.random.split(key)
    params = init_params(k_param)
    prepared = prepare_params(params)                       # hoisted, one-time
    pos = jax.random.normal(k_pos, (2, 64, D_IN), dtype=jnp.float32)   # (*, N, C)

    out = mlp_pallas(pos, prepared, tm=1024)
    out = jax.block_until_ready(out)

    ref = ref_forward(pos, params)
    assert out.shape == (2, 64, D_OUT), out.shape
    # bf16 MXU matmuls / bf16 inter-layer activations (f32 accumulation) across
    # 7 hidden layers -> loosened tolerance vs the pure-f32 reference.
    assert jnp.allclose(out, ref, atol=5e-2, rtol=5e-2), float(
        jnp.max(jnp.abs(out - ref)))
    print("KERNEL_OK")

# TODO(synk): the torch module's gradient() helper (autograd-based normals) is
# not part of forward() and is not implemented here.
</pallas_src>

<mosaic_0001>
module attributes {stable_mosaic.version = 11 : i64} {
  func.func @mlp_kernel(%arg0: i32, %arg1: memref<128x3xf32, #tpu.memory_space<vmem>>, %arg2: memref<3x256xf32, #tpu.memory_space<vmem>>, %arg3: memref<1x256xf32, #tpu.memory_space<vmem>>, %arg4: memref<7x256x256xbf16, #tpu.memory_space<vmem>>, %arg5: memref<7x256xf32, #tpu.memory_space<vmem>>, %arg6: memref<3x256xf32, #tpu.memory_space<vmem>>, %arg7: memref<1x256xf32, #tpu.memory_space<vmem>>, %arg8: memref<1x1xf32, #tpu.memory_space<vmem>>, %arg9: memref<128x1xf32, #tpu.memory_space<vmem>>) attributes {dimension_semantics = [#tpu.dimension_semantics<parallel>], iteration_bounds = array<i64: 1>, scalar_prefetch = 0 : i64, scratch_operands = 0 : i64, tpu.core_type = #tpu.core_type<tc>, window_params = [{transform_indices = @transform_0, window_bounds = array<i64: 128, 3>}, {pipeline_mode = #tpu.pipeline_mode<synchronous>, transform_indices = @transform_1, window_bounds = array<i64: 3, 256>}, {pipeline_mode = #tpu.pipeline_mode<synchronous>, transform_indices = @transform_2, window_bounds = array<i64: 1, 256>}, {pipeline_mode = #tpu.pipeline_mode<synchronous>, transform_indices = @transform_3, window_bounds = array<i64: 7, 256, 256>}, {pipeline_mode = #tpu.pipeline_mode<synchronous>, transform_indices = @transform_4, window_bounds = array<i64: 7, 256>}, {pipeline_mode = #tpu.pipeline_mode<synchronous>, transform_indices = @transform_5, window_bounds = array<i64: 3, 256>}, {pipeline_mode = #tpu.pipeline_mode<synchronous>, transform_indices = @transform_6, window_bounds = array<i64: 1, 256>}, {pipeline_mode = #tpu.pipeline_mode<synchronous>, transform_indices = @transform_7, window_bounds = array<i64: 1, 1>}, {transform_indices = @transform_8, window_bounds = array<i64: 128, 1>}]} {
    %c0 = arith.constant 0 : index
    %c0_0 = arith.constant 0 : index
    %0 = vector.load %arg1[%c0, %c0_0] : memref<128x3xf32, #tpu.memory_space<vmem>>, vector<128x3xf32>
    %c0_1 = arith.constant 0 : index
    %c0_2 = arith.constant 0 : index
    %1 = vector.load %arg2[%c0_1, %c0_2] : memref<3x256xf32, #tpu.memory_space<vmem>>, vector<3x256xf32>
    %c0_3 = arith.constant 0 : index
    %c0_4 = arith.constant 0 : index
    %2 = vector.load %arg6[%c0_3, %c0_4] : memref<3x256xf32, #tpu.memory_space<vmem>>, vector<3x256xf32>
    %3 = vector.extract_strided_slice %0 {offsets = [0, 0], sizes = [128, 1], strides = [1, 1]} : vector<128x3xf32> to vector<128x1xf32>
    %4 = vector.extract_strided_slice %1 {offsets = [0, 0], sizes = [1, 256], strides = [1, 1]} : vector<3x256xf32> to vector<1x256xf32>
    %5 = vector.broadcast %3 : vector<128x1xf32> to vector<128x256xf32>
    %6 = vector.broadcast %4 : vector<1x256xf32> to vector<128x256xf32>
    %7 = arith.mulf %5, %6 : vector<128x256xf32>
    %8 = vector.extract_strided_slice %0 {offsets = [0, 1], sizes = [128, 1], strides = [1, 1]} : vector<128x3xf32> to vector<128x1xf32>
    %9 = vector.extract_strided_slice %1 {offsets = [1, 0], sizes = [1, 256], strides = [1, 1]} : vector<3x256xf32> to vector<1x256xf32>
    %10 = vector.broadcast %8 : vector<128x1xf32> to vector<128x256xf32>
    %11 = vector.broadcast %9 : vector<1x256xf32> to vector<128x256xf32>
    %12 = arith.mulf %10, %11 : vector<128x256xf32>
    %13 = arith.addf %7, %12 : vector<128x256xf32>
    %14 = vector.extract_strided_slice %0 {offsets = [0, 2], sizes = [128, 1], strides = [1, 1]} : vector<128x3xf32> to vector<128x1xf32>
    %15 = vector.extract_strided_slice %1 {offsets = [2, 0], sizes = [1, 256], strides = [1, 1]} : vector<3x256xf32> to vector<1x256xf32>
    %16 = vector.broadcast %14 : vector<128x1xf32> to vector<128x256xf32>
    %17 = vector.broadcast %15 : vector<1x256xf32> to vector<128x256xf32>
    %18 = arith.mulf %16, %17 : vector<128x256xf32>
    %19 = arith.addf %13, %18 : vector<128x256xf32>
    %c0_5 = arith.constant 0 : index
    %c0_6 = arith.constant 0 : index
    %20 = vector.load %arg3[%c0_5, %c0_6] : memref<1x256xf32, #tpu.memory_space<vmem>>, vector<1x256xf32>
    %21 = vector.broadcast %20 : vector<1x256xf32> to vector<128x256xf32>
    %22 = arith.addf %19, %21 : vector<128x256xf32>
    %cst = arith.constant 0.000000e+00 : f32
    %23 = vector.broadcast %cst : f32 to vector<128x256xf32>
    %24 = arith.maximumf %22, %23 : vector<128x256xf32>
    %25 = arith.truncf %24 : vector<128x256xf32> to vector<128x256xbf16>
    %c0_7 = arith.constant 0 : index
    %c0_8 = arith.constant 0 : index
    %c0_9 = arith.constant 0 : index
    %26 = vector.load %arg4[%c0_7, %c0_8, %c0_9] : memref<7x256x256xbf16, #tpu.memory_space<vmem>>, vector<1x256x256xbf16>
    %27 = vector.shape_cast %26 : vector<1x256x256xbf16> to vector<256x256xbf16>
    %cst_10 = arith.constant dense<0.000000e+00> : vector<128x256xf32>
    %28 = tpu.matmul %25, %27, %cst_10 {dimension_numbers = #tpu.dot_dimension_numbers<[1], [0], [0], [1], [0, 0, 1, 1], [], []>} : vector<128x256xbf16>, vector<256x256xbf16>, vector<128x256xf32> -> vector<128x256xf32>
    %c0_11 = arith.constant 0 : index
    %c0_12 = arith.constant 0 : index
    %29 = vector.load %arg5[%c0_11, %c0_12] : memref<7x256xf32, #tpu.memory_space<vmem>>, vector<1x256xf32>
    %30 = vector.shape_cast %29 : vector<1x256xf32> to vector<256xf32>
    %31 = vector.shape_cast %30 : vector<256xf32> to vector<1x256xf32>
    %32 = vector.broadcast %31 : vector<1x256xf32> to vector<128x256xf32>
    %33 = arith.addf %28, %32 : vector<128x256xf32>
    %cst_13 = arith.constant 0.000000e+00 : f32
    %34 = vector.broadcast %cst_13 : f32 to vector<128x256xf32>
    %35 = arith.maximumf %33, %34 : vector<128x256xf32>
    %36 = arith.truncf %35 : vector<128x256xf32> to vector<128x256xbf16>
    %c1 = arith.constant 1 : index
    %c0_14 = arith.constant 0 : index
    %c0_15 = arith.constant 0 : index
    %37 = vector.load %arg4[%c1, %c0_14, %c0_15] : memref<7x256x256xbf16, #tpu.memory_space<vmem>>, vector<1x256x256xbf16>
    %38 = vector.shape_cast %37 : vector<1x256x256xbf16> to vector<256x256xbf16>
    %cst_16 = arith.constant dense<0.000000e+00> : vector<128x256xf32>
    %39 = tpu.matmul %36, %38, %cst_16 {dimension_numbers = #tpu.dot_dimension_numbers<[1], [0], [0], [1], [0, 0, 1, 1], [], []>} : vector<128x256xbf16>, vector<256x256xbf16>, vector<128x256xf32> -> vector<128x256xf32>
    %c1_17 = arith.constant 1 : index
    %c0_18 = arith.constant 0 : index
    %40 = vector.load %arg5[%c1_17, %c0_18] : memref<7x256xf32, #tpu.memory_space<vmem>>, vector<1x256xf32>
    %41 = vector.shape_cast %40 : vector<1x256xf32> to vector<256xf32>
    %42 = vector.shape_cast %41 : vector<256xf32> to vector<1x256xf32>
    %43 = vector.broadcast %42 : vector<1x256xf32> to vector<128x256xf32>
    %44 = arith.addf %39, %43 : vector<128x256xf32>
    %cst_19 = arith.constant 0.000000e+00 : f32
    %45 = vector.broadcast %cst_19 : f32 to vector<128x256xf32>
    %46 = arith.maximumf %44, %45 : vector<128x256xf32>
    %47 = arith.truncf %46 : vector<128x256xf32> to vector<128x256xbf16>
    %c2 = arith.constant 2 : index
    %c0_20 = arith.constant 0 : index
    %c0_21 = arith.constant 0 : index
    %48 = vector.load %arg4[%c2, %c0_20, %c0_21] : memref<7x256x256xbf16, #tpu.memory_space<vmem>>, vector<1x256x256xbf16>
    %49 = vector.shape_cast %48 : vector<1x256x256xbf16> to vector<256x256xbf16>
    %cst_22 = arith.constant dense<0.000000e+00> : vector<128x256xf32>
    %50 = tpu.matmul %47, %49, %cst_22 {dimension_numbers = #tpu.dot_dimension_numbers<[1], [0], [0], [1], [0, 0, 1, 1], [], []>} : vector<128x256xbf16>, vector<256x256xbf16>, vector<128x256xf32> -> vector<128x256xf32>
    %c2_23 = arith.constant 2 : index
    %c0_24 = arith.constant 0 : index
    %51 = vector.load %arg5[%c2_23, %c0_24] : memref<7x256xf32, #tpu.memory_space<vmem>>, vector<1x256xf32>
    %52 = vector.shape_cast %51 : vector<1x256xf32> to vector<256xf32>
    %53 = vector.shape_cast %52 : vector<256xf32> to vector<1x256xf32>
    %54 = vector.broadcast %53 : vector<1x256xf32> to vector<128x256xf32>
    %55 = arith.addf %50, %54 : vector<128x256xf32>
    %cst_25 = arith.constant 0.000000e+00 : f32
    %56 = vector.broadcast %cst_25 : f32 to vector<128x256xf32>
    %57 = arith.maximumf %55, %56 : vector<128x256xf32>
    %58 = arith.truncf %57 : vector<128x256xf32> to vector<128x256xbf16>
    %c3 = arith.constant 3 : index
    %c0_26 = arith.constant 0 : index
    %c0_27 = arith.constant 0 : index
    %59 = vector.load %arg4[%c3, %c0_26, %c0_27] : memref<7x256x256xbf16, #tpu.memory_space<vmem>>, vector<1x256x256xbf16>
    %60 = vector.shape_cast %59 : vector<1x256x256xbf16> to vector<256x256xbf16>
    %cst_28 = arith.constant dense<0.000000e+00> : vector<128x256xf32>
    %61 = tpu.matmul %58, %60, %cst_28 {dimension_numbers = #tpu.dot_dimension_numbers<[1], [0], [0], [1], [0, 0, 1, 1], [], []>} : vector<128x256xbf16>, vector<256x256xbf16>, vector<128x256xf32> -> vector<128x256xf32>
    %62 = vector.extract_strided_slice %0 {offsets = [0, 0], sizes = [128, 1], strides = [1, 1]} : vector<128x3xf32> to vector<128x1xf32>
    %63 = vector.extract_strided_slice %2 {offsets = [0, 0], sizes = [1, 256], strides = [1, 1]} : vector<3x256xf32> to vector<1x256xf32>
    %64 = vector.broadcast %62 : vector<128x1xf32> to vector<128x256xf32>
    %65 = vector.broadcast %63 : vector<1x256xf32> to vector<128x256xf32>
    %66 = arith.mulf %64, %65 : vector<128x256xf32>
    %67 = vector.extract_strided_slice %0 {offsets = [0, 1], sizes = [128, 1], strides = [1, 1]} : vector<128x3xf32> to vector<128x1xf32>
    %68 = vector.extract_strided_slice %2 {offsets = [1, 0], sizes = [1, 256], strides = [1, 1]} : vector<3x256xf32> to vector<1x256xf32>
    %69 = vector.broadcast %67 : vector<128x1xf32> to vector<128x256xf32>
    %70 = vector.broadcast %68 : vector<1x256xf32> to vector<128x256xf32>
    %71 = arith.mulf %69, %70 : vector<128x256xf32>
    %72 = arith.addf %66, %71 : vector<128x256xf32>
    %73 = vector.extract_strided_slice %0 {offsets = [0, 2], sizes = [128, 1], strides = [1, 1]} : vector<128x3xf32> to vector<128x1xf32>
    %74 = vector.extract_strided_slice %2 {offsets = [2, 0], sizes = [1, 256], strides = [1, 1]} : vector<3x256xf32> to vector<1x256xf32>
    %75 = vector.broadcast %73 : vector<128x1xf32> to vector<128x256xf32>
    %76 = vector.broadcast %74 : vector<1x256xf32> to vector<128x256xf32>
    %77 = arith.mulf %75, %76 : vector<128x256xf32>
    %78 = arith.addf %72, %77 : vector<128x256xf32>
    %79 = arith.addf %61, %78 : vector<128x256xf32>
    %cst_29 = arith.constant 0.707106769 : f32
    %80 = vector.broadcast %cst_29 : f32 to vector<128x256xf32>
    %81 = arith.mulf %79, %80 : vector<128x256xf32>
    %c3_30 = arith.constant 3 : index
    %c0_31 = arith.constant 0 : index
    %82 = vector.load %arg5[%c3_30, %c0_31] : memref<7x256xf32, #tpu.memory_space<vmem>>, vector<1x256xf32>
    %83 = vector.shape_cast %82 : vector<1x256xf32> to vector<256xf32>
    %84 = vector.shape_cast %83 : vector<256xf32> to vector<1x256xf32>
    %85 = vector.broadcast %84 : vector<1x256xf32> to vector<128x256xf32>
    %86 = arith.addf %81, %85 : vector<128x256xf32>
    %cst_32 = arith.constant 0.000000e+00 : f32
    %87 = vector.broadcast %cst_32 : f32 to vector<128x256xf32>
    %88 = arith.maximumf %86, %87 : vector<128x256xf32>
    %89 = arith.truncf %88 : vector<128x256xf32> to vector<128x256xbf16>
    %c4 = arith.constant 4 : index
    %c0_33 = arith.constant 0 : index
    %c0_34 = arith.constant 0 : index
    %90 = vector.load %arg4[%c4, %c0_33, %c0_34] : memref<7x256x256xbf16, #tpu.memory_space<vmem>>, vector<1x256x256xbf16>
    %91 = vector.shape_cast %90 : vector<1x256x256xbf16> to vector<256x256xbf16>
    %cst_35 = arith.constant dense<0.000000e+00> : vector<128x256xf32>
    %92 = tpu.matmul %89, %91, %cst_35 {dimension_numbers = #tpu.dot_dimension_numbers<[1], [0], [0], [1], [0, 0, 1, 1], [], []>} : vector<128x256xbf16>, vector<256x256xbf16>, vector<128x256xf32> -> vector<128x256xf32>
    %c4_36 = arith.constant 4 : index
    %c0_37 = arith.constant 0 : index
    %93 = vector.load %arg5[%c4_36, %c0_37] : memref<7x256xf32, #tpu.memory_space<vmem>>, vector<1x256xf32>
    %94 = vector.shape_cast %93 : vector<1x256xf32> to vector<256xf32>
    %95 = vector.shape_cast %94 : vector<256xf32> to vector<1x256xf32>
    %96 = vector.broadcast %95 : vector<1x256xf32> to vector<128x256xf32>
    %97 = arith.addf %92, %96 : vector<128x256xf32>
    %cst_38 = arith.constant 0.000000e+00 : f32
    %98 = vector.broadcast %cst_38 : f32 to vector<128x256xf32>
    %99 = arith.maximumf %97, %98 : vector<128x256xf32>
    %100 = arith.truncf %99 : vector<128x256xf32> to vector<128x256xbf16>
    %c5 = arith.constant 5 : index
    %c0_39 = arith.constant 0 : index
    %c0_40 = arith.constant 0 : index
    %101 = vector.load %arg4[%c5, %c0_39, %c0_40] : memref<7x256x256xbf16, #tpu.memory_space<vmem>>, vector<1x256x256xbf16>
    %102 = vector.shape_cast %101 : vector<1x256x256xbf16> to vector<256x256xbf16>
    %cst_41 = arith.constant dense<0.000000e+00> : vector<128x256xf32>
    %103 = tpu.matmul %100, %102, %cst_41 {dimension_numbers = #tpu.dot_dimension_numbers<[1], [0], [0], [1], [0, 0, 1, 1], [], []>} : vector<128x256xbf16>, vector<256x256xbf16>, vector<128x256xf32> -> vector<128x256xf32>
    %c5_42 = arith.constant 5 : index
    %c0_43 = arith.constant 0 : index
    %104 = vector.load %arg5[%c5_42, %c0_43] : memref<7x256xf32, #tpu.memory_space<vmem>>, vector<1x256xf32>
    %105 = vector.shape_cast %104 : vector<1x256xf32> to vector<256xf32>
    %106 = vector.shape_cast %105 : vector<256xf32> to vector<1x256xf32>
    %107 = vector.broadcast %106 : vector<1x256xf32> to vector<128x256xf32>
    %108 = arith.addf %103, %107 : vector<128x256xf32>
    %cst_44 = arith.constant 0.000000e+00 : f32
    %109 = vector.broadcast %cst_44 : f32 to vector<128x256xf32>
    %110 = arith.maximumf %108, %109 : vector<128x256xf32>
    %111 = arith.truncf %110 : vector<128x256xf32> to vector<128x256xbf16>
    %c6 = arith.constant 6 : index
    %c0_45 = arith.constant 0 : index
    %c0_46 = arith.constant 0 : index
    %112 = vector.load %arg4[%c6, %c0_45, %c0_46] : memref<7x256x256xbf16, #tpu.memory_space<vmem>>, vector<1x256x256xbf16>
    %113 = vector.shape_cast %112 : vector<1x256x256xbf16> to vector<256x256xbf16>
    %cst_47 = arith.constant dense<0.000000e+00> : vector<128x256xf32>
    %114 = tpu.matmul %111, %113, %cst_47 {dimension_numbers = #tpu.dot_dimension_numbers<[1], [0], [0], [1], [0, 0, 1, 1], [], []>} : vector<128x256xbf16>, vector<256x256xbf16>, vector<128x256xf32> -> vector<128x256xf32>
    %c6_48 = arith.constant 6 : index
    %c0_49 = arith.constant 0 : index
    %115 = vector.load %arg5[%c6_48, %c0_49] : memref<7x256xf32, #tpu.memory_space<vmem>>, vector<1x256xf32>
    %116 = vector.shape_cast %115 : vector<1x256xf32> to vector<256xf32>
    %117 = vector.shape_cast %116 : vector<256xf32> to vector<1x256xf32>
    %118 = vector.broadcast %117 : vector<1x256xf32> to vector<128x256xf32>
    %119 = arith.addf %114, %118 : vector<128x256xf32>
    %cst_50 = arith.constant 0.000000e+00 : f32
    %120 = vector.broadcast %cst_50 : f32 to vector<128x256xf32>
    %121 = arith.maximumf %119, %120 : vector<128x256xf32>
    %122 = arith.truncf %121 : vector<128x256xf32> to vector<128x256xbf16>
    %c0_51 = arith.constant 0 : index
    %c0_52 = arith.constant 0 : index
    %123 = vector.load %arg7[%c0_51, %c0_52] : memref<1x256xf32, #tpu.memory_space<vmem>>, vector<1x256xf32>
    %124 = arith.extf %122 : vector<128x256xbf16> to vector<128x256xf32>
    %125 = vector.broadcast %123 : vector<1x256xf32> to vector<128x256xf32>
    %126 = arith.mulf %124, %125 : vector<128x256xf32>
    %cst_53 = arith.constant dense<0.000000e+00> : vector<128xf32>
    %127 = vector.multi_reduction <add>, %126, %cst_53 [1] : vector<128x256xf32> to vector<128xf32>
    %128 = vector.shape_cast %127 : vector<128xf32> to vector<128x1xf32>
    %c0_54 = arith.constant 0 : index
    %c0_55 = arith.constant 0 : index
    %129 = vector.load %arg8[%c0_54, %c0_55] : memref<1x1xf32, #tpu.memory_space<vmem>>, vector<1x1xf32>
    %130 = vector.broadcast %129 : vector<1x1xf32> to vector<128x1xf32>
    %131 = arith.addf %128, %130 : vector<128x1xf32>
    %c0_56 = arith.constant 0 : index
    %c0_57 = arith.constant 0 : index
    %132 = vector.load %arg9[%c0_56, %c0_57] : memref<128x1xf32, #tpu.memory_space<vmem>>, vector<128x1xf32>
    tpu.vector_store %arg9[%c0_56, %c0_57], %131 {strides = array<i32>} : memref<128x1xf32, #tpu.memory_space<vmem>>, vector<128x1xf32>,
    return
  }
  func.func @transform_0(%arg0: i32) -> (i32, i32) {
    %c0_i32 = arith.constant 0 : i32
    %c0_i32_0 = arith.constant 0 : i32
    return %arg0, %c0_i32 : i32, i32
  }
  func.func @transform_1(%arg0: i32) -> (i32, i32) {
    %c0_i32 = arith.constant 0 : i32
    %c0_i32_0 = arith.constant 0 : i32
    %c0_i32_1 = arith.constant 0 : i32
    return %c0_i32, %c0_i32_0 : i32, i32
  }
  func.func @transform_2(%arg0: i32) -> (i32, i32) {
    %c0_i32 = arith.constant 0 : i32
    %c0_i32_0 = arith.constant 0 : i32
    %c0_i32_1 = arith.constant 0 : i32
    return %c0_i32, %c0_i32_0 : i32, i32
  }
  func.func @transform_3(%arg0: i32) -> (i32, i32, i32) {
    %c0_i32 = arith.constant 0 : i32
    %c0_i32_0 = arith.constant 0 : i32
    %c0_i32_1 = arith.constant 0 : i32
    %c0_i32_2 = arith.constant 0 : i32
    return %c0_i32, %c0_i32_0, %c0_i32_1 : i32, i32, i32
  }
  func.func @transform_4(%arg0: i32) -> (i32, i32) {
    %c0_i32 = arith.constant 0 : i32
    %c0_i32_0 = arith.constant 0 : i32
    %c0_i32_1 = arith.constant 0 : i32
    return %c0_i32, %c0_i32_0 : i32, i32
  }
  func.func @transform_5(%arg0: i32) -> (i32, i32) {
    %c0_i32 = arith.constant 0 : i32
    %c0_i32_0 = arith.constant 0 : i32
    %c0_i32_1 = arith.constant 0 : i32
    return %c0_i32, %c0_i32_0 : i32, i32
  }
  func.func @transform_6(%arg0: i32) -> (i32, i32) {
    %c0_i32 = arith.constant 0 : i32
    %c0_i32_0 = arith.constant 0 : i32
    %c0_i32_1 = arith.constant 0 : i32
    return %c0_i32, %c0_i32_0 : i32, i32
  }
  func.func @transform_7(%arg0: i32) -> (i32, i32) {
    %c0_i32 = arith.constant 0 : i32
    %c0_i32_0 = arith.constant 0 : i32
    %c0_i32_1 = arith.constant 0 : i32
    return %c0_i32, %c0_i32_0 : i32, i32
  }
  func.func @transform_8(%arg0: i32) -> (i32, i32) {
    %c0_i32 = arith.constant 0 : i32
    %c0_i32_0 = arith.constant 0 : i32
    return %arg0, %c0_i32 : i32, i32
  }
}

</mosaic_0001>

<llo_original>
// kernel: tpu_custom_call.1
$region0: #{tpu_custom_call.1}
  #allocation0 [shape = 'u32[]', space=smem, size = 0x4, offset = 0x4, fixed_abs, tag = 'smem constant byte address 0x4 - core index']
  #allocation1 [shape = 'u32[144,128]{1,0:T(1,128)}', space=vmem, size = 0x12000, scoped, tag = 'internal scratch']
  #allocation2 [shape = 'f32[1,1]{1,0:T(1,128)S(1)}', space=vmem, size = 0x200, scoped, tag = 'scoped memory for tpu_custom_call.1']
  %s0 = inlined_call_operand.vmem [shape: f32[128,3], index: 0, kind: input, shape index: {}]
  %s1 = inlined_call_operand.vmem [shape: f32[3,256], index: 1, kind: input, shape index: {}]
  %s2 = inlined_call_operand.vmem [shape: f32[1,256], index: 2, kind: input, shape index: {}]
  %s3 = inlined_call_operand.hbm [shape: bf16[7,256,256], index: 3, kind: input, shape index: {}]
  %s4 = inlined_call_operand.vmem [shape: f32[7,256], index: 4, kind: input, shape index: {}]
  %s5 = inlined_call_operand.vmem [shape: f32[3,256], index: 5, kind: input, shape index: {}]
  %s6 = inlined_call_operand.vmem [shape: f32[1,256], index: 6, kind: input, shape index: {}]
  %s7 = inlined_call_operand.<no memory space> [shape: f32[1,1], index: 7, kind: input, shape index: {}]
  %s8 = inlined_call_operand.vmem [shape: f32[128,1], index: 8, kind: output, shape index: {}]
  %s9 = sld [smem:[#allocation0]]
  $region46: #{tpu_custom_call.1} parent=0
    _
  %s11 = ssub.s32 1, %s9
  %s12 = scalar_select 0, %s11, %s9
  %v13 = vstv %s7
  %14 = vst [vmem:[#allocation2] sm:$0x1] %v13
  $region1: #{tpu_custom_call.1} parent=0
    #allocation3 [shape = 'u8[917504]{0}', space=vmem, size = 0xe0000, scoped, tag = 'input window, operand 3, single buffered']
    #allocation4 [shape = 's32[1]{0}', space=sflag, size = 0x4, scoped, tag = 'scoped memory for tpu_custom_call.1']
    %15 = vsyncpa [#allocation4], 0
    // Predicated region
    $region2: #{tpu_custom_call.1} parent=1 // pred_check
      _
    $region3: #{tpu_custom_call.1} parent=1 // pred_check_branch
      %17 = sbr.rel (0) target = $region5
    $region4: #{tpu_custom_call.1} parent=1 // pred_region
      _
    $region5: #{tpu_custom_call.1} parent=1 // pred_fallthru
      _
    // Predicated region
    $region6: #{tpu_custom_call.1} parent=1 // pred_check
      _
    $region7: #{tpu_custom_call.1} parent=1 // pred_check_branch
      %19 = sbr.rel (0) target = $region9
    $region8: #{tpu_custom_call.1} parent=1 // pred_region
      _
    $region9: #{tpu_custom_call.1} parent=1 // pred_fallthru
      _
    // Predicated region
    $region10: #{tpu_custom_call.1} parent=1 // pred_check
      _
    $region11: #{tpu_custom_call.1} parent=1 // pred_check_branch
      %21 = sbr.rel (0) target = $region13
    $region12: #{tpu_custom_call.1} parent=1 // pred_region
      _
    $region13: #{tpu_custom_call.1} parent=1 // pred_fallthru
      _
    // Predicated region
    $region14: #{tpu_custom_call.1} parent=1 // pred_check
      _
    $region15: #{tpu_custom_call.1} parent=1 // pred_check_branch
      %23 = sbr.rel (0) target = $region17
    $region16: #{tpu_custom_call.1} parent=1 // pred_region
      %s25 = ssub.s32 28672, 28672
      %26 = vsyncadd [#allocation4], %s25
      %s27 = sshll.u32 [#allocation3], 4
      %s28 = int_to_ptr.vmem [resolvable:$true] %s27
      %33 = dma.hbm_to_vmem [thread:$0]  %s3, 28672, %s28, [#allocation4], 128, 128, 8
    $region17: #{tpu_custom_call.1} parent=1 // pred_fallthru
      _
    // Predicated region
    $region18: #{tpu_custom_call.1} parent=1 // pred_check
      _
    $region19: #{tpu_custom_call.1} parent=1 // pred_check_branch
      %35 = sbr.rel (0) target = $region21
    $region20: #{tpu_custom_call.1} parent=1 // pred_region
      _
    $region21: #{tpu_custom_call.1} parent=1 // pred_fallthru
      _
    // Predicated region
    $region22: #{tpu_custom_call.1} parent=1 // pred_check
      _
    $region23: #{tpu_custom_call.1} parent=1 // pred_check_branch
      %37 = sbr.rel (0) target = $region25
    $region24: #{tpu_custom_call.1} parent=1 // pred_region
      _
    $region25: #{tpu_custom_call.1} parent=1 // pred_fallthru
      _
    // Predicated region
    $region26: #{tpu_custom_call.1} parent=1 // pred_check
      _
    $region27: #{tpu_custom_call.1} parent=1 // pred_check_branch
      %39 = sbr.rel (0) target = $region29
    $region28: #{tpu_custom_call.1} parent=1 // pred_region
      _
    $region29: #{tpu_custom_call.1} parent=1 // pred_fallthru
      _
    // Predicated region
    $region30: #{tpu_custom_call.1} parent=1 // pred_check
      _
    $region31: #{tpu_custom_call.1} parent=1 // pred_check_branch
      %41 = sbr.rel (0) target = $region33
    $region32: #{tpu_custom_call.1} parent=1 // pred_region
      _
    $region33: #{tpu_custom_call.1} parent=1 // pred_fallthru
      _
    // Predicated region
    $region34: #{tpu_custom_call.1} parent=1 // pred_check
      _
    $region35: #{tpu_custom_call.1} parent=1 // pred_check_branch
      %43 = sbr.rel (0) target = $region37
    $region36: #{tpu_custom_call.1} parent=1 // pred_region
      %44 = dma.done [#allocation4], 28672
    $region37: #{tpu_custom_call.1} parent=1 // pred_fallthru
      _
    %v45 = vld [vmem:[%s0] sm:$0xff]
    %v46 = vld [vmem:[%s0 + $0x8] sm:$0xff]
    %v47 = vld [vmem:[%s0 + $0x10] sm:$0xff]
    %v48 = vld [vmem:[%s0 + $0x18] sm:$0xff]
    %v49 = vld [vmem:[%s0 + $0x20] sm:$0xff]
    %v50 = vld [vmem:[%s0 + $0x28] sm:$0xff]
    %v51 = vld [vmem:[%s0 + $0x30] sm:$0xff]
    %v52 = vld [vmem:[%s0 + $0x38] sm:$0xff]
    %v53 = vld [vmem:[%s0 + $0x40] sm:$0xff]
    %v54 = vld [vmem:[%s0 + $0x48] sm:$0xff]
    %v55 = vld [vmem:[%s0 + $0x50] sm:$0xff]
    %v56 = vld [vmem:[%s0 + $0x58] sm:$0xff]
    %v57 = vld [vmem:[%s0 + $0x60] sm:$0xff]
    %v58 = vld [vmem:[%s0 + $0x68] sm:$0xff]
    %v59 = vld [vmem:[%s0 + $0x70] sm:$0xff]
    %v60 = vld [vmem:[%s0 + $0x78] sm:$0xff]
    %v61 = vld [vmem:[%s1] sm:$0x77]
    %v62 = vld [vmem:[%s5] sm:$0x77]
    %64 = vset.pattern.permute.xlu0 0
    %65 = vperm.xlu0 %64, %v45
    %v66 = vpop.permute.xlu0 %65
    %69 = vset.pattern.permute.xlu0 0
    %70 = vperm.xlu0 %69, %v46
    %v71 = vpop.permute.xlu0 %70
    %74 = vset.pattern.permute.xlu0 0
    %75 = vperm.xlu0 %74, %v47
    %v76 = vpop.permute.xlu0 %75
    %79 = vset.pattern.permute.xlu0 0
    %80 = vperm.xlu0 %79, %v48
    %v81 = vpop.permute.xlu0 %80
    %84 = vset.pattern.permute.xlu0 0
    %85 = vperm.xlu0 %84, %v49
    %v86 = vpop.permute.xlu0 %85
    %89 = vset.pattern.permute.xlu0 0
    %90 = vperm.xlu0 %89, %v50
    %v91 = vpop.permute.xlu0 %90
    %94 = vset.pattern.permute.xlu0 0
    %95 = vperm.xlu0 %94, %v51
    %v96 = vpop.permute.xlu0 %95
    %99 = vset.pattern.permute.xlu0 0
    %100 = vperm.xlu0 %99, %v52
    %v101 = vpop.permute.xlu0 %100
    %104 = vset.pattern.permute.xlu0 0
    %105 = vperm.xlu0 %104, %v53
    %v106 = vpop.permute.xlu0 %105
    %109 = vset.pattern.permute.xlu0 0
    %110 = vperm.xlu0 %109, %v54
    %v111 = vpop.permute.xlu0 %110
    %114 = vset.pattern.permute.xlu0 0
    %115 = vperm.xlu0 %114, %v55
    %v116 = vpop.permute.xlu0 %115
    %119 = vset.pattern.permute.xlu0 0
    %120 = vperm.xlu0 %119, %v56
    %v121 = vpop.permute.xlu0 %120
    %124 = vset.pattern.permute.xlu0 0
    %125 = vperm.xlu0 %124, %v57
    %v126 = vpop.permute.xlu0 %125
    %129 = vset.pattern.permute.xlu0 0
    %130 = vperm.xlu0 %129, %v58
    %v131 = vpop.permute.xlu0 %130
    %134 = vset.pattern.permute.xlu0 0
    %135 = vperm.xlu0 %134, %v59
    %v136 = vpop.permute.xlu0 %135
    %139 = vset.pattern.permute.xlu0 0
    %140 = vperm.xlu0 %139, %v60
    %v141 = vpop.permute.xlu0 %140
    %v144 = vlaneseq
    %v145 = vshrl.u32 %v144, 7
    %v146 = vsub.s32 0, %v145
    %v147 = vrot.slane %v61, %v146
    %v148 = vlaneseq
    %v149 = vshrl.u32 %v148, 7
    %v150 = vsub.s32 4, %v149
    %v151 = vrot.slane %v61, %v150
    %v154 = vlaneseq
    %v155 = vshrl.u32 %v154, 7
    %v156 = vsub.s32 0, %v155
    %v157 = vrot.slane %v147, %v156
    %v158 = vlaneseq
    %v159 = vshrl.u32 %v158, 7
    %v160 = vsub.s32 0, %v159
    %v161 = vrot.slane %v151, %v160
    %v162 = vmul.f32 %v66, %v157
    %v163 = vmul.f32 %v66, %v161
    %v164 = vmul.f32 %v71, %v157
    %v165 = vmul.f32 %v71, %v161
    %v166 = vmul.f32 %v76, %v157
    %v167 = vmul.f32 %v76, %v161
    %v168 = vmul.f32 %v81, %v157
    %v169 = vmul.f32 %v81, %v161
    %v170 = vmul.f32 %v86, %v157
    %v171 = vmul.f32 %v86, %v161
    %v172 = vmul.f32 %v91, %v157
    %v173 = vmul.f32 %v91, %v161
    %v174 = vmul.f32 %v96, %v157
    %v175 = vmul.f32 %v96, %v161
    %v176 = vmul.f32 %v101, %v157
    %v177 = vmul.f32 %v101, %v161
    %v178 = vmul.f32 %v106, %v157
    %v179 = vmul.f32 %v106, %v161
    %v180 = vmul.f32 %v111, %v157
    %v181 = vmul.f32 %v111, %v161
    %v182 = vmul.f32 %v116, %v157
    %v183 = vmul.f32 %v116, %v161
    %v184 = vmul.f32 %v121, %v157
    %v185 = vmul.f32 %v121, %v161
    %v186 = vmul.f32 %v126, %v157
    %v187 = vmul.f32 %v126, %v161
    %v188 = vmul.f32 %v131, %v157
    %v189 = vmul.f32 %v131, %v161
    %v190 = vmul.f32 %v136, %v157
    %v191 = vmul.f32 %v136, %v161
    %v192 = vmul.f32 %v141, %v157
    %v193 = vmul.f32 %v141, %v161
    %194 = vset.pattern.permute.xlu0 1
    %195 = vperm.xlu0 %194, %v45
    %v196 = vpop.permute.xlu0 %195
    %198 = vset.pattern.permute.xlu0 1
    %199 = vperm.xlu0 %198, %v46
    %v200 = vpop.permute.xlu0 %199
    %202 = vset.pattern.permute.xlu0 1
    %203 = vperm.xlu0 %202, %v47
    %v204 = vpop.permute.xlu0 %203
    %206 = vset.pattern.permute.xlu0 1
    %207 = vperm.xlu0 %206, %v48
    %v208 = vpop.permute.xlu0 %207
    %210 = vset.pattern.permute.xlu0 1
    %211 = vperm.xlu0 %210, %v49
    %v212 = vpop.permute.xlu0 %211
    %214 = vset.pattern.permute.xlu0 1
    %215 = vperm.xlu0 %214, %v50
    %v216 = vpop.permute.xlu0 %215
    %218 = vset.pattern.permute.xlu0 1
    %219 = vperm.xlu0 %218, %v51
    %v220 = vpop.permute.xlu0 %219
    %222 = vset.pattern.permute.xlu0 1
    %223 = vperm.xlu0 %222, %v52
    %v224 = vpop.permute.xlu0 %223
    %226 = vset.pattern.permute.xlu0 1
    %227 = vperm.xlu0 %226, %v53
    %v228 = vpop.permute.xlu0 %227
    %230 = vset.pattern.permute.xlu0 1
    %231 = vperm.xlu0 %230, %v54
    %v232 = vpop.permute.xlu0 %231
    %234 = vset.pattern.permute.xlu0 1
    %235 = vperm.xlu0 %234, %v55
    %v236 = vpop.permute.xlu0 %235
    %238 = vset.pattern.permute.xlu0 1
    %239 = vperm.xlu0 %238, %v56
    %v240 = vpop.permute.xlu0 %239
    %242 = vset.pattern.permute.xlu0 1
    %243 = vperm.xlu0 %242, %v57
    %v244 = vpop.permute.xlu0 %243
    %246 = vset.pattern.permute.xlu0 1
    %247 = vperm.xlu0 %246, %v58
    %v248 = vpop.permute.xlu0 %247
    %250 = vset.pattern.permute.xlu0 1
    %251 = vperm.xlu0 %250, %v59
    %v252 = vpop.permute.xlu0 %251
    %254 = vset.pattern.permute.xlu0 1
    %255 = vperm.xlu0 %254, %v60
    %v256 = vpop.permute.xlu0 %255
    %v258 = vlaneseq
    %v259 = vshrl.u32 %v258, 7
    %v260 = vsub.s32 1, %v259
    %v261 = vrot.slane %v61, %v260
    %v262 = vlaneseq
    %v263 = vshrl.u32 %v262, 7
    %v264 = vsub.s32 5, %v263
    %v265 = vrot.slane %v61, %v264
    %v268 = vlaneseq
    %v269 = vshrl.u32 %v268, 7
    %v270 = vsub.s32 1, %v269
    %v271 = vrot.slane %v261, %v270
    %v272 = vlaneseq
    %v273 = vshrl.u32 %v272, 7
    %v274 = vsub.s32 1, %v273
    %v275 = vrot.slane %v265, %v274
    %v276 = vmul.f32 %v196, %v271
    %v277 = vmul.f32 %v196, %v275
    %v278 = vmul.f32 %v200, %v271
    %v279 = vmul.f32 %v200, %v275
    %v280 = vmul.f32 %v204, %v271
    %v281 = vmul.f32 %v204, %v275
    %v282 = vmul.f32 %v208, %v271
    %v283 = vmul.f32 %v208, %v275
    %v284 = vmul.f32 %v212, %v271
    %v285 = vmul.f32 %v212, %v275
    %v286 = vmul.f32 %v216, %v271
    %v287 = vmul.f32 %v216, %v275
    %v288 = vmul.f32 %v220, %v271
    %v289 = vmul.f32 %v220, %v275
    %v290 = vmul.f32 %v224, %v271
    %v291 = vmul.f32 %v224, %v275
    %v292 = vmul.f32 %v228, %v271
    %v293 = vmul.f32 %v228, %v275
    %v294 = vmul.f32 %v232, %v271
    %v295 = vmul.f32 %v232, %v275
    %v296 = vmul.f32 %v236, %v271
    %v297 = vmul.f32 %v236, %v275
    %v298 = vmul.f32 %v240, %v271
    %v299 = vmul.f32 %v240, %v275
    %v300 = vmul.f32 %v244, %v271
    %v301 = vmul.f32 %v244, %v275
    %v302 = vmul.f32 %v248, %v271
    %v303 = vmul.f32 %v248, %v275
    %v304 = vmul.f32 %v252, %v271
    %v305 = vmul.f32 %v252, %v275
    %v306 = vmul.f32 %v256, %v271
    %v307 = vmul.f32 %v256, %v275
    %v308 = vadd.f32 %v162, %v276
    %v309 = vadd.f32 %v163, %v277
    %v310 = vadd.f32 %v164, %v278
    %v311 = vadd.f32 %v165, %v279
    %v312 = vadd.f32 %v166, %v280
    %v313 = vadd.f32 %v167, %v281
    %v314 = vadd.f32 %v168, %v282
    %v315 = vadd.f32 %v169, %v283
    %v316 = vadd.f32 %v170, %v284
    %v317 = vadd.f32 %v171, %v285
    %v318 = vadd.f32 %v172, %v286
    %v319 = vadd.f32 %v173, %v287
    %v320 = vadd.f32 %v174, %v288
    %v321 = vadd.f32 %v175, %v289
    %v322 = vadd.f32 %v176, %v290
    %v323 = vadd.f32 %v177, %v291
    %v324 = vadd.f32 %v178, %v292
    %v325 = vadd.f32 %v179, %v293
    %v326 = vadd.f32 %v180, %v294
    %v327 = vadd.f32 %v181, %v295
    %v328 = vadd.f32 %v182, %v296
    %v329 = vadd.f32 %v183, %v297
    %v330 = vadd.f32 %v184, %v298
    %v331 = vadd.f32 %v185, %v299
    %v332 = vadd.f32 %v186, %v300
    %v333 = vadd.f32 %v187, %v301
    %v334 = vadd.f32 %v188, %v302
    %v335 = vadd.f32 %v189, %v303
    %v336 = vadd.f32 %v190, %v304
    %v337 = vadd.f32 %v191, %v305
    %v338 = vadd.f32 %v192, %v306
    %v339 = vadd.f32 %v193, %v307
    %340 = vset.pattern.permute.xlu0 2
    %341 = vperm.xlu0 %340, %v45
    %v342 = vpop.permute.xlu0 %341
    %344 = vset.pattern.permute.xlu0 2
    %345 = vperm.xlu0 %344, %v46
    %v346 = vpop.permute.xlu0 %345
    %348 = vset.pattern.permute.xlu0 2
    %349 = vperm.xlu0 %348, %v47
    %v350 = vpop.permute.xlu0 %349
    %352 = vset.pattern.permute.xlu0 2
    %353 = vperm.xlu0 %352, %v48
    %v354 = vpop.permute.xlu0 %353
    %356 = vset.pattern.permute.xlu0 2
    %357 = vperm.xlu0 %356, %v49
    %v358 = vpop.permute.xlu0 %357
    %360 = vset.pattern.permute.xlu0 2
    %361 = vperm.xlu0 %360, %v50
    %v362 = vpop.permute.xlu0 %361
    %364 = vset.pattern.permute.xlu0 2
    %365 = vperm.xlu0 %364, %v51
    %v366 = vpop.permute.xlu0 %365
    %368 = vset.pattern.permute.xlu0 2
    %369 = vperm.xlu0 %368, %v52
    %v370 = vpop.permute.xlu0 %369
    %372 = vset.pattern.permute.xlu0 2
    %373 = vperm.xlu0 %372, %v53
    %v374 = vpop.permute.xlu0 %373
    %376 = vset.pattern.permute.xlu0 2
    %377 = vperm.xlu0 %376, %v54
    %v378 = vpop.permute.xlu0 %377
    %380 = vset.pattern.permute.xlu0 2
    %381 = vperm.xlu0 %380, %v55
    %v382 = vpop.permute.xlu0 %381
    %384 = vset.pattern.permute.xlu0 2
    %385 = vperm.xlu0 %384, %v56
    %v386 = vpop.permute.xlu0 %385
    %388 = vset.pattern.permute.xlu0 2
    %389 = vperm.xlu0 %388, %v57
    %v390 = vpop.permute.xlu0 %389
    %392 = vset.pattern.permute.xlu0 2
    %393 = vperm.xlu0 %392, %v58
    %v394 = vpop.permute.xlu0 %393
    %396 = vset.pattern.permute.xlu0 2
    %397 = vperm.xlu0 %396, %v59
    %v398 = vpop.permute.xlu0 %397
    %400 = vset.pattern.permute.xlu0 2
    %401 = vperm.xlu0 %400, %v60
    %v402 = vpop.permute.xlu0 %401
    %v404 = vlaneseq
    %v405 = vshrl.u32 %v404, 7
    %v406 = vsub.s32 2, %v405
    %v407 = vrot.slane %v61, %v406
    %v408 = vlaneseq
    %v409 = vshrl.u32 %v408, 7
    %v410 = vsub.s32 6, %v409
    %v411 = vrot.slane %v61, %v410
    %v414 = vlaneseq
    %v415 = vshrl.u32 %v414, 7
    %v416 = vsub.s32 2, %v415
    %v417 = vrot.slane %v407, %v416
    %v418 = vlaneseq
    %v419 = vshrl.u32 %v418, 7
    %v420 = vsub.s32 2, %v419
    %v421 = vrot.slane %v411, %v420
    %v422 = vmul.f32 %v342, %v417
    %v423 = vmul.f32 %v342, %v421
    %v424 = vmul.f32 %v346, %v417
    %v425 = vmul.f32 %v346, %v421
    %v426 = vmul.f32 %v350, %v417
    %v427 = vmul.f32 %v350, %v421
    %v428 = vmul.f32 %v354, %v417
    %v429 = vmul.f32 %v354, %v421
    %v430 = vmul.f32 %v358, %v417
    %v431 = vmul.f32 %v358, %v421
    %v432 = vmul.f32 %v362, %v417
    %v433 = vmul.f32 %v362, %v421
    %v434 = vmul.f32 %v366, %v417
    %v435 = vmul.f32 %v366, %v421
    %v436 = vmul.f32 %v370, %v417
    %v437 = vmul.f32 %v370, %v421
    %v438 = vmul.f32 %v374, %v417
    %v439 = vmul.f32 %v374, %v421
    %v440 = vmul.f32 %v378, %v417
    %v441 = vmul.f32 %v378, %v421
    %v442 = vmul.f32 %v382, %v417
    %v443 = vmul.f32 %v382, %v421
    %v444 = vmul.f32 %v386, %v417
    %v445 = vmul.f32 %v386, %v421
    %v446 = vmul.f32 %v390, %v417
    %v447 = vmul.f32 %v390, %v421
    %v448 = vmul.f32 %v394, %v417
    %v449 = vmul.f32 %v394, %v421
    %v450 = vmul.f32 %v398, %v417
    %v451 = vmul.f32 %v398, %v421
    %v452 = vmul.f32 %v402, %v417
    %v453 = vmul.f32 %v402, %v421
    %v454 = vadd.f32 %v308, %v422
    %v455 = vadd.f32 %v309, %v423
    %v456 = vadd.f32 %v310, %v424
    %v457 = vadd.f32 %v311, %v425
    %v458 = vadd.f32 %v312, %v426
    %v459 = vadd.f32 %v313, %v427
    %v460 = vadd.f32 %v314, %v428
    %v461 = vadd.f32 %v315, %v429
    %v462 = vadd.f32 %v316, %v430
    %v463 = vadd.f32 %v317, %v431
    %v464 = vadd.f32 %v318, %v432
    %v465 = vadd.f32 %v319, %v433
    %v466 = vadd.f32 %v320, %v434
    %v467 = vadd.f32 %v321, %v435
    %v468 = vadd.f32 %v322, %v436
    %v469 = vadd.f32 %v323, %v437
    %v470 = vadd.f32 %v324, %v438
    %v471 = vadd.f32 %v325, %v439
    %v472 = vadd.f32 %v326, %v440
    %v473 = vadd.f32 %v327, %v441
    %v474 = vadd.f32 %v328, %v442
    %v475 = vadd.f32 %v329, %v443
    %v476 = vadd.f32 %v330, %v444
    %v477 = vadd.f32 %v331, %v445
    %v478 = vadd.f32 %v332, %v446
    %v479 = vadd.f32 %v333, %v447
    %v480 = vadd.f32 %v334, %v448
    %v481 = vadd.f32 %v335, %v449
    %v482 = vadd.f32 %v336, %v450
    %v483 = vadd.f32 %v337, %v451
    %v484 = vadd.f32 %v338, %v452
    %v485 = vadd.f32 %v339, %v453
    %v486 = vld [vmem:[%s2] sm:$0x3]
    %v488 = vlaneseq
    %v489 = vshrl.u32 %v488, 7
    %v490 = vsub.s32 0, %v489
    %v491 = vrot.slane %v486, %v490
    %v492 = vlaneseq
    %v493 = vshrl.u32 %v492, 7
    %v494 = vsub.s32 1, %v493
    %v495 = vrot.slane %v486, %v494
    %v498 = vadd.f32 %v454, %v491
    %v499 = vadd.f32 %v455, %v495
    %v500 = vadd.f32 %v456, %v491
    %v501 = vadd.f32 %v457, %v495
    %v502 = vadd.f32 %v458, %v491
    %v503 = vadd.f32 %v459, %v495
    %v504 = vadd.f32 %v460, %v491
    %v505 = vadd.f32 %v461, %v495
    %v506 = vadd.f32 %v462, %v491
    %v507 = vadd.f32 %v463, %v495
    %v508 = vadd.f32 %v464, %v491
    %v509 = vadd.f32 %v465, %v495
    %v510 = vadd.f32 %v466, %v491
    %v511 = vadd.f32 %v467, %v495
    %v512 = vadd.f32 %v468, %v491
    %v513 = vadd.f32 %v469, %v495
    %v514 = vadd.f32 %v470, %v491
    %v515 = vadd.f32 %v471, %v495
    %v516 = vadd.f32 %v472, %v491
    %v517 = vadd.f32 %v473, %v495
    %v518 = vadd.f32 %v474, %v491
    %v519 = vadd.f32 %v475, %v495
    %v520 = vadd.f32 %v476, %v491
    %v521 = vadd.f32 %v477, %v495
    %v522 = vadd.f32 %v478, %v491
    %v523 = vadd.f32 %v479, %v495
    %v524 = vadd.f32 %v480, %v491
    %v525 = vadd.f32 %v481, %v495
    %v526 = vadd.f32 %v482, %v491
    %v527 = vadd.f32 %v483, %v495
    %v528 = vadd.f32 %v484, %v491
    %v529 = vadd.f32 %v485, %v495
    %v530 = vmax.f32 %v498, 0.0
    %v531 = vmax.f32 %v499, 0.0
    %v532 = vmax.f32 %v500, 0.0
    %v533 = vmax.f32 %v501, 0.0
    %v534 = vmax.f32 %v502, 0.0
    %v535 = vmax.f32 %v503, 0.0
    %v536 = vmax.f32 %v504, 0.0
    %v537 = vmax.f32 %v505, 0.0
    %v538 = vmax.f32 %v506, 0.0
    %v539 = vmax.f32 %v507, 0.0
    %v540 = vmax.f32 %v508, 0.0
    %v541 = vmax.f32 %v509, 0.0
    %v542 = vmax.f32 %v510, 0.0
    %v543 = vmax.f32 %v511, 0.0
    %v544 = vmax.f32 %v512, 0.0
    %v545 = vmax.f32 %v513, 0.0
    %v546 = vmax.f32 %v514, 0.0
    %v547 = vmax.f32 %v515, 0.0
    %v548 = vmax.f32 %v516, 0.0
    %v549 = vmax.f32 %v517, 0.0
    %v550 = vmax.f32 %v518, 0.0
    %v551 = vmax.f32 %v519, 0.0
    %v552 = vmax.f32 %v520, 0.0
    %v553 = vmax.f32 %v521, 0.0
    %v554 = vmax.f32 %v522, 0.0
    %v555 = vmax.f32 %v523, 0.0
    %v556 = vmax.f32 %v524, 0.0
    %v557 = vmax.f32 %v525, 0.0
    %v558 = vmax.f32 %v526, 0.0
    %v559 = vmax.f32 %v527, 0.0
    %v560 = vmax.f32 %v528, 0.0
    %v561 = vmax.f32 %v529, 0.0
    %v562 = vpack.c.bf16 %v532, %v530
    %v563 = vpack.c.bf16 %v533, %v531
    %v564 = vpack.c.bf16 %v536, %v534
    %v565 = vpack.c.bf16 %v537, %v535
    %v566 = vpack.c.bf16 %v540, %v538
    %v567 = vpack.c.bf16 %v541, %v539
    %v568 = vpack.c.bf16 %v544, %v542
    %v569 = vpack.c.bf16 %v545, %v543
    %v570 = vpack.c.bf16 %v548, %v546
    %v571 = vpack.c.bf16 %v549, %v547
    %v572 = vpack.c.bf16 %v552, %v550
    %v573 = vpack.c.bf16 %v553, %v551
    %v574 = vpack.c.bf16 %v556, %v554
    %v575 = vpack.c.bf16 %v557, %v555
    %v576 = vpack.c.bf16 %v560, %v558
    %v577 = vpack.c.bf16 %v561, %v559
    %v578 = vld [vmem:[#allocation3] sm:$0xff]
    %v579 = vld [vmem:[#allocation3 + $0x8] sm:$0xff]
    %v580 = vld [vmem:[#allocation3 + $0x10] sm:$0xff]
    %v581 = vld [vmem:[#allocation3 + $0x18] sm:$0xff]
    %v582 = vld [vmem:[#allocation3 + $0x20] sm:$0xff]
    %v583 = vld [vmem:[#allocation3 + $0x28] sm:$0xff]
    %v584 = vld [vmem:[#allocation3 + $0x30] sm:$0xff]
    %v585 = vld [vmem:[#allocation3 + $0x38] sm:$0xff]
    %v586 = vld [vmem:[#allocation3 + $0x40] sm:$0xff]
    %v587 = vld [vmem:[#allocation3 + $0x48] sm:$0xff]
    %v588 = vld [vmem:[#allocation3 + $0x50] sm:$0xff]
    %v589 = vld [vmem:[#allocation3 + $0x58] sm:$0xff]
    %v590 = vld [vmem:[#allocation3 + $0x60] sm:$0xff]
    %v591 = vld [vmem:[#allocation3 + $0x68] sm:$0xff]
    %v592 = vld [vmem:[#allocation3 + $0x70] sm:$0xff]
    %v593 = vld [vmem:[#allocation3 + $0x78] sm:$0xff]
    %v594 = vld [vmem:[#allocation3 + $0x80] sm:$0xff]
    %v595 = vld [vmem:[#allocation3 + $0x88] sm:$0xff]
    %v596 = vld [vmem:[#allocation3 + $0x90] sm:$0xff]
    %v597 = vld [vmem:[#allocation3 + $0x98] sm:$0xff]
    %v598 = vld [vmem:[#allocation3 + $0xa0] sm:$0xff]
    %v599 = vld [vmem:[#allocation3 + $0xa8] sm:$0xff]
    %v600 = vld [vmem:[#allocation3 + $0xb0] sm:$0xff]
    %v601 = vld [vmem:[#allocation3 + $0xb8] sm:$0xff]
    %v602 = vld [vmem:[#allocation3 + $0xc0] sm:$0xff]
    %v603 = vld [vmem:[#allocation3 + $0xc8] sm:$0xff]
    %v604 = vld [vmem:[#allocation3 + $0xd0] sm:$0xff]
    %v605 = vld [vmem:[#allocation3 + $0xd8] sm:$0xff]
    %v606 = vld [vmem:[#allocation3 + $0xe0] sm:$0xff]
    %v607 = vld [vmem:[#allocation3 + $0xe8] sm:$0xff]
    %v608 = vld [vmem:[#allocation3 + $0xf0] sm:$0xff]
    %v609 = vld [vmem:[#allocation3 + $0xf8] sm:$0xff]
    %v610 = vld [vmem:[%s4] ss:$8 sm:$0x3]
    %v612 = vlaneseq
    %v613 = vshrl.u32 %v612, 7
    %v614 = vsub.s32 0, %v613
    %v615 = vrot.slane %v610, %v614
    %v616 = vlaneseq
    %v617 = vshrl.u32 %v616, 7
    %v618 = vsub.s32 1, %v617
    %v619 = vrot.slane %v610, %v618
    %v654 = vunpack.c.l.b16 %v578
    %v655 = vunpack.c.h.b16 %v578
    %v656 = vunpack.c.l.b16 %v579
    %v657 = vunpack.c.h.b16 %v579
    %v658 = vunpack.c.l.b16 %v580
    %v659 = vunpack.c.h.b16 %v580
    %v660 = vunpack.c.l.b16 %v581
    %v661 = vunpack.c.h.b16 %v581
    %v662 = vunpack.c.l.b16 %v582
    %v663 = vunpack.c.h.b16 %v582
    %v664 = vunpack.c.l.b16 %v583
    %v665 = vunpack.c.h.b16 %v583
    %v666 = vunpack.c.l.b16 %v584
    %v667 = vunpack.c.h.b16 %v584
    %v668 = vunpack.c.l.b16 %v585
    %v669 = vunpack.c.h.b16 %v585
    %v670 = vunpack.c.l.b16 %v586
    %v671 = vunpack.c.h.b16 %v586
    %v672 = vunpack.c.l.b16 %v587
    %v673 = vunpack.c.h.b16 %v587
    %v674 = vunpack.c.l.b16 %v588
    %v675 = vunpack.c.h.b16 %v588
    %v676 = vunpack.c.l.b16 %v589
    %v677 = vunpack.c.h.b16 %v589
    %v678 = vunpack.c.l.b16 %v590
    %v679 = vunpack.c.h.b16 %v590
    %v680 = vunpack.c.l.b16 %v591
    %v681 = vunpack.c.h.b16 %v591
    %v682 = vunpack.c.l.b16 %v592
    %v683 = vunpack.c.h.b16 %v592
    %v684 = vunpack.c.l.b16 %v593
    %v685 = vunpack.c.h.b16 %v593
    %v686 = vunpack.c.l.b16 %v594
    %v687 = vunpack.c.h.b16 %v594
    %v688 = vunpack.c.l.b16 %v595
    %v689 = vunpack.c.h.b16 %v595
    %v690 = vunpack.c.l.b16 %v596
    %v691 = vunpack.c.h.b16 %v596
    %v692 = vunpack.c.l.b16 %v597
    %v693 = vunpack.c.h.b16 %v597
    %v694 = vunpack.c.l.b16 %v598
    %v695 = vunpack.c.h.b16 %v598
    %v696 = vunpack.c.l.b16 %v599
    %v697 = vunpack.c.h.b16 %v599
    %v698 = vunpack.c.l.b16 %v600
    %v699 = vunpack.c.h.b16 %v600
    %v700 = vunpack.c.l.b16 %v601
    %v701 = vunpack.c.h.b16 %v601
    %v702 = vunpack.c.l.b16 %v602
    %v703 = vunpack.c.h.b16 %v602
    %v704 = vunpack.c.l.b16 %v603
    %v705 = vunpack.c.h.b16 %v603
    %v706 = vunpack.c.l.b16 %v604
    %v707 = vunpack.c.h.b16 %v604
    %v708 = vunpack.c.l.b16 %v605
    %v709 = vunpack.c.h.b16 %v605
    %v710 = vunpack.c.l.b16 %v606
    %v711 = vunpack.c.h.b16 %v606
    %v712 = vunpack.c.l.b16 %v607
    %v713 = vunpack.c.h.b16 %v607
    %v714 = vunpack.c.l.b16 %v608
    %v715 = vunpack.c.h.b16 %v608
    %v716 = vunpack.c.l.b16 %v609
    %v717 = vunpack.c.h.b16 %v609
    %v718 = vpack.c.b16 %v656, %v654
    %v719 = vpack.c.b16 %v657, %v655
    %v720 = vpack.c.b16 %v660, %v658
    %v721 = vpack.c.b16 %v661, %v659
    %v722 = vpack.c.b16 %v664, %v662
    %v723 = vpack.c.b16 %v665, %v663
    %v724 = vpack.c.b16 %v668, %v666
    %v725 = vpack.c.b16 %v669, %v667
    %v726 = vpack.c.b16 %v672, %v670
    %v727 = vpack.c.b16 %v673, %v671
    %v728 = vpack.c.b16 %v676, %v674
    %v729 = vpack.c.b16 %v677, %v675
    %v730 = vpack.c.b16 %v680, %v678
    %v731 = vpack.c.b16 %v681, %v679
    %v732 = vpack.c.b16 %v684, %v682
    %v733 = vpack.c.b16 %v685, %v683
    %v734 = vpack.c.b16 %v688, %v686
    %v735 = vpack.c.b16 %v689, %v687
    %v736 = vpack.c.b16 %v692, %v690
    %v737 = vpack.c.b16 %v693, %v691
    %v738 = vpack.c.b16 %v696, %v694
    %v739 = vpack.c.b16 %v697, %v695
    %v740 = vpack.c.b16 %v700, %v698
    %v741 = vpack.c.b16 %v701, %v699
    %v742 = vpack.c.b16 %v704, %v702
    %v743 = vpack.c.b16 %v705, %v703
    %v744 = vpack.c.b16 %v708, %v706
    %v745 = vpack.c.b16 %v709, %v707
    %v746 = vpack.c.b16 %v712, %v710
    %v747 = vpack.c.b16 %v713, %v711
    %v748 = vpack.c.b16 %v716, %v714
    %v749 = vpack.c.b16 %v717, %v715
    %782 = vmatprep.subr.bf16.mxu0 %v733
    %783 = vmatpush1.bf16.msra.mxu0 %v732
    %784 = vmatprep.subr.bf16.mxu0 %v731
    %785 = vmatpush1.bf16.msra.mxu0 %v730
    %786 = vmatprep.subr.bf16.mxu0 %v729
    %787 = vmatpush1.bf16.msra.mxu0 %v728
    %788 = vmatprep.subr.bf16.mxu0 %v727
    %789 = vmatpush1.bf16.msra.mxu0 %v726
    %790 = vmatprep.subr.bf16.mxu0 %v725
    %791 = vmatpush1.bf16.msra.mxu0 %v724
    %792 = vmatprep.subr.bf16.mxu0 %v723
    %793 = vmatpush1.bf16.msra.mxu0 %v722
    %794 = vmatprep.subr.bf16.mxu0 %v721
    %795 = vmatpush1.bf16.msra.mxu0 %v720
    %796 = vmatprep.subr.bf16.mxu0 %v719
    %797 = vmatpush1.bf16.msra.mxu0 %v718
    %798 = vmatprep.subr.bf16.mxu0 %v749
    %799 = vmatpush2.bf16.msra.mxu0 %v748
    %800 = vmatprep.subr.bf16.mxu0 %v747
    %801 = vmatpush2.bf16.msra.mxu0 %v746
    %802 = vmatprep.subr.bf16.mxu0 %v745
    %803 = vmatpush2.bf16.msra.mxu0 %v744
    %804 = vmatprep.subr.bf16.mxu0 %v743
    %805 = vmatpush2.bf16.msra.mxu0 %v742
    %806 = vmatprep.subr.bf16.mxu0 %v741
    %807 = vmatpush2.bf16.msra.mxu0 %v740
    %808 = vmatprep.subr.bf16.mxu0 %v739
    %809 = vmatpush2.bf16.msra.mxu0 %v738
    %810 = vmatprep.subr.bf16.mxu0 %v737
    %811 = vmatpush2.bf16.msra.mxu0 %v736
    %812 = vmatprep.subr.bf16.mxu0 %v735
    %813 = vmatpush2.bf16.msra.mxu0 %v734
    %814 = vmatprep.mubr.bf16.mxu0 %v563
    %815 = vmatmul.mubr.bf16.gmra.mxu0 %v562
    %v816 = vpop.f32.mrf.mxu0
    %v817 = vadd.f32 %v615, %v816
    %v818 = vpop.f32.mrf.mxu0
    %v819 = vadd.f32 %v619, %v818
    %v820 = vpop.f32.mrf.mxu0
    %v821 = vadd.f32 %v615, %v820
    %v822 = vpop.f32.mrf.mxu0
    %v823 = vadd.f32 %v619, %v822
    %824 = vmatprep.mubr.bf16.mxu0 %v565
    %825 = vmatmul.mubr.bf16.gmra.mxu0 %v564
    %v826 = vpop.f32.mrf.mxu0
    %v827 = vadd.f32 %v615, %v826
    %v828 = vpop.f32.mrf.mxu0
    %v829 = vadd.f32 %v619, %v828
    %v830 = vpop.f32.mrf.mxu0
    %v831 = vadd.f32 %v615, %v830
    %v832 = vpop.f32.mrf.mxu0
    %v833 = vadd.f32 %v619, %v832
    %834 = vmatprep.mubr.bf16.mxu0 %v567
    %835 = vmatmul.mubr.bf16.gmra.mxu0 %v566
    %v836 = vpop.f32.mrf.mxu0
    %v837 = vadd.f32 %v615, %v836
    %v838 = vpop.f32.mrf.mxu0
    %v839 = vadd.f32 %v619, %v838
    %v840 = vpop.f32.mrf.mxu0
    %v841 = vadd.f32 %v615, %v840
    %v842 = vpop.f32.mrf.mxu0
    %v843 = vadd.f32 %v619, %v842
    %844 = vmatprep.mubr.bf16.mxu0 %v569
    %845 = vmatmul.mubr.bf16.gmra.mxu0 %v568
    %v846 = vpop.f32.mrf.mxu0
    %v847 = vadd.f32 %v615, %v846
    %v848 = vpop.f32.mrf.mxu0
    %v849 = vadd.f32 %v619, %v848
    %v850 = vpop.f32.mrf.mxu0
    %v851 = vadd.f32 %v615, %v850
    %v852 = vpop.f32.mrf.mxu0
    %v853 = vadd.f32 %v619, %v852
    %854 = vmatprep.mubr.bf16.mxu0 %v571
    %855 = vmatmul.mubr.bf16.gmra.mxu0 %v570
    %v856 = vpop.f32.mrf.mxu0
    %v857 = vadd.f32 %v615, %v856
    %v858 = vpop.f32.mrf.mxu0
    %v859 = vadd.f32 %v619, %v858
    %v860 = vpop.f32.mrf.mxu0
    %v861 = vadd.f32 %v615, %v860
    %v862 = vpop.f32.mrf.mxu0
    %v863 = vadd.f32 %v619, %v862
    %864 = vmatprep.mubr.bf16.mxu0 %v573
    %865 = vmatmul.mubr.bf16.gmra.mxu0 %v572
    %v866 = vpop.f32.mrf.mxu0
    %v867 = vadd.f32 %v615, %v866
    %v868 = vpop.f32.mrf.mxu0
    %v869 = vadd.f32 %v619, %v868
    %v870 = vpop.f32.mrf.mxu0
    %v871 = vadd.f32 %v615, %v870
    %v872 = vpop.f32.mrf.mxu0
    %v873 = vadd.f32 %v619, %v872
    %874 = vmatprep.mubr.bf16.mxu0 %v575
    %875 = vmatmul.mubr.bf16.gmra.mxu0 %v574
    %v876 = vpop.f32.mrf.mxu0
    %v877 = vadd.f32 %v615, %v876
    %v878 = vpop.f32.mrf.mxu0
    %v879 = vadd.f32 %v619, %v878
    %v880 = vpop.f32.mrf.mxu0
    %v881 = vadd.f32 %v615, %v880
    %v882 = vpop.f32.mrf.mxu0
    %v883 = vadd.f32 %v619, %v882
    %884 = vmatprep.mubr.bf16.mxu0 %v577
    %885 = vmatmul.mubr.bf16.gmra.mxu0 %v576
    %v886 = vpop.f32.mrf.mxu0
    %v887 = vadd.f32 %v615, %v886
    %v888 = vpop.f32.mrf.mxu0
    %v889 = vadd.f32 %v619, %v888
    %v890 = vpop.f32.mrf.mxu0
    %v891 = vadd.f32 %v615, %v890
    %v892 = vpop.f32.mrf.mxu0
    %v893 = vadd.f32 %v619, %v892
    %894 = vdwg.mxu0
    %v895 = vmax.f32 %v817, 0.0
    %v896 = vmax.f32 %v819, 0.0
    %v897 = vmax.f32 %v821, 0.0
    %v898 = vmax.f32 %v823, 0.0
    %v899 = vmax.f32 %v827, 0.0
    %v900 = vmax.f32 %v829, 0.0
    %v901 = vmax.f32 %v831, 0.0
    %v902 = vmax.f32 %v833, 0.0
    %v903 = vmax.f32 %v837, 0.0
    %v904 = vmax.f32 %v839, 0.0
    %v905 = vmax.f32 %v841, 0.0
    %v906 = vmax.f32 %v843, 0.0
    %v907 = vmax.f32 %v847, 0.0
    %v908 = vmax.f32 %v849, 0.0
    %v909 = vmax.f32 %v851, 0.0
    %v910 = vmax.f32 %v853, 0.0
    %v911 = vmax.f32 %v857, 0.0
    %v912 = vmax.f32 %v859, 0.0
    %v913 = vmax.f32 %v861, 0.0
    %v914 = vmax.f32 %v863, 0.0
    %v915 = vmax.f32 %v867, 0.0
    %v916 = vmax.f32 %v869, 0.0
    %v917 = vmax.f32 %v871, 0.0
    %v918 = vmax.f32 %v873, 0.0
    %v919 = vmax.f32 %v877, 0.0
    %v920 = vmax.f32 %v879, 0.0
    %v921 = vmax.f32 %v881, 0.0
    %v922 = vmax.f32 %v883, 0.0
    %v923 = vmax.f32 %v887, 0.0
    %v924 = vmax.f32 %v889, 0.0
    %v925 = vmax.f32 %v891, 0.0
    %v926 = vmax.f32 %v893, 0.0
    %v927 = vpack.c.bf16 %v897, %v895
    %v928 = vpack.c.bf16 %v898, %v896
    %v929 = vpack.c.bf16 %v901, %v899
    %v930 = vpack.c.bf16 %v902, %v900
    %v931 = vpack.c.bf16 %v905, %v903
    %v932 = vpack.c.bf16 %v906, %v904
    %v933 = vpack.c.bf16 %v909, %v907
    %v934 = vpack.c.bf16 %v910, %v908
    %v935 = vpack.c.bf16 %v913, %v911
    %v936 = vpack.c.bf16 %v914, %v912
    %v937 = vpack.c.bf16 %v917, %v915
    %v938 = vpack.c.bf16 %v918, %v916
    %v939 = vpack.c.bf16 %v921, %v919
    %v940 = vpack.c.bf16 %v922, %v920
    %v941 = vpack.c.bf16 %v925, %v923
    %v942 = vpack.c.bf16 %v926, %v924
    %s943 = scalar_lea.vmem [#allocation3], 256
    %v944 = vld [vmem:[%s943] sm:$0xff]
    %v945 = vld [vmem:[%s943 + $0x8] sm:$0xff]
    %v946 = vld [vmem:[%s943 + $0x10] sm:$0xff]
    %v947 = vld [vmem:[%s943 + $0x18] sm:$0xff]
    %v948 = vld [vmem:[%s943 + $0x20] sm:$0xff]
    %v949 = vld [vmem:[%s943 + $0x28] sm:$0xff]
    %v950 = vld [vmem:[%s943 + $0x30] sm:$0xff]
    %v951 = vld [vmem:[%s943 + $0x38] sm:$0xff]
    %v952 = vld [vmem:[%s943 + $0x40] sm:$0xff]
    %v953 = vld [vmem:[%s943 + $0x48] sm:$0xff]
    %v954 = vld [vmem:[%s943 + $0x50] sm:$0xff]
    %v955 = vld [vmem:[%s943 + $0x58] sm:$0xff]
    %v956 = vld [vmem:[%s943 + $0x60] sm:$0xff]
    %v957 = vld [vmem:[%s943 + $0x68] sm:$0xff]
    %v958 = vld [vmem:[%s943 + $0x70] sm:$0xff]
    %v959 = vld [vmem:[%s943 + $0x78] sm:$0xff]
    %v960 = vld [vmem:[%s943 + $0x80] sm:$0xff]
    %v961 = vld [vmem:[%s943 + $0x88] sm:$0xff]
    %v962 = vld [vmem:[%s943 + $0x90] sm:$0xff]
    %v963 = vld [vmem:[%s943 + $0x98] sm:$0xff]
    %v964 = vld [vmem:[%s943 + $0xa0] sm:$0xff]
    %v965 = vld [vmem:[%s943 + $0xa8] sm:$0xff]
    %v966 = vld [vmem:[%s943 + $0xb0] sm:$0xff]
    %v967 = vld [vmem:[%s943 + $0xb8] sm:$0xff]
    %v968 = vld [vmem:[%s943 + $0xc0] sm:$0xff]
    %v969 = vld [vmem:[%s943 + $0xc8] sm:$0xff]
    %v970 = vld [vmem:[%s943 + $0xd0] sm:$0xff]
    %v971 = vld [vmem:[%s943 + $0xd8] sm:$0xff]
    %v972 = vld [vmem:[%s943 + $0xe0] sm:$0xff]
    %v973 = vld [vmem:[%s943 + $0xe8] sm:$0xff]
    %v974 = vld [vmem:[%s943 + $0xf0] sm:$0xff]
    %v975 = vld [vmem:[%s943 + $0xf8] sm:$0xff]
    %s976 = scalar_lea.vmem %s4, 1
    %v977 = vld [vmem:[%s976] ss:$8 sm:$0x3]
    %v979 = vlaneseq
    %v980 = vshrl.u32 %v979, 7
    %v981 = vsub.s32 0, %v980
    %v982 = vrot.slane %v977, %v981
    %v983 = vlaneseq
    %v984 = vshrl.u32 %v983, 7
    %v985 = vsub.s32 1, %v984
    %v986 = vrot.slane %v977, %v985
    %v1021 = vunpack.c.l.b16 %v944
    %v1022 = vunpack.c.h.b16 %v944
    %v1023 = vunpack.c.l.b16 %v945
    %v1024 = vunpack.c.h.b16 %v945
    %v1025 = vunpack.c.l.b16 %v946
    %v1026 = vunpack.c.h.b16 %v946
    %v1027 = vunpack.c.l.b16 %v947
    %v1028 = vunpack.c.h.b16 %v947
    %v1029 = vunpack.c.l.b16 %v948
    %v1030 = vunpack.c.h.b16 %v948
    %v1031 = vunpack.c.l.b16 %v949
    %v1032 = vunpack.c.h.b16 %v949
    %v1033 = vunpack.c.l.b16 %v950
    %v1034 = vunpack.c.h.b16 %v950
    %v1035 = vunpack.c.l.b16 %v951
    %v1036 = vunpack.c.h.b16 %v951
    %v1037 = vunpack.c.l.b16 %v952
    %v1038 = vunpack.c.h.b16 %v952
    %v1039 = vunpack.c.l.b16 %v953
    %v1040 = vunpack.c.h.b16 %v953
    %v1041 = vunpack.c.l.b16 %v954
    %v1042 = vunpack.c.h.b16 %v954
    %v1043 = vunpack.c.l.b16 %v955
    %v1044 = vunpack.c.h.b16 %v955
    %v1045 = vunpack.c.l.b16 %v956
    %v1046 = vunpack.c.h.b16 %v956
    %v1047 = vunpack.c.l.b16 %v957
    %v1048 = vunpack.c.h.b16 %v957
    %v1049 = vunpack.c.l.b16 %v958
    %v1050 = vunpack.c.h.b16 %v958
    %v1051 = vunpack.c.l.b16 %v959
    %v1052 = vunpack.c.h.b16 %v959
    %v1053 = vunpack.c.l.b16 %v960
    %v1054 = vunpack.c.h.b16 %v960
    %v1055 = vunpack.c.l.b16 %v961
    %v1056 = vunpack.c.h.b16 %v961
    %v1057 = vunpack.c.l.b16 %v962
    %v1058 = vunpack.c.h.b16 %v962
    %v1059 = vunpack.c.l.b16 %v963
    %v1060 = vunpack.c.h.b16 %v963
    %v1061 = vunpack.c.l.b16 %v964
    %v1062 = vunpack.c.h.b16 %v964
    %v1063 = vunpack.c.l.b16 %v965
    %v1064 = vunpack.c.h.b16 %v965
    %v1065 = vunpack.c.l.b16 %v966
    %v1066 = vunpack.c.h.b16 %v966
    %v1067 = vunpack.c.l.b16 %v967
    %v1068 = vunpack.c.h.b16 %v967
    %v1069 = vunpack.c.l.b16 %v968
    %v1070 = vunpack.c.h.b16 %v968
    %v1071 = vunpack.c.l.b16 %v969
    %v1072 = vunpack.c.h.b16 %v969
    %v1073 = vunpack.c.l.b16 %v970
    %v1074 = vunpack.c.h.b16 %v970
    %v1075 = vunpack.c.l.b16 %v971
    %v1076 = vunpack.c.h.b16 %v971
    %v1077 = vunpack.c.l.b16 %v972
    %v1078 = vunpack.c.h.b16 %v972
    %v1079 = vunpack.c.l.b16 %v973
    %v1080 = vunpack.c.h.b16 %v973
    %v1081 = vunpack.c.l.b16 %v974
    %v1082 = vunpack.c.h.b16 %v974
    %v1083 = vunpack.c.l.b16 %v975
    %v1084 = vunpack.c.h.b16 %v975
    %v1085 = vpack.c.b16 %v1023, %v1021
    %v1086 = vpack.c.b16 %v1024, %v1022
    %v1087 = vpack.c.b16 %v1027, %v1025
    %v1088 = vpack.c.b16 %v1028, %v1026
    %v1089 = vpack.c.b16 %v1031, %v1029
    %v1090 = vpack.c.b16 %v1032, %v1030
    %v1091 = vpack.c.b16 %v1035, %v1033
    %v1092 = vpack.c.b16 %v1036, %v1034
    %v1093 = vpack.c.b16 %v1039, %v1037
    %v1094 = vpack.c.b16 %v1040, %v1038
    %v1095 = vpack.c.b16 %v1043, %v1041
    %v1096 = vpack.c.b16 %v1044, %v1042
    %v1097 = vpack.c.b16 %v1047, %v1045
    %v1098 = vpack.c.b16 %v1048, %v1046
    %v1099 = vpack.c.b16 %v1051, %v1049
    %v1100 = vpack.c.b16 %v1052, %v1050
    %v1101 = vpack.c.b16 %v1055, %v1053
    %v1102 = vpack.c.b16 %v1056, %v1054
    %v1103 = vpack.c.b16 %v1059, %v1057
    %v1104 = vpack.c.b16 %v1060, %v1058
    %v1105 = vpack.c.b16 %v1063, %v1061
    %v1106 = vpack.c.b16 %v1064, %v1062
    %v1107 = vpack.c.b16 %v1067, %v1065
    %v1108 = vpack.c.b16 %v1068, %v1066
    %v1109 = vpack.c.b16 %v1071, %v1069
    %v1110 = vpack.c.b16 %v1072, %v1070
    %v1111 = vpack.c.b16 %v1075, %v1073
    %v1112 = vpack.c.b16 %v1076, %v1074
    %v1113 = vpack.c.b16 %v1079, %v1077
    %v1114 = vpack.c.b16 %v1080, %v1078
    %v1115 = vpack.c.b16 %v1083, %v1081
    %v1116 = vpack.c.b16 %v1084, %v1082
    %1149 = vmatprep.subr.bf16.mxu0 %v1100
    %1150 = vmatpush1.bf16.msra.mxu0 %v1099
    %1151 = vmatprep.subr.bf16.mxu0 %v1098
    %1152 = vmatpush1.bf16.msra.mxu0 %v1097
    %1153 = vmatprep.subr.bf16.mxu0 %v1096
    %1154 = vmatpush1.bf16.msra.mxu0 %v1095
    %1155 = vmatprep.subr.bf16.mxu0 %v1094
    %1156 = vmatpush1.bf16.msra.mxu0 %v1093
    %1157 = vmatprep.subr.bf16.mxu0 %v1092
    %1158 = vmatpush1.bf16.msra.mxu0 %v1091
    %1159 = vmatprep.subr.bf16.mxu0 %v1090
    %1160 = vmatpush1.bf16.msra.mxu0 %v1089
    %1161 = vmatprep.subr.bf16.mxu0 %v1088
    %1162 = vmatpush1.bf16.msra.mxu0 %v1087
    %1163 = vmatprep.subr.bf16.mxu0 %v1086
    %1164 = vmatpush1.bf16.msra.mxu0 %v1085
    %1165 = vmatprep.subr.bf16.mxu0 %v1116
    %1166 = vmatpush2.bf16.msra.mxu0 %v1115
    %1167 = vmatprep.subr.bf16.mxu0 %v1114
    %1168 = vmatpush2.bf16.msra.mxu0 %v1113
    %1169 = vmatprep.subr.bf16.mxu0 %v1112
    %1170 = vmatpush2.bf16.msra.mxu0 %v1111
    %1171 = vmatprep.subr.bf16.mxu0 %v1110
    %1172 = vmatpush2.bf16.msra.mxu0 %v1109
    %1173 = vmatprep.subr.bf16.mxu0 %v1108
    %1174 = vmatpush2.bf16.msra.mxu0 %v1107
    %1175 = vmatprep.subr.bf16.mxu0 %v1106
    %1176 = vmatpush2.bf16.msra.mxu0 %v1105
    %1177 = vmatprep.subr.bf16.mxu0 %v1104
    %1178 = vmatpush2.bf16.msra.mxu0 %v1103
    %1179 = vmatprep.subr.bf16.mxu0 %v1102
    %1180 = vmatpush2.bf16.msra.mxu0 %v1101
    %1181 = vmatprep.mubr.bf16.mxu0 %v928
    %1182 = vmatmul.mubr.bf16.gmra.mxu0 %v927
    %v1183 = vpop.f32.mrf.mxu0
    %v1184 = vadd.f32 %v982, %v1183
    %v1185 = vpop.f32.mrf.mxu0
    %v1186 = vadd.f32 %v986, %v1185
    %v1187 = vpop.f32.mrf.mxu0
    %v1188 = vadd.f32 %v982, %v1187
    %v1189 = vpop.f32.mrf.mxu0
    %v1190 = vadd.f32 %v986, %v1189
    %1191 = vmatprep.mubr.bf16.mxu0 %v930
    %1192 = vmatmul.mubr.bf16.gmra.mxu0 %v929
    %v1193 = vpop.f32.mrf.mxu0
    %v1194 = vadd.f32 %v982, %v1193
    %v1195 = vpop.f32.mrf.mxu0
    %v1196 = vadd.f32 %v986, %v1195
    %v1197 = vpop.f32.mrf.mxu0
    %v1198 = vadd.f32 %v982, %v1197
    %v1199 = vpop.f32.mrf.mxu0
    %v1200 = vadd.f32 %v986, %v1199
    %1201 = vmatprep.mubr.bf16.mxu0 %v932
    %1202 = vmatmul.mubr.bf16.gmra.mxu0 %v931
    %v1203 = vpop.f32.mrf.mxu0
    %v1204 = vadd.f32 %v982, %v1203
    %v1205 = vpop.f32.mrf.mxu0
    %v1206 = vadd.f32 %v986, %v1205
    %v1207 = vpop.f32.mrf.mxu0
    %v1208 = vadd.f32 %v982, %v1207
    %v1209 = vpop.f32.mrf.mxu0
    %v1210 = vadd.f32 %v986, %v1209
    %1211 = vmatprep.mubr.bf16.mxu0 %v934
    %1212 = vmatmul.mubr.bf16.gmra.mxu0 %v933
    %v1213 = vpop.f32.mrf.mxu0
    %v1214 = vadd.f32 %v982, %v1213
    %v1215 = vpop.f32.mrf.mxu0
    %v1216 = vadd.f32 %v986, %v1215
    %v1217 = vpop.f32.mrf.mxu0
    %v1218 = vadd.f32 %v982, %v1217
    %v1219 = vpop.f32.mrf.mxu0
    %v1220 = vadd.f32 %v986, %v1219
    %1221 = vmatprep.mubr.bf16.mxu0 %v936
    %1222 = vmatmul.mubr.bf16.gmra.mxu0 %v935
    %v1223 = vpop.f32.mrf.mxu0
    %v1224 = vadd.f32 %v982, %v1223
    %v1225 = vpop.f32.mrf.mxu0
    %v1226 = vadd.f32 %v986, %v1225
    %v1227 = vpop.f32.mrf.mxu0
    %v1228 = vadd.f32 %v982, %v1227
    %v1229 = vpop.f32.mrf.mxu0
    %v1230 = vadd.f32 %v986, %v1229
    %1231 = vmatprep.mubr.bf16.mxu0 %v938
    %1232 = vmatmul.mubr.bf16.gmra.mxu0 %v937
    %v1233 = vpop.f32.mrf.mxu0
    %v1234 = vadd.f32 %v982, %v1233
    %v1235 = vpop.f32.mrf.mxu0
    %v1236 = vadd.f32 %v986, %v1235
    %v1237 = vpop.f32.mrf.mxu0
    %v1238 = vadd.f32 %v982, %v1237
    %v1239 = vpop.f32.mrf.mxu0
    %v1240 = vadd.f32 %v986, %v1239
    %1241 = vmatprep.mubr.bf16.mxu0 %v940
    %1242 = vmatmul.mubr.bf16.gmra.mxu0 %v939
    %v1243 = vpop.f32.mrf.mxu0
    %v1244 = vadd.f32 %v982, %v1243
    %v1245 = vpop.f32.mrf.mxu0
    %v1246 = vadd.f32 %v986, %v1245
    %v1247 = vpop.f32.mrf.mxu0
    %v1248 = vadd.f32 %v982, %v1247
    %v1249 = vpop.f32.mrf.mxu0
    %v1250 = vadd.f32 %v986, %v1249
    %1251 = vmatprep.mubr.bf16.mxu0 %v942
    %1252 = vmatmul.mubr.bf16.gmra.mxu0 %v941
    %v1253 = vpop.f32.mrf.mxu0
    %v1254 = vadd.f32 %v982, %v1253
    %v1255 = vpop.f32.mrf.mxu0
    %v1256 = vadd.f32 %v986, %v1255
    %v1257 = vpop.f32.mrf.mxu0
    %v1258 = vadd.f32 %v982, %v1257
    %v1259 = vpop.f32.mrf.mxu0
    %v1260 = vadd.f32 %v986, %v1259
    %1261 = vdwg.mxu0
    %v1262 = vmax.f32 %v1184, 0.0
    %v1263 = vmax.f32 %v1186, 0.0
    %v1264 = vmax.f32 %v1188, 0.0
    %v1265 = vmax.f32 %v1190, 0.0
    %v1266 = vmax.f32 %v1194, 0.0
    %v1267 = vmax.f32 %v1196, 0.0
    %v1268 = vmax.f32 %v1198, 0.0
    %v1269 = vmax.f32 %v1200, 0.0
    %v1270 = vmax.f32 %v1204, 0.0
    %v1271 = vmax.f32 %v1206, 0.0
    %v1272 = vmax.f32 %v1208, 0.0
    %v1273 = vmax.f32 %v1210, 0.0
    %v1274 = vmax.f32 %v1214, 0.0
    %v1275 = vmax.f32 %v1216, 0.0
    %v1276 = vmax.f32 %v1218, 0.0
    %v1277 = vmax.f32 %v1220, 0.0
    %v1278 = vmax.f32 %v1224, 0.0
    %v1279 = vmax.f32 %v1226, 0.0
    %v1280 = vmax.f32 %v1228, 0.0
    %v1281 = vmax.f32 %v1230, 0.0
    %v1282 = vmax.f32 %v1234, 0.0
    %v1283 = vmax.f32 %v1236, 0.0
    %v1284 = vmax.f32 %v1238, 0.0
    %v1285 = vmax.f32 %v1240, 0.0
    %v1286 = vmax.f32 %v1244, 0.0
    %v1287 = vmax.f32 %v1246, 0.0
    %v1288 = vmax.f32 %v1248, 0.0
    %v1289 = vmax.f32 %v1250, 0.0
    %v1290 = vmax.f32 %v1254, 0.0
    %v1291 = vmax.f32 %v1256, 0.0
    %v1292 = vmax.f32 %v1258, 0.0
    %v1293 = vmax.f32 %v1260, 0.0
    %v1294 = vpack.c.bf16 %v1264, %v1262
    %v1295 = vpack.c.bf16 %v1265, %v1263
    %v1296 = vpack.c.bf16 %v1268, %v1266
    %v1297 = vpack.c.bf16 %v1269, %v1267
    %v1298 = vpack.c.bf16 %v1272, %v1270
    %v1299 = vpack.c.bf16 %v1273, %v1271
    %v1300 = vpack.c.bf16 %v1276, %v1274
    %v1301 = vpack.c.bf16 %v1277, %v1275
    %v1302 = vpack.c.bf16 %v1280, %v1278
    %v1303 = vpack.c.bf16 %v1281, %v1279
    %v1304 = vpack.c.bf16 %v1284, %v1282
    %v1305 = vpack.c.bf16 %v1285, %v1283
    %v1306 = vpack.c.bf16 %v1288, %v1286
    %v1307 = vpack.c.bf16 %v1289, %v1287
    %v1308 = vpack.c.bf16 %v1292, %v1290
    %v1309 = vpack.c.bf16 %v1293, %v1291
    %s1310 = scalar_lea.vmem [#allocation3], 512
    %v1311 = vld [vmem:[%s1310] sm:$0xff]
    %v1312 = vld [vmem:[%s1310 + $0x8] sm:$0xff]
    %v1313 = vld [vmem:[%s1310 + $0x10] sm:$0xff]
    %v1314 = vld [vmem:[%s1310 + $0x18] sm:$0xff]
    %v1315 = vld [vmem:[%s1310 + $0x20] sm:$0xff]
    %v1316 = vld [vmem:[%s1310 + $0x28] sm:$0xff]
    %v1317 = vld [vmem:[%s1310 + $0x30] sm:$0xff]
    %v1318 = vld [vmem:[%s1310 + $0x38] sm:$0xff]
    %v1319 = vld [vmem:[%s1310 + $0x40] sm:$0xff]
    %v1320 = vld [vmem:[%s1310 + $0x48] sm:$0xff]
    %v1321 = vld [vmem:[%s1310 + $0x50] sm:$0xff]
    %v1322 = vld [vmem:[%s1310 + $0x58] sm:$0xff]
    %v1323 = vld [vmem:[%s1310 + $0x60] sm:$0xff]
    %v1324 = vld [vmem:[%s1310 + $0x68] sm:$0xff]
    %v1325 = vld [vmem:[%s1310 + $0x70] sm:$0xff]
    %v1326 = vld [vmem:[%s1310 + $0x78] sm:$0xff]
    %v1327 = vld [vmem:[%s1310 + $0x80] sm:$0xff]
    %v1328 = vld [vmem:[%s1310 + $0x88] sm:$0xff]
    %v1329 = vld [vmem:[%s1310 + $0x90] sm:$0xff]
    %v1330 = vld [vmem:[%s1310 + $0x98] sm:$0xff]
    %v1331 = vld [vmem:[%s1310 + $0xa0] sm:$0xff]
    %v1332 = vld [vmem:[%s1310 + $0xa8] sm:$0xff]
    %v1333 = vld [vmem:[%s1310 + $0xb0] sm:$0xff]
    %v1334 = vld [vmem:[%s1310 + $0xb8] sm:$0xff]
    %v1335 = vld [vmem:[%s1310 + $0xc0] sm:$0xff]
    %v1336 = vld [vmem:[%s1310 + $0xc8] sm:$0xff]
    %v1337 = vld [vmem:[%s1310 + $0xd0] sm:$0xff]
    %v1338 = vld [vmem:[%s1310 + $0xd8] sm:$0xff]
    %v1339 = vld [vmem:[%s1310 + $0xe0] sm:$0xff]
    %v1340 = vld [vmem:[%s1310 + $0xe8] sm:$0xff]
    %v1341 = vld [vmem:[%s1310 + $0xf0] sm:$0xff]
    %v1342 = vld [vmem:[%s1310 + $0xf8] sm:$0xff]
    %s1343 = scalar_lea.vmem %s4, 2
    %v1344 = vld [vmem:[%s1343] ss:$8 sm:$0x3]
    %v1346 = vlaneseq
    %v1347 = vshrl.u32 %v1346, 7
    %v1348 = vsub.s32 0, %v1347
    %v1349 = vrot.slane %v1344, %v1348
    %v1350 = vlaneseq
    %v1351 = vshrl.u32 %v1350, 7
    %v1352 = vsub.s32 1, %v1351
    %v1353 = vrot.slane %v1344, %v1352
    %v1388 = vunpack.c.l.b16 %v1311
    %v1389 = vunpack.c.h.b16 %v1311
    %v1390 = vunpack.c.l.b16 %v1312
    %v1391 = vunpack.c.h.b16 %v1312
    %v1392 = vunpack.c.l.b16 %v1313
    %v1393 = vunpack.c.h.b16 %v1313
    %v1394 = vunpack.c.l.b16 %v1314
    %v1395 = vunpack.c.h.b16 %v1314
    %v1396 = vunpack.c.l.b16 %v1315
    %v1397 = vunpack.c.h.b16 %v1315
    %v1398 = vunpack.c.l.b16 %v1316
    %v1399 = vunpack.c.h.b16 %v1316
    %v1400 = vunpack.c.l.b16 %v1317
    %v1401 = vunpack.c.h.b16 %v1317
    %v1402 = vunpack.c.l.b16 %v1318
    %v1403 = vunpack.c.h.b16 %v1318
    %v1404 = vunpack.c.l.b16 %v1319
    %v1405 = vunpack.c.h.b16 %v1319
    %v1406 = vunpack.c.l.b16 %v1320
    %v1407 = vunpack.c.h.b16 %v1320
    %v1408 = vunpack.c.l.b16 %v1321
    %v1409 = vunpack.c.h.b16 %v1321
    %v1410 = vunpack.c.l.b16 %v1322
    %v1411 = vunpack.c.h.b16 %v1322
    %v1412 = vunpack.c.l.b16 %v1323
    %v1413 = vunpack.c.h.b16 %v1323
    %v1414 = vunpack.c.l.b16 %v1324
    %v1415 = vunpack.c.h.b16 %v1324
    %v1416 = vunpack.c.l.b16 %v1325
    %v1417 = vunpack.c.h.b16 %v1325
    %v1418 = vunpack.c.l.b16 %v1326
    %v1419 = vunpack.c.h.b16 %v1326
    %v1420 = vunpack.c.l.b16 %v1327
    %v1421 = vunpack.c.h.b16 %v1327
    %v1422 = vunpack.c.l.b16 %v1328
    %v1423 = vunpack.c.h.b16 %v1328
    %v1424 = vunpack.c.l.b16 %v1329
    %v1425 = vunpack.c.h.b16 %v1329
    %v1426 = vunpack.c.l.b16 %v1330
    %v1427 = vunpack.c.h.b16 %v1330
    %v1428 = vunpack.c.l.b16 %v1331
    %v1429 = vunpack.c.h.b16 %v1331
    %v1430 = vunpack.c.l.b16 %v1332
    %v1431 = vunpack.c.h.b16 %v1332
    %v1432 = vunpack.c.l.b16 %v1333
    %v1433 = vunpack.c.h.b16 %v1333
    %v1434 = vunpack.c.l.b16 %v1334
    %v1435 = vunpack.c.h.b16 %v1334
    %v1436 = vunpack.c.l.b16 %v1335
    %v1437 = vunpack.c.h.b16 %v1335
    %v1438 = vunpack.c.l.b16 %v1336
    %v1439 = vunpack.c.h.b16 %v1336
    %v1440 = vunpack.c.l.b16 %v1337
    %v1441 = vunpack.c.h.b16 %v1337
    %v1442 = vunpack.c.l.b16 %v1338
    %v1443 = vunpack.c.h.b16 %v1338
    %v1444 = vunpack.c.l.b16 %v1339
    %v1445 = vunpack.c.h.b16 %v1339
    %v1446 = vunpack.c.l.b16 %v1340
    %v1447 = vunpack.c.h.b16 %v1340
    %v1448 = vunpack.c.l.b16 %v1341
    %v1449 = vunpack.c.h.b16 %v1341
    %v1450 = vunpack.c.l.b16 %v1342
    %v1451 = vunpack.c.h.b16 %v1342
    %v1452 = vpack.c.b16 %v1390, %v1388
    %v1453 = vpack.c.b16 %v1391, %v1389
    %v1454 = vpack.c.b16 %v1394, %v1392
    %v1455 = vpack.c.b16 %v1395, %v1393
    %v1456 = vpack.c.b16 %v1398, %v1396
    %v1457 = vpack.c.b16 %v1399, %v1397
    %v1458 = vpack.c.b16 %v1402, %v1400
    %v1459 = vpack.c.b16 %v1403, %v1401
    %v1460 = vpack.c.b16 %v1406, %v1404
    %v1461 = vpack.c.b16 %v1407, %v1405
    %v1462 = vpack.c.b16 %v1410, %v1408
    %v1463 = vpack.c.b16 %v1411, %v1409
    %v1464 = vpack.c.b16 %v1414, %v1412
    %v1465 = vpack.c.b16 %v1415, %v1413
    %v1466 = vpack.c.b16 %v1418, %v1416
    %v1467 = vpack.c.b16 %v1419, %v1417
    %v1468 = vpack.c.b16 %v1422, %v1420
    %v1469 = vpack.c.b16 %v1423, %v1421
    %v1470 = vpack.c.b16 %v1426, %v1424
    %v1471 = vpack.c.b16 %v1427, %v1425
    %v1472 = vpack.c.b16 %v1430, %v1428
    %v1473 = vpack.c.b16 %v1431, %v1429
    %v1474 = vpack.c.b16 %v1434, %v1432
    %v1475 = vpack.c.b16 %v1435, %v1433
    %v1476 = vpack.c.b16 %v1438, %v1436
    %v1477 = vpack.c.b16 %v1439, %v1437
    %v1478 = vpack.c.b16 %v1442, %v1440
    %v1479 = vpack.c.b16 %v1443, %v1441
    %v1480 = vpack.c.b16 %v1446, %v1444
    %v1481 = vpack.c.b16 %v1447, %v1445
    %v1482 = vpack.c.b16 %v1450, %v1448
    %v1483 = vpack.c.b16 %v1451, %v1449
    %1516 = vmatprep.subr.bf16.mxu0 %v1467
    %1517 = vmatpush1.bf16.msra.mxu0 %v1466
    %1518 = vmatprep.subr.bf16.mxu0 %v1465
    %1519 = vmatpush1.bf16.msra.mxu0 %v1464
    %1520 = vmatprep.subr.bf16.mxu0 %v1463
    %1521 = vmatpush1.bf16.msra.mxu0 %v1462
    %1522 = vmatprep.subr.bf16.mxu0 %v1461
    %1523 = vmatpush1.bf16.msra.mxu0 %v1460
    %1524 = vmatprep.subr.bf16.mxu0 %v1459
    %1525 = vmatpush1.bf16.msra.mxu0 %v1458
    %1526 = vmatprep.subr.bf16.mxu0 %v1457
    %1527 = vmatpush1.bf16.msra.mxu0 %v1456
    %1528 = vmatprep.subr.bf16.mxu0 %v1455
    %1529 = vmatpush1.bf16.msra.mxu0 %v1454
    %1530 = vmatprep.subr.bf16.mxu0 %v1453
    %1531 = vmatpush1.bf16.msra.mxu0 %v1452
    %1532 = vmatprep.subr.bf16.mxu0 %v1483
    %1533 = vmatpush2.bf16.msra.mxu0 %v1482
    %1534 = vmatprep.subr.bf16.mxu0 %v1481
    %1535 = vmatpush2.bf16.msra.mxu0 %v1480
    %1536 = vmatprep.subr.bf16.mxu0 %v1479
    %1537 = vmatpush2.bf16.msra.mxu0 %v1478
    %1538 = vmatprep.subr.bf16.mxu0 %v1477
    %1539 = vmatpush2.bf16.msra.mxu0 %v1476
    %1540 = vmatprep.subr.bf16.mxu0 %v1475
    %1541 = vmatpush2.bf16.msra.mxu0 %v1474
    %1542 = vmatprep.subr.bf16.mxu0 %v1473
    %1543 = vmatpush2.bf16.msra.mxu0 %v1472
    %1544 = vmatprep.subr.bf16.mxu0 %v1471
    %1545 = vmatpush2.bf16.msra.mxu0 %v1470
    %1546 = vmatprep.subr.bf16.mxu0 %v1469
    %1547 = vmatpush2.bf16.msra.mxu0 %v1468
    %1548 = vmatprep.mubr.bf16.mxu0 %v1295
    %1549 = vmatmul.mubr.bf16.gmra.mxu0 %v1294
    %v1550 = vpop.f32.mrf.mxu0
    %v1551 = vadd.f32 %v1349, %v1550
    %v1552 = vpop.f32.mrf.mxu0
    %v1553 = vadd.f32 %v1353, %v1552
    %v1554 = vpop.f32.mrf.mxu0
    %v1555 = vadd.f32 %v1349, %v1554
    %v1556 = vpop.f32.mrf.mxu0
    %v1557 = vadd.f32 %v1353, %v1556
    %1558 = vmatprep.mubr.bf16.mxu0 %v1297
    %1559 = vmatmul.mubr.bf16.gmra.mxu0 %v1296
    %v1560 = vpop.f32.mrf.mxu0
    %v1561 = vadd.f32 %v1349, %v1560
    %v1562 = vpop.f32.mrf.mxu0
    %v1563 = vadd.f32 %v1353, %v1562
    %v1564 = vpop.f32.mrf.mxu0
    %v1565 = vadd.f32 %v1349, %v1564
    %v1566 = vpop.f32.mrf.mxu0
    %v1567 = vadd.f32 %v1353, %v1566
    %1568 = vmatprep.mubr.bf16.mxu0 %v1299
    %1569 = vmatmul.mubr.bf16.gmra.mxu0 %v1298
    %v1570 = vpop.f32.mrf.mxu0
    %v1571 = vadd.f32 %v1349, %v1570
    %v1572 = vpop.f32.mrf.mxu0
    %v1573 = vadd.f32 %v1353, %v1572
    %v1574 = vpop.f32.mrf.mxu0
    %v1575 = vadd.f32 %v1349, %v1574
    %v1576 = vpop.f32.mrf.mxu0
    %v1577 = vadd.f32 %v1353, %v1576
    %1578 = vmatprep.mubr.bf16.mxu0 %v1301
    %1579 = vmatmul.mubr.bf16.gmra.mxu0 %v1300
    %v1580 = vpop.f32.mrf.mxu0
    %v1581 = vadd.f32 %v1349, %v1580
    %v1582 = vpop.f32.mrf.mxu0
    %v1583 = vadd.f32 %v1353, %v1582
    %v1584 = vpop.f32.mrf.mxu0
    %v1585 = vadd.f32 %v1349, %v1584
    %v1586 = vpop.f32.mrf.mxu0
    %v1587 = vadd.f32 %v1353, %v1586
    %1588 = vmatprep.mubr.bf16.mxu0 %v1303
    %1589 = vmatmul.mubr.bf16.gmra.mxu0 %v1302
    %v1590 = vpop.f32.mrf.mxu0
    %v1591 = vadd.f32 %v1349, %v1590
    %v1592 = vpop.f32.mrf.mxu0
    %v1593 = vadd.f32 %v1353, %v1592
    %v1594 = vpop.f32.mrf.mxu0
    %v1595 = vadd.f32 %v1349, %v1594
    %v1596 = vpop.f32.mrf.mxu0
    %v1597 = vadd.f32 %v1353, %v1596
    %1598 = vmatprep.mubr.bf16.mxu0 %v1305
    %1599 = vmatmul.mubr.bf16.gmra.mxu0 %v1304
    %v1600 = vpop.f32.mrf.mxu0
    %v1601 = vadd.f32 %v1349, %v1600
    %v1602 = vpop.f32.mrf.mxu0
    %v1603 = vadd.f32 %v1353, %v1602
    %v1604 = vpop.f32.mrf.mxu0
    %v1605 = vadd.f32 %v1349, %v1604
    %v1606 = vpop.f32.mrf.mxu0
    %v1607 = vadd.f32 %v1353, %v1606
    %1608 = vmatprep.mubr.bf16.mxu0 %v1307
    %1609 = vmatmul.mubr.bf16.gmra.mxu0 %v1306
    %v1610 = vpop.f32.mrf.mxu0
    %v1611 = vadd.f32 %v1349, %v1610
    %v1612 = vpop.f32.mrf.mxu0
    %v1613 = vadd.f32 %v1353, %v1612
    %v1614 = vpop.f32.mrf.mxu0
    %v1615 = vadd.f32 %v1349, %v1614
    %v1616 = vpop.f32.mrf.mxu0
    %v1617 = vadd.f32 %v1353, %v1616
    %1618 = vmatprep.mubr.bf16.mxu0 %v1309
    %1619 = vmatmul.mubr.bf16.gmra.mxu0 %v1308
    %v1620 = vpop.f32.mrf.mxu0
    %v1621 = vadd.f32 %v1349, %v1620
    %v1622 = vpop.f32.mrf.mxu0
    %v1623 = vadd.f32 %v1353, %v1622
    %v1624 = vpop.f32.mrf.mxu0
    %v1625 = vadd.f32 %v1349, %v1624
    %v1626 = vpop.f32.mrf.mxu0
    %v1627 = vadd.f32 %v1353, %v1626
    %1628 = vdwg.mxu0
    %v1629 = vmax.f32 %v1551, 0.0
    %v1630 = vmax.f32 %v1553, 0.0
    %v1631 = vmax.f32 %v1555, 0.0
    %v1632 = vmax.f32 %v1557, 0.0
    %v1633 = vmax.f32 %v1561, 0.0
    %v1634 = vmax.f32 %v1563, 0.0
    %v1635 = vmax.f32 %v1565, 0.0
    %v1636 = vmax.f32 %v1567, 0.0
    %v1637 = vmax.f32 %v1571, 0.0
    %v1638 = vmax.f32 %v1573, 0.0
    %v1639 = vmax.f32 %v1575, 0.0
    %v1640 = vmax.f32 %v1577, 0.0
    %v1641 = vmax.f32 %v1581, 0.0
    %v1642 = vmax.f32 %v1583, 0.0
    %v1643 = vmax.f32 %v1585, 0.0
    %v1644 = vmax.f32 %v1587, 0.0
    %v1645 = vmax.f32 %v1591, 0.0
    %v1646 = vmax.f32 %v1593, 0.0
    %v1647 = vmax.f32 %v1595, 0.0
    %v1648 = vmax.f32 %v1597, 0.0
    %v1649 = vmax.f32 %v1601, 0.0
    %v1650 = vmax.f32 %v1603, 0.0
    %v1651 = vmax.f32 %v1605, 0.0
    %v1652 = vmax.f32 %v1607, 0.0
    %v1653 = vmax.f32 %v1611, 0.0
    %v1654 = vmax.f32 %v1613, 0.0
    %v1655 = vmax.f32 %v1615, 0.0
    %v1656 = vmax.f32 %v1617, 0.0
    %v1657 = vmax.f32 %v1621, 0.0
    %v1658 = vmax.f32 %v1623, 0.0
    %v1659 = vmax.f32 %v1625, 0.0
    %v1660 = vmax.f32 %v1627, 0.0
    %v1661 = vpack.c.bf16 %v1631, %v1629
    %v1662 = vpack.c.bf16 %v1632, %v1630
    %v1663 = vpack.c.bf16 %v1635, %v1633
    %v1664 = vpack.c.bf16 %v1636, %v1634
    %v1665 = vpack.c.bf16 %v1639, %v1637
    %v1666 = vpack.c.bf16 %v1640, %v1638
    %v1667 = vpack.c.bf16 %v1643, %v1641
    %v1668 = vpack.c.bf16 %v1644, %v1642
    %v1669 = vpack.c.bf16 %v1647, %v1645
    %v1670 = vpack.c.bf16 %v1648, %v1646
    %v1671 = vpack.c.bf16 %v1651, %v1649
    %v1672 = vpack.c.bf16 %v1652, %v1650
    %v1673 = vpack.c.bf16 %v1655, %v1653
    %v1674 = vpack.c.bf16 %v1656, %v1654
    %v1675 = vpack.c.bf16 %v1659, %v1657
    %v1676 = vpack.c.bf16 %v1660, %v1658
    %s1677 = scalar_lea.vmem [#allocation3], 768
    %v1678 = vld [vmem:[%s1677] sm:$0xff]
    %v1679 = vld [vmem:[%s1677 + $0x8] sm:$0xff]
    %v1680 = vld [vmem:[%s1677 + $0x10] sm:$0xff]
    %v1681 = vld [vmem:[%s1677 + $0x18] sm:$0xff]
    %v1682 = vld [vmem:[%s1677 + $0x20] sm:$0xff]
    %v1683 = vld [vmem:[%s1677 + $0x28] sm:$0xff]
    %v1684 = vld [vmem:[%s1677 + $0x30] sm:$0xff]
    %v1685 = vld [vmem:[%s1677 + $0x38] sm:$0xff]
    %v1686 = vld [vmem:[%s1677 + $0x40] sm:$0xff]
    %v1687 = vld [vmem:[%s1677 + $0x48] sm:$0xff]
    %v1688 = vld [vmem:[%s1677 + $0x50] sm:$0xff]
    %v1689 = vld [vmem:[%s1677 + $0x58] sm:$0xff]
    %v1690 = vld [vmem:[%s1677 + $0x60] sm:$0xff]
    %v1691 = vld [vmem:[%s1677 + $0x68] sm:$0xff]
    %v1692 = vld [vmem:[%s1677 + $0x70] sm:$0xff]
    %v1693 = vld [vmem:[%s1677 + $0x78] sm:$0xff]
    %v1694 = vld [vmem:[%s1677 + $0x80] sm:$0xff]
    %v1695 = vld [vmem:[%s1677 + $0x88] sm:$0xff]
    %v1696 = vld [vmem:[%s1677 + $0x90] sm:$0xff]
    %v1697 = vld [vmem:[%s1677 + $0x98] sm:$0xff]
    %v1698 = vld [vmem:[%s1677 + $0xa0] sm:$0xff]
    %v1699 = vld [vmem:[%s1677 + $0xa8] sm:$0xff]
    %v1700 = vld [vmem:[%s1677 + $0xb0] sm:$0xff]
    %v1701 = vld [vmem:[%s1677 + $0xb8] sm:$0xff]
    %v1702 = vld [vmem:[%s1677 + $0xc0] sm:$0xff]
    %v1703 = vld [vmem:[%s1677 + $0xc8] sm:$0xff]
    %v1704 = vld [vmem:[%s1677 + $0xd0] sm:$0xff]
    %v1705 = vld [vmem:[%s1677 + $0xd8] sm:$0xff]
    %v1706 = vld [vmem:[%s1677 + $0xe0] sm:$0xff]
    %v1707 = vld [vmem:[%s1677 + $0xe8] sm:$0xff]
    %v1708 = vld [vmem:[%s1677 + $0xf0] sm:$0xff]
    %v1709 = vld [vmem:[%s1677 + $0xf8] sm:$0xff]
    %v1711 = vlaneseq
    %v1712 = vshrl.u32 %v1711, 7
    %v1713 = vsub.s32 0, %v1712
    %v1714 = vrot.slane %v62, %v1713
    %v1715 = vlaneseq
    %v1716 = vshrl.u32 %v1715, 7
    %v1717 = vsub.s32 4, %v1716
    %v1718 = vrot.slane %v62, %v1717
    %v1721 = vlaneseq
    %v1722 = vshrl.u32 %v1721, 7
    %v1723 = vsub.s32 0, %v1722
    %v1724 = vrot.slane %v1714, %v1723
    %v1725 = vlaneseq
    %v1726 = vshrl.u32 %v1725, 7
    %v1727 = vsub.s32 0, %v1726
    %v1728 = vrot.slane %v1718, %v1727
    %v1729 = vmul.f32 %v66, %v1724
    %v1730 = vmul.f32 %v66, %v1728
    %v1731 = vmul.f32 %v71, %v1724
    %v1732 = vmul.f32 %v71, %v1728
    %v1733 = vmul.f32 %v76, %v1724
    %v1734 = vmul.f32 %v76, %v1728
    %v1735 = vmul.f32 %v81, %v1724
    %v1736 = vmul.f32 %v81, %v1728
    %v1737 = vmul.f32 %v86, %v1724
    %v1738 = vmul.f32 %v86, %v1728
    %v1739 = vmul.f32 %v91, %v1724
    %v1740 = vmul.f32 %v91, %v1728
    %v1741 = vmul.f32 %v96, %v1724
    %v1742 = vmul.f32 %v96, %v1728
    %v1743 = vmul.f32 %v101, %v1724
    %v1744 = vmul.f32 %v101, %v1728
    %v1745 = vmul.f32 %v106, %v1724
    %v1746 = vmul.f32 %v106, %v1728
    %v1747 = vmul.f32 %v111, %v1724
    %v1748 = vmul.f32 %v111, %v1728
    %v1749 = vmul.f32 %v116, %v1724
    %v1750 = vmul.f32 %v116, %v1728
    %v1751 = vmul.f32 %v121, %v1724
    %v1752 = vmul.f32 %v121, %v1728
    %v1753 = vmul.f32 %v126, %v1724
    %v1754 = vmul.f32 %v126, %v1728
    %v1755 = vmul.f32 %v131, %v1724
    %v1756 = vmul.f32 %v131, %v1728
    %v1757 = vmul.f32 %v136, %v1724
    %v1758 = vmul.f32 %v136, %v1728
    %v1759 = vmul.f32 %v141, %v1724
    %v1760 = vmul.f32 %v141, %v1728
    %v1761 = vlaneseq
    %v1762 = vshrl.u32 %v1761, 7
    %v1763 = vsub.s32 1, %v1762
    %v1764 = vrot.slane %v62, %v1763
    %v1765 = vlaneseq
    %v1766 = vshrl.u32 %v1765, 7
    %v1767 = vsub.s32 5, %v1766
    %v1768 = vrot.slane %v62, %v1767
    %v1771 = vlaneseq
    %v1772 = vshrl.u32 %v1771, 7
    %v1773 = vsub.s32 1, %v1772
    %v1774 = vrot.slane %v1764, %v1773
    %v1775 = vlaneseq
    %v1776 = vshrl.u32 %v1775, 7
    %v1777 = vsub.s32 1, %v1776
    %v1778 = vrot.slane %v1768, %v1777
    %v1779 = vmul.f32 %v196, %v1774
    %v1780 = vmul.f32 %v196, %v1778
    %v1781 = vmul.f32 %v200, %v1774
    %v1782 = vmul.f32 %v200, %v1778
    %v1783 = vmul.f32 %v204, %v1774
    %v1784 = vmul.f32 %v204, %v1778
    %v1785 = vmul.f32 %v208, %v1774
    %v1786 = vmul.f32 %v208, %v1778
    %v1787 = vmul.f32 %v212, %v1774
    %v1788 = vmul.f32 %v212, %v1778
    %v1789 = vmul.f32 %v216, %v1774
    %v1790 = vmul.f32 %v216, %v1778
    %v1791 = vmul.f32 %v220, %v1774
    %v1792 = vmul.f32 %v220, %v1778
    %v1793 = vmul.f32 %v224, %v1774
    %v1794 = vmul.f32 %v224, %v1778
    %v1795 = vmul.f32 %v228, %v1774
    %v1796 = vmul.f32 %v228, %v1778
    %v1797 = vmul.f32 %v232, %v1774
    %v1798 = vmul.f32 %v232, %v1778
    %v1799 = vmul.f32 %v236, %v1774
    %v1800 = vmul.f32 %v236, %v1778
    %v1801 = vmul.f32 %v240, %v1774
    %v1802 = vmul.f32 %v240, %v1778
    %v1803 = vmul.f32 %v244, %v1774
    %v1804 = vmul.f32 %v244, %v1778
    %v1805 = vmul.f32 %v248, %v1774
    %v1806 = vmul.f32 %v248, %v1778
    %v1807 = vmul.f32 %v252, %v1774
    %v1808 = vmul.f32 %v252, %v1778
    %v1809 = vmul.f32 %v256, %v1774
    %v1810 = vmul.f32 %v256, %v1778
    %v1811 = vadd.f32 %v1729, %v1779
    %v1812 = vadd.f32 %v1730, %v1780
    %v1813 = vadd.f32 %v1731, %v1781
    %v1814 = vadd.f32 %v1732, %v1782
    %v1815 = vadd.f32 %v1733, %v1783
    %v1816 = vadd.f32 %v1734, %v1784
    %v1817 = vadd.f32 %v1735, %v1785
    %v1818 = vadd.f32 %v1736, %v1786
    %v1819 = vadd.f32 %v1737, %v1787
    %v1820 = vadd.f32 %v1738, %v1788
    %v1821 = vadd.f32 %v1739, %v1789
    %v1822 = vadd.f32 %v1740, %v1790
    %v1823 = vadd.f32 %v1741, %v1791
    %v1824 = vadd.f32 %v1742, %v1792
    %v1825 = vadd.f32 %v1743, %v1793
    %v1826 = vadd.f32 %v1744, %v1794
    %v1827 = vadd.f32 %v1745, %v1795
    %v1828 = vadd.f32 %v1746, %v1796
    %v1829 = vadd.f32 %v1747, %v1797
    %v1830 = vadd.f32 %v1748, %v1798
    %v1831 = vadd.f32 %v1749, %v1799
    %v1832 = vadd.f32 %v1750, %v1800
    %v1833 = vadd.f32 %v1751, %v1801
    %v1834 = vadd.f32 %v1752, %v1802
    %v1835 = vadd.f32 %v1753, %v1803
    %v1836 = vadd.f32 %v1754, %v1804
    %v1837 = vadd.f32 %v1755, %v1805
    %v1838 = vadd.f32 %v1756, %v1806
    %v1839 = vadd.f32 %v1757, %v1807
    %v1840 = vadd.f32 %v1758, %v1808
    %v1841 = vadd.f32 %v1759, %v1809
    %v1842 = vadd.f32 %v1760, %v1810
    %v1843 = vlaneseq
    %v1844 = vshrl.u32 %v1843, 7
    %v1845 = vsub.s32 2, %v1844
    %v1846 = vrot.slane %v62, %v1845
    %v1847 = vlaneseq
    %v1848 = vshrl.u32 %v1847, 7
    %v1849 = vsub.s32 6, %v1848
    %v1850 = vrot.slane %v62, %v1849
    %v1853 = vlaneseq
    %v1854 = vshrl.u32 %v1853, 7
    %v1855 = vsub.s32 2, %v1854
    %v1856 = vrot.slane %v1846, %v1855
    %v1857 = vlaneseq
    %v1858 = vshrl.u32 %v1857, 7
    %v1859 = vsub.s32 2, %v1858
    %v1860 = vrot.slane %v1850, %v1859
    %v1861 = vmul.f32 %v342, %v1856
    %v1862 = vmul.f32 %v342, %v1860
    %v1863 = vmul.f32 %v346, %v1856
    %v1864 = vmul.f32 %v346, %v1860
    %v1865 = vmul.f32 %v350, %v1856
    %v1866 = vmul.f32 %v350, %v1860
    %v1867 = vmul.f32 %v354, %v1856
    %v1868 = vmul.f32 %v354, %v1860
    %v1869 = vmul.f32 %v358, %v1856
    %v1870 = vmul.f32 %v358, %v1860
    %v1871 = vmul.f32 %v362, %v1856
    %v1872 = vmul.f32 %v362, %v1860
    %v1873 = vmul.f32 %v366, %v1856
    %v1874 = vmul.f32 %v366, %v1860
    %v1875 = vmul.f32 %v370, %v1856
    %v1876 = vmul.f32 %v370, %v1860
    %v1877 = vmul.f32 %v374, %v1856
    %v1878 = vmul.f32 %v374, %v1860
    %v1879 = vmul.f32 %v378, %v1856
    %v1880 = vmul.f32 %v378, %v1860
    %v1881 = vmul.f32 %v382, %v1856
    %v1882 = vmul.f32 %v382, %v1860
    %v1883 = vmul.f32 %v386, %v1856
    %v1884 = vmul.f32 %v386, %v1860
    %v1885 = vmul.f32 %v390, %v1856
    %v1886 = vmul.f32 %v390, %v1860
    %v1887 = vmul.f32 %v394, %v1856
    %v1888 = vmul.f32 %v394, %v1860
    %v1889 = vmul.f32 %v398, %v1856
    %v1890 = vmul.f32 %v398, %v1860
    %v1891 = vmul.f32 %v402, %v1856
    %v1892 = vmul.f32 %v402, %v1860
    %v1893 = vadd.f32 %v1811, %v1861
    %v1894 = vadd.f32 %v1812, %v1862
    %v1895 = vadd.f32 %v1813, %v1863
    %v1896 = vadd.f32 %v1814, %v1864
    %v1897 = vadd.f32 %v1815, %v1865
    %v1898 = vadd.f32 %v1816, %v1866
    %v1899 = vadd.f32 %v1817, %v1867
    %v1900 = vadd.f32 %v1818, %v1868
    %v1901 = vadd.f32 %v1819, %v1869
    %v1902 = vadd.f32 %v1820, %v1870
    %v1903 = vadd.f32 %v1821, %v1871
    %v1904 = vadd.f32 %v1822, %v1872
    %v1905 = vadd.f32 %v1823, %v1873
    %v1906 = vadd.f32 %v1824, %v1874
    %v1907 = vadd.f32 %v1825, %v1875
    %v1908 = vadd.f32 %v1826, %v1876
    %v1909 = vadd.f32 %v1827, %v1877
    %v1910 = vadd.f32 %v1828, %v1878
    %v1911 = vadd.f32 %v1829, %v1879
    %v1912 = vadd.f32 %v1830, %v1880
    %v1913 = vadd.f32 %v1831, %v1881
    %v1914 = vadd.f32 %v1832, %v1882
    %v1915 = vadd.f32 %v1833, %v1883
    %v1916 = vadd.f32 %v1834, %v1884
    %v1917 = vadd.f32 %v1835, %v1885
    %v1918 = vadd.f32 %v1836, %v1886
    %v1919 = vadd.f32 %v1837, %v1887
    %v1920 = vadd.f32 %v1838, %v1888
    %v1921 = vadd.f32 %v1839, %v1889
    %v1922 = vadd.f32 %v1840, %v1890
    %v1923 = vadd.f32 %v1841, %v1891
    %v1924 = vadd.f32 %v1842, %v1892
    %v1957 = vunpack.c.l.b16 %v1678
    %v1958 = vunpack.c.h.b16 %v1678
    %v1959 = vunpack.c.l.b16 %v1679
    %v1960 = vunpack.c.h.b16 %v1679
    %v1961 = vunpack.c.l.b16 %v1680
    %v1962 = vunpack.c.h.b16 %v1680
    %v1963 = vunpack.c.l.b16 %v1681
    %v1964 = vunpack.c.h.b16 %v1681
    %v1965 = vunpack.c.l.b16 %v1682
    %v1966 = vunpack.c.h.b16 %v1682
    %v1967 = vunpack.c.l.b16 %v1683
    %v1968 = vunpack.c.h.b16 %v1683
    %v1969 = vunpack.c.l.b16 %v1684
    %v1970 = vunpack.c.h.b16 %v1684
    %v1971 = vunpack.c.l.b16 %v1685
    %v1972 = vunpack.c.h.b16 %v1685
    %v1973 = vunpack.c.l.b16 %v1686
    %v1974 = vunpack.c.h.b16 %v1686
    %v1975 = vunpack.c.l.b16 %v1687
    %v1976 = vunpack.c.h.b16 %v1687
    %v1977 = vunpack.c.l.b16 %v1688
    %v1978 = vunpack.c.h.b16 %v1688
    %v1979 = vunpack.c.l.b16 %v1689
    %v1980 = vunpack.c.h.b16 %v1689
    %v1981 = vunpack.c.l.b16 %v1690
    %v1982 = vunpack.c.h.b16 %v1690
    %v1983 = vunpack.c.l.b16 %v1691
    %v1984 = vunpack.c.h.b16 %v1691
    %v1985 = vunpack.c.l.b16 %v1692
    %v1986 = vunpack.c.h.b16 %v1692
    %v1987 = vunpack.c.l.b16 %v1693
    %v1988 = vunpack.c.h.b16 %v1693
    %v1989 = vunpack.c.l.b16 %v1694
    %v1990 = vunpack.c.h.b16 %v1694
    %v1991 = vunpack.c.l.b16 %v1695
    %v1992 = vunpack.c.h.b16 %v1695
    %v1993 = vunpack.c.l.b16 %v1696
    %v1994 = vunpack.c.h.b16 %v1696
    %v1995 = vunpack.c.l.b16 %v1697
    %v1996 = vunpack.c.h.b16 %v1697
    %v1997 = vunpack.c.l.b16 %v1698
    %v1998 = vunpack.c.h.b16 %v1698
    %v1999 = vunpack.c.l.b16 %v1699
    %v2000 = vunpack.c.h.b16 %v1699
    %v2001 = vunpack.c.l.b16 %v1700
    %v2002 = vunpack.c.h.b16 %v1700
    %v2003 = vunpack.c.l.b16 %v1701
    %v2004 = vunpack.c.h.b16 %v1701
    %v2005 = vunpack.c.l.b16 %v1702
    %v2006 = vunpack.c.h.b16 %v1702
    %v2007 = vunpack.c.l.b16 %v1703
    %v2008 = vunpack.c.h.b16 %v1703
    %v2009 = vunpack.c.l.b16 %v1704
    %v2010 = vunpack.c.h.b16 %v1704
    %v2011 = vunpack.c.l.b16 %v1705
    %v2012 = vunpack.c.h.b16 %v1705
    %v2013 = vunpack.c.l.b16 %v1706
    %v2014 = vunpack.c.h.b16 %v1706
    %v2015 = vunpack.c.l.b16 %v1707
    %v2016 = vunpack.c.h.b16 %v1707
    %v2017 = vunpack.c.l.b16 %v1708
    %v2018 = vunpack.c.h.b16 %v1708
    %v2019 = vunpack.c.l.b16 %v1709
    %v2020 = vunpack.c.h.b16 %v1709
    %v2021 = vpack.c.b16 %v1959, %v1957
    %v2022 = vpack.c.b16 %v1960, %v1958
    %v2023 = vpack.c.b16 %v1963, %v1961
    %v2024 = vpack.c.b16 %v1964, %v1962
    %v2025 = vpack.c.b16 %v1967, %v1965
    %v2026 = vpack.c.b16 %v1968, %v1966
    %v2027 = vpack.c.b16 %v1971, %v1969
    %v2028 = vpack.c.b16 %v1972, %v1970
    %v2029 = vpack.c.b16 %v1975, %v1973
    %v2030 = vpack.c.b16 %v1976, %v1974
    %v2031 = vpack.c.b16 %v1979, %v1977
    %v2032 = vpack.c.b16 %v1980, %v1978
    %v2033 = vpack.c.b16 %v1983, %v1981
    %v2034 = vpack.c.b16 %v1984, %v1982
    %v2035 = vpack.c.b16 %v1987, %v1985
    %v2036 = vpack.c.b16 %v1988, %v1986
    %v2037 = vpack.c.b16 %v1991, %v1989
    %v2038 = vpack.c.b16 %v1992, %v1990
    %v2039 = vpack.c.b16 %v1995, %v1993
    %v2040 = vpack.c.b16 %v1996, %v1994
    %v2041 = vpack.c.b16 %v1999, %v1997
    %v2042 = vpack.c.b16 %v2000, %v1998
    %v2043 = vpack.c.b16 %v2003, %v2001
    %v2044 = vpack.c.b16 %v2004, %v2002
    %v2045 = vpack.c.b16 %v2007, %v2005
    %v2046 = vpack.c.b16 %v2008, %v2006
    %v2047 = vpack.c.b16 %v2011, %v2009
    %v2048 = vpack.c.b16 %v2012, %v2010
    %v2049 = vpack.c.b16 %v2015, %v2013
    %v2050 = vpack.c.b16 %v2016, %v2014
    %v2051 = vpack.c.b16 %v2019, %v2017
    %v2052 = vpack.c.b16 %v2020, %v2018
    %2085 = vmatprep.subr.bf16.mxu0 %v2036
    %2086 = vmatpush1.bf16.msra.mxu0 %v2035
    %2087 = vmatprep.subr.bf16.mxu0 %v2034
    %2088 = vmatpush1.bf16.msra.mxu0 %v2033
    %2089 = vmatprep.subr.bf16.mxu0 %v2032
    %2090 = vmatpush1.bf16.msra.mxu0 %v2031
    %2091 = vmatprep.subr.bf16.mxu0 %v2030
    %2092 = vmatpush1.bf16.msra.mxu0 %v2029
    %2093 = vmatprep.subr.bf16.mxu0 %v2028
    %2094 = vmatpush1.bf16.msra.mxu0 %v2027
    %2095 = vmatprep.subr.bf16.mxu0 %v2026
    %2096 = vmatpush1.bf16.msra.mxu0 %v2025
    %2097 = vmatprep.subr.bf16.mxu0 %v2024
    %2098 = vmatpush1.bf16.msra.mxu0 %v2023
    %2099 = vmatprep.subr.bf16.mxu0 %v2022
    %2100 = vmatpush1.bf16.msra.mxu0 %v2021
    %2101 = vmatprep.subr.bf16.mxu0 %v2052
    %2102 = vmatpush2.bf16.msra.mxu0 %v2051
    %2103 = vmatprep.subr.bf16.mxu0 %v2050
    %2104 = vmatpush2.bf16.msra.mxu0 %v2049
    %2105 = vmatprep.subr.bf16.mxu0 %v2048
    %2106 = vmatpush2.bf16.msra.mxu0 %v2047
    %2107 = vmatprep.subr.bf16.mxu0 %v2046
    %2108 = vmatpush2.bf16.msra.mxu0 %v2045
    %2109 = vmatprep.subr.bf16.mxu0 %v2044
    %2110 = vmatpush2.bf16.msra.mxu0 %v2043
    %2111 = vmatprep.subr.bf16.mxu0 %v2042
    %2112 = vmatpush2.bf16.msra.mxu0 %v2041
    %2113 = vmatprep.subr.bf16.mxu0 %v2040
    %2114 = vmatpush2.bf16.msra.mxu0 %v2039
    %2115 = vmatprep.subr.bf16.mxu0 %v2038
    %2116 = vmatpush2.bf16.msra.mxu0 %v2037
    %2117 = vmatprep.mubr.bf16.mxu0 %v1662
    %2118 = vmatmul.mubr.bf16.gmra.mxu0 %v1661
    %v2119 = vpop.f32.mrf.mxu0
    %v2120 = vadd.f32 %v1893, %v2119
    %v2121 = vpop.f32.mrf.mxu0
    %v2122 = vadd.f32 %v1894, %v2121
    %v2123 = vpop.f32.mrf.mxu0
    %v2124 = vadd.f32 %v1895, %v2123
    %v2125 = vpop.f32.mrf.mxu0
    %v2126 = vadd.f32 %v1896, %v2125
    %2127 = vmatprep.mubr.bf16.mxu0 %v1664
    %2128 = vmatmul.mubr.bf16.gmra.mxu0 %v1663
    %v2129 = vpop.f32.mrf.mxu0
    %v2130 = vadd.f32 %v1897, %v2129
    %v2131 = vpop.f32.mrf.mxu0
    %v2132 = vadd.f32 %v1898, %v2131
    %v2133 = vpop.f32.mrf.mxu0
    %v2134 = vadd.f32 %v1899, %v2133
    %v2135 = vpop.f32.mrf.mxu0
    %v2136 = vadd.f32 %v1900, %v2135
    %2137 = vmatprep.mubr.bf16.mxu0 %v1666
    %2138 = vmatmul.mubr.bf16.gmra.mxu0 %v1665
    %v2139 = vpop.f32.mrf.mxu0
    %v2140 = vadd.f32 %v1901, %v2139
    %v2141 = vpop.f32.mrf.mxu0
    %v2142 = vadd.f32 %v1902, %v2141
    %v2143 = vpop.f32.mrf.mxu0
    %v2144 = vadd.f32 %v1903, %v2143
    %v2145 = vpop.f32.mrf.mxu0
    %v2146 = vadd.f32 %v1904, %v2145
    %2147 = vmatprep.mubr.bf16.mxu0 %v1668
    %2148 = vmatmul.mubr.bf16.gmra.mxu0 %v1667
    %v2149 = vpop.f32.mrf.mxu0
    %v2150 = vadd.f32 %v1905, %v2149
    %v2151 = vpop.f32.mrf.mxu0
    %v2152 = vadd.f32 %v1906, %v2151
    %v2153 = vpop.f32.mrf.mxu0
    %v2154 = vadd.f32 %v1907, %v2153
    %v2155 = vpop.f32.mrf.mxu0
    %v2156 = vadd.f32 %v1908, %v2155
    %2157 = vmatprep.mubr.bf16.mxu0 %v1670
    %2158 = vmatmul.mubr.bf16.gmra.mxu0 %v1669
    %v2159 = vpop.f32.mrf.mxu0
    %v2160 = vadd.f32 %v1909, %v2159
    %v2161 = vpop.f32.mrf.mxu0
    %v2162 = vadd.f32 %v1910, %v2161
    %v2163 = vpop.f32.mrf.mxu0
    %v2164 = vadd.f32 %v1911, %v2163
    %v2165 = vpop.f32.mrf.mxu0
    %v2166 = vadd.f32 %v1912, %v2165
    %2167 = vmatprep.mubr.bf16.mxu0 %v1672
    %2168 = vmatmul.mubr.bf16.gmra.mxu0 %v1671
    %v2169 = vpop.f32.mrf.mxu0
    %v2170 = vadd.f32 %v1913, %v2169
    %v2171 = vpop.f32.mrf.mxu0
    %v2172 = vadd.f32 %v1914, %v2171
    %v2173 = vpop.f32.mrf.mxu0
    %v2174 = vadd.f32 %v1915, %v2173
    %v2175 = vpop.f32.mrf.mxu0
    %v2176 = vadd.f32 %v1916, %v2175
    %2177 = vmatprep.mubr.bf16.mxu0 %v1674
    %2178 = vmatmul.mubr.bf16.gmra.mxu0 %v1673
    %v2179 = vpop.f32.mrf.mxu0
    %v2180 = vadd.f32 %v1917, %v2179
    %v2181 = vpop.f32.mrf.mxu0
    %v2182 = vadd.f32 %v1918, %v2181
    %v2183 = vpop.f32.mrf.mxu0
    %v2184 = vadd.f32 %v1919, %v2183
    %v2185 = vpop.f32.mrf.mxu0
    %v2186 = vadd.f32 %v1920, %v2185
    %2187 = vmatprep.mubr.bf16.mxu0 %v1676
    %2188 = vmatmul.mubr.bf16.gmra.mxu0 %v1675
    %v2189 = vpop.f32.mrf.mxu0
    %v2190 = vadd.f32 %v1921, %v2189
    %v2191 = vpop.f32.mrf.mxu0
    %v2192 = vadd.f32 %v1922, %v2191
    %v2193 = vpop.f32.mrf.mxu0
    %v2194 = vadd.f32 %v1923, %v2193
    %v2195 = vpop.f32.mrf.mxu0
    %v2196 = vadd.f32 %v1924, %v2195
    %2197 = vdwg.mxu0
    %v2198 = vmul.f32 %v2120, 0.70710677
    %v2199 = vmul.f32 %v2122, 0.70710677
    %v2200 = vmul.f32 %v2124, 0.70710677
    %v2201 = vmul.f32 %v2126, 0.70710677
    %v2202 = vmul.f32 %v2130, 0.70710677
    %v2203 = vmul.f32 %v2132, 0.70710677
    %v2204 = vmul.f32 %v2134, 0.70710677
    %v2205 = vmul.f32 %v2136, 0.70710677
    %v2206 = vmul.f32 %v2140, 0.70710677
    %v2207 = vmul.f32 %v2142, 0.70710677
    %v2208 = vmul.f32 %v2144, 0.70710677
    %v2209 = vmul.f32 %v2146, 0.70710677
    %v2210 = vmul.f32 %v2150, 0.70710677
    %v2211 = vmul.f32 %v2152, 0.70710677
    %v2212 = vmul.f32 %v2154, 0.70710677
    %v2213 = vmul.f32 %v2156, 0.70710677
    %v2214 = vmul.f32 %v2160, 0.70710677
    %v2215 = vmul.f32 %v2162, 0.70710677
    %v2216 = vmul.f32 %v2164, 0.70710677
    %v2217 = vmul.f32 %v2166, 0.70710677
    %v2218 = vmul.f32 %v2170, 0.70710677
    %v2219 = vmul.f32 %v2172, 0.70710677
    %v2220 = vmul.f32 %v2174, 0.70710677
    %v2221 = vmul.f32 %v2176, 0.70710677
    %v2222 = vmul.f32 %v2180, 0.70710677
    %v2223 = vmul.f32 %v2182, 0.70710677
    %v2224 = vmul.f32 %v2184, 0.70710677
    %v2225 = vmul.f32 %v2186, 0.70710677
    %v2226 = vmul.f32 %v2190, 0.70710677
    %v2227 = vmul.f32 %v2192, 0.70710677
    %v2228 = vmul.f32 %v2194, 0.70710677
    %v2229 = vmul.f32 %v2196, 0.70710677
    %s2230 = scalar_lea.vmem %s4, 3
    %v2231 = vld [vmem:[%s2230] ss:$8 sm:$0x3]
    %v2233 = vlaneseq
    %v2234 = vshrl.u32 %v2233, 7
    %v2235 = vsub.s32 0, %v2234
    %v2236 = vrot.slane %v2231, %v2235
    %v2237 = vlaneseq
    %v2238 = vshrl.u32 %v2237, 7
    %v2239 = vsub.s32 1, %v2238
    %v2240 = vrot.slane %v2231, %v2239
    %v2243 = vadd.f32 %v2198, %v2236
    %v2244 = vadd.f32 %v2199, %v2240
    %v2245 = vadd.f32 %v2200, %v2236
    %v2246 = vadd.f32 %v2201, %v2240
    %v2247 = vadd.f32 %v2202, %v2236
    %v2248 = vadd.f32 %v2203, %v2240
    %v2249 = vadd.f32 %v2204, %v2236
    %v2250 = vadd.f32 %v2205, %v2240
    %v2251 = vadd.f32 %v2206, %v2236
    %v2252 = vadd.f32 %v2207, %v2240
    %v2253 = vadd.f32 %v2208, %v2236
    %v2254 = vadd.f32 %v2209, %v2240
    %v2255 = vadd.f32 %v2210, %v2236
    %v2256 = vadd.f32 %v2211, %v2240
    %v2257 = vadd.f32 %v2212, %v2236
    %v2258 = vadd.f32 %v2213, %v2240
    %v2259 = vadd.f32 %v2214, %v2236
    %v2260 = vadd.f32 %v2215, %v2240
    %v2261 = vadd.f32 %v2216, %v2236
    %v2262 = vadd.f32 %v2217, %v2240
    %v2263 = vadd.f32 %v2218, %v2236
    %v2264 = vadd.f32 %v2219, %v2240
    %v2265 = vadd.f32 %v2220, %v2236
    %v2266 = vadd.f32 %v2221, %v2240
    %v2267 = vadd.f32 %v2222, %v2236
    %v2268 = vadd.f32 %v2223, %v2240
    %v2269 = vadd.f32 %v2224, %v2236
    %v2270 = vadd.f32 %v2225, %v2240
    %v2271 = vadd.f32 %v2226, %v2236
    %v2272 = vadd.f32 %v2227, %v2240
    %v2273 = vadd.f32 %v2228, %v2236
    %v2274 = vadd.f32 %v2229, %v2240
    %v2275 = vmax.f32 %v2243, 0.0
    %v2276 = vmax.f32 %v2244, 0.0
    %v2277 = vmax.f32 %v2245, 0.0
    %v2278 = vmax.f32 %v2246, 0.0
    %v2279 = vmax.f32 %v2247, 0.0
    %v2280 = vmax.f32 %v2248, 0.0
    %v2281 = vmax.f32 %v2249, 0.0
    %v2282 = vmax.f32 %v2250, 0.0
    %v2283 = vmax.f32 %v2251, 0.0
    %v2284 = vmax.f32 %v2252, 0.0
    %v2285 = vmax.f32 %v2253, 0.0
    %v2286 = vmax.f32 %v2254, 0.0
    %v2287 = vmax.f32 %v2255, 0.0
    %v2288 = vmax.f32 %v2256, 0.0
    %v2289 = vmax.f32 %v2257, 0.0
    %v2290 = vmax.f32 %v2258, 0.0
    %v2291 = vmax.f32 %v2259, 0.0
    %v2292 = vmax.f32 %v2260, 0.0
    %v2293 = vmax.f32 %v2261, 0.0
    %v2294 = vmax.f32 %v2262, 0.0
    %v2295 = vmax.f32 %v2263, 0.0
    %v2296 = vmax.f32 %v2264, 0.0
    %v2297 = vmax.f32 %v2265, 0.0
    %v2298 = vmax.f32 %v2266, 0.0
    %v2299 = vmax.f32 %v2267, 0.0
    %v2300 = vmax.f32 %v2268, 0.0
    %v2301 = vmax.f32 %v2269, 0.0
    %v2302 = vmax.f32 %v2270, 0.0
    %v2303 = vmax.f32 %v2271, 0.0
    %v2304 = vmax.f32 %v2272, 0.0
    %v2305 = vmax.f32 %v2273, 0.0
    %v2306 = vmax.f32 %v2274, 0.0
    %v2307 = vpack.c.bf16 %v2277, %v2275
    %v2308 = vpack.c.bf16 %v2278, %v2276
    %v2309 = vpack.c.bf16 %v2281, %v2279
    %v2310 = vpack.c.bf16 %v2282, %v2280
    %v2311 = vpack.c.bf16 %v2285, %v2283
    %v2312 = vpack.c.bf16 %v2286, %v2284
    %v2313 = vpack.c.bf16 %v2289, %v2287
    %v2314 = vpack.c.bf16 %v2290, %v2288
    %v2315 = vpack.c.bf16 %v2293, %v2291
    %v2316 = vpack.c.bf16 %v2294, %v2292
    %v2317 = vpack.c.bf16 %v2297, %v2295
    %v2318 = vpack.c.bf16 %v2298, %v2296
    %v2319 = vpack.c.bf16 %v2301, %v2299
    %v2320 = vpack.c.bf16 %v2302, %v2300
    %v2321 = vpack.c.bf16 %v2305, %v2303
    %v2322 = vpack.c.bf16 %v2306, %v2304
    %s2323 = scalar_lea.vmem [#allocation3], 1024
    %v2324 = vld [vmem:[%s2323] sm:$0xff]
    %v2325 = vld [vmem:[%s2323 + $0x8] sm:$0xff]
    %v2326 = vld [vmem:[%s2323 + $0x10] sm:$0xff]
    %v2327 = vld [vmem:[%s2323 + $0x18] sm:$0xff]
    %v2328 = vld [vmem:[%s2323 + $0x20] sm:$0xff]
    %v2329 = vld [vmem:[%s2323 + $0x28] sm:$0xff]
    %v2330 = vld [vmem:[%s2323 + $0x30] sm:$0xff]
    %v2331 = vld [vmem:[%s2323 + $0x38] sm:$0xff]
    %v2332 = vld [vmem:[%s2323 + $0x40] sm:$0xff]
    %v2333 = vld [vmem:[%s2323 + $0x48] sm:$0xff]
    %v2334 = vld [vmem:[%s2323 + $0x50] sm:$0xff]
    %v2335 = vld [vmem:[%s2323 + $0x58] sm:$0xff]
    %v2336 = vld [vmem:[%s2323 + $0x60] sm:$0xff]
    %v2337 = vld [vmem:[%s2323 + $0x68] sm:$0xff]
    %v2338 = vld [vmem:[%s2323 + $0x70] sm:$0xff]
    %v2339 = vld [vmem:[%s2323 + $0x78] sm:$0xff]
    %v2340 = vld [vmem:[%s2323 + $0x80] sm:$0xff]
    %v2341 = vld [vmem:[%s2323 + $0x88] sm:$0xff]
    %v2342 = vld [vmem:[%s2323 + $0x90] sm:$0xff]
    %v2343 = vld [vmem:[%s2323 + $0x98] sm:$0xff]
    %v2344 = vld [vmem:[%s2323 + $0xa0] sm:$0xff]
    %v2345 = vld [vmem:[%s2323 + $0xa8] sm:$0xff]
    %v2346 = vld [vmem:[%s2323 + $0xb0] sm:$0xff]
    %v2347 = vld [vmem:[%s2323 + $0xb8] sm:$0xff]
    %v2348 = vld [vmem:[%s2323 + $0xc0] sm:$0xff]
    %v2349 = vld [vmem:[%s2323 + $0xc8] sm:$0xff]
    %v2350 = vld [vmem:[%s2323 + $0xd0] sm:$0xff]
    %v2351 = vld [vmem:[%s2323 + $0xd8] sm:$0xff]
    %v2352 = vld [vmem:[%s2323 + $0xe0] sm:$0xff]
    %v2353 = vld [vmem:[%s2323 + $0xe8] sm:$0xff]
    %v2354 = vld [vmem:[%s2323 + $0xf0] sm:$0xff]
    %v2355 = vld [vmem:[%s2323 + $0xf8] sm:$0xff]
    %s2356 = scalar_lea.vmem %s4, 4
    %v2357 = vld [vmem:[%s2356] ss:$8 sm:$0x3]
    %v2359 = vlaneseq
    %v2360 = vshrl.u32 %v2359, 7
    %v2361 = vsub.s32 0, %v2360
    %v2362 = vrot.slane %v2357, %v2361
    %v2363 = vlaneseq
    %v2364 = vshrl.u32 %v2363, 7
    %v2365 = vsub.s32 1, %v2364
    %v2366 = vrot.slane %v2357, %v2365
    %v2401 = vunpack.c.l.b16 %v2324
    %v2402 = vunpack.c.h.b16 %v2324
    %v2403 = vunpack.c.l.b16 %v2325
    %v2404 = vunpack.c.h.b16 %v2325
    %v2405 = vunpack.c.l.b16 %v2326
    %v2406 = vunpack.c.h.b16 %v2326
    %v2407 = vunpack.c.l.b16 %v2327
    %v2408 = vunpack.c.h.b16 %v2327
    %v2409 = vunpack.c.l.b16 %v2328
    %v2410 = vunpack.c.h.b16 %v2328
    %v2411 = vunpack.c.l.b16 %v2329
    %v2412 = vunpack.c.h.b16 %v2329
    %v2413 = vunpack.c.l.b16 %v2330
    %v2414 = vunpack.c.h.b16 %v2330
    %v2415 = vunpack.c.l.b16 %v2331
    %v2416 = vunpack.c.h.b16 %v2331
    %v2417 = vunpack.c.l.b16 %v2332
    %v2418 = vunpack.c.h.b16 %v2332
    %v2419 = vunpack.c.l.b16 %v2333
    %v2420 = vunpack.c.h.b16 %v2333
    %v2421 = vunpack.c.l.b16 %v2334
    %v2422 = vunpack.c.h.b16 %v2334
    %v2423 = vunpack.c.l.b16 %v2335
    %v2424 = vunpack.c.h.b16 %v2335
    %v2425 = vunpack.c.l.b16 %v2336
    %v2426 = vunpack.c.h.b16 %v2336
    %v2427 = vunpack.c.l.b16 %v2337
    %v2428 = vunpack.c.h.b16 %v2337
    %v2429 = vunpack.c.l.b16 %v2338
    %v2430 = vunpack.c.h.b16 %v2338
    %v2431 = vunpack.c.l.b16 %v2339
    %v2432 = vunpack.c.h.b16 %v2339
    %v2433 = vunpack.c.l.b16 %v2340
    %v2434 = vunpack.c.h.b16 %v2340
    %v2435 = vunpack.c.l.b16 %v2341
    %v2436 = vunpack.c.h.b16 %v2341
    %v2437 = vunpack.c.l.b16 %v2342
    %v2438 = vunpack.c.h.b16 %v2342
    %v2439 = vunpack.c.l.b16 %v2343
    %v2440 = vunpack.c.h.b16 %v2343
    %v2441 = vunpack.c.l.b16 %v2344
    %v2442 = vunpack.c.h.b16 %v2344
    %v2443 = vunpack.c.l.b16 %v2345
    %v2444 = vunpack.c.h.b16 %v2345
    %v2445 = vunpack.c.l.b16 %v2346
    %v2446 = vunpack.c.h.b16 %v2346
    %v2447 = vunpack.c.l.b16 %v2347
    %v2448 = vunpack.c.h.b16 %v2347
    %v2449 = vunpack.c.l.b16 %v2348
    %v2450 = vunpack.c.h.b16 %v2348
    %v2451 = vunpack.c.l.b16 %v2349
    %v2452 = vunpack.c.h.b16 %v2349
    %v2453 = vunpack.c.l.b16 %v2350
    %v2454 = vunpack.c.h.b16 %v2350
    %v2455 = vunpack.c.l.b16 %v2351
    %v2456 = vunpack.c.h.b16 %v2351
    %v2457 = vunpack.c.l.b16 %v2352
    %v2458 = vunpack.c.h.b16 %v2352
    %v2459 = vunpack.c.l.b16 %v2353
    %v2460 = vunpack.c.h.b16 %v2353
    %v2461 = vunpack.c.l.b16 %v2354
    %v2462 = vunpack.c.h.b16 %v2354
    %v2463 = vunpack.c.l.b16 %v2355
    %v2464 = vunpack.c.h.b16 %v2355
    %v2465 = vpack.c.b16 %v2403, %v2401
    %v2466 = vpack.c.b16 %v2404, %v2402
    %v2467 = vpack.c.b16 %v2407, %v2405
    %v2468 = vpack.c.b16 %v2408, %v2406
    %v2469 = vpack.c.b16 %v2411, %v2409
    %v2470 = vpack.c.b16 %v2412, %v2410
    %v2471 = vpack.c.b16 %v2415, %v2413
    %v2472 = vpack.c.b16 %v2416, %v2414
    %v2473 = vpack.c.b16 %v2419, %v2417
    %v2474 = vpack.c.b16 %v2420, %v2418
    %v2475 = vpack.c.b16 %v2423, %v2421
    %v2476 = vpack.c.b16 %v2424, %v2422
    %v2477 = vpack.c.b16 %v2427, %v2425
    %v2478 = vpack.c.b16 %v2428, %v2426
    %v2479 = vpack.c.b16 %v2431, %v2429
    %v2480 = vpack.c.b16 %v2432, %v2430
    %v2481 = vpack.c.b16 %v2435, %v2433
    %v2482 = vpack.c.b16 %v2436, %v2434
    %v2483 = vpack.c.b16 %v2439, %v2437
    %v2484 = vpack.c.b16 %v2440, %v2438
    %v2485 = vpack.c.b16 %v2443, %v2441
    %v2486 = vpack.c.b16 %v2444, %v2442
    %v2487 = vpack.c.b16 %v2447, %v2445
    %v2488 = vpack.c.b16 %v2448, %v2446
    %v2489 = vpack.c.b16 %v2451, %v2449
    %v2490 = vpack.c.b16 %v2452, %v2450
    %v2491 = vpack.c.b16 %v2455, %v2453
    %v2492 = vpack.c.b16 %v2456, %v2454
    %v2493 = vpack.c.b16 %v2459, %v2457
    %v2494 = vpack.c.b16 %v2460, %v2458
    %v2495 = vpack.c.b16 %v2463, %v2461
    %v2496 = vpack.c.b16 %v2464, %v2462
    %2529 = vmatprep.subr.bf16.mxu0 %v2480
    %2530 = vmatpush1.bf16.msra.mxu0 %v2479
    %2531 = vmatprep.subr.bf16.mxu0 %v2478
    %2532 = vmatpush1.bf16.msra.mxu0 %v2477
    %2533 = vmatprep.subr.bf16.mxu0 %v2476
    %2534 = vmatpush1.bf16.msra.mxu0 %v2475
    %2535 = vmatprep.subr.bf16.mxu0 %v2474
    %2536 = vmatpush1.bf16.msra.mxu0 %v2473
    %2537 = vmatprep.subr.bf16.mxu0 %v2472
    %2538 = vmatpush1.bf16.msra.mxu0 %v2471
    %2539 = vmatprep.subr.bf16.mxu0 %v2470
    %2540 = vmatpush1.bf16.msra.mxu0 %v2469
    %2541 = vmatprep.subr.bf16.mxu0 %v2468
    %2542 = vmatpush1.bf16.msra.mxu0 %v2467
    %2543 = vmatprep.subr.bf16.mxu0 %v2466
    %2544 = vmatpush1.bf16.msra.mxu0 %v2465
    %2545 = vmatprep.subr.bf16.mxu0 %v2496
    %2546 = vmatpush2.bf16.msra.mxu0 %v2495
    %2547 = vmatprep.subr.bf16.mxu0 %v2494
    %2548 = vmatpush2.bf16.msra.mxu0 %v2493
    %2549 = vmatprep.subr.bf16.mxu0 %v2492
    %2550 = vmatpush2.bf16.msra.mxu0 %v2491
    %2551 = vmatprep.subr.bf16.mxu0 %v2490
    %2552 = vmatpush2.bf16.msra.mxu0 %v2489
    %2553 = vmatprep.subr.bf16.mxu0 %v2488
    %2554 = vmatpush2.bf16.msra.mxu0 %v2487
    %2555 = vmatprep.subr.bf16.mxu0 %v2486
    %2556 = vmatpush2.bf16.msra.mxu0 %v2485
    %2557 = vmatprep.subr.bf16.mxu0 %v2484
    %2558 = vmatpush2.bf16.msra.mxu0 %v2483
    %2559 = vmatprep.subr.bf16.mxu0 %v2482
    %2560 = vmatpush2.bf16.msra.mxu0 %v2481
    %2561 = vmatprep.mubr.bf16.mxu0 %v2308
    %2562 = vmatmul.mubr.bf16.gmra.mxu0 %v2307
    %v2563 = vpop.f32.mrf.mxu0
    %v2564 = vadd.f32 %v2362, %v2563
    %v2565 = vpop.f32.mrf.mxu0
    %v2566 = vadd.f32 %v2366, %v2565
    %v2567 = vpop.f32.mrf.mxu0
    %v2568 = vadd.f32 %v2362, %v2567
    %v2569 = vpop.f32.mrf.mxu0
    %v2570 = vadd.f32 %v2366, %v2569
    %2571 = vmatprep.mubr.bf16.mxu0 %v2310
    %2572 = vmatmul.mubr.bf16.gmra.mxu0 %v2309
    %v2573 = vpop.f32.mrf.mxu0
    %v2574 = vadd.f32 %v2362, %v2573
    %v2575 = vpop.f32.mrf.mxu0
    %v2576 = vadd.f32 %v2366, %v2575
    %v2577 = vpop.f32.mrf.mxu0
    %v2578 = vadd.f32 %v2362, %v2577
    %v2579 = vpop.f32.mrf.mxu0
    %v2580 = vadd.f32 %v2366, %v2579
    %2581 = vmatprep.mubr.bf16.mxu0 %v2312
    %2582 = vmatmul.mubr.bf16.gmra.mxu0 %v2311
    %v2583 = vpop.f32.mrf.mxu0
    %v2584 = vadd.f32 %v2362, %v2583
    %v2585 = vpop.f32.mrf.mxu0
    %v2586 = vadd.f32 %v2366, %v2585
    %v2587 = vpop.f32.mrf.mxu0
    %v2588 = vadd.f32 %v2362, %v2587
    %v2589 = vpop.f32.mrf.mxu0
    %v2590 = vadd.f32 %v2366, %v2589
    %2591 = vmatprep.mubr.bf16.mxu0 %v2314
    %2592 = vmatmul.mubr.bf16.gmra.mxu0 %v2313
    %v2593 = vpop.f32.mrf.mxu0
    %v2594 = vadd.f32 %v2362, %v2593
    %v2595 = vpop.f32.mrf.mxu0
    %v2596 = vadd.f32 %v2366, %v2595
    %v2597 = vpop.f32.mrf.mxu0
    %v2598 = vadd.f32 %v2362, %v2597
    %v2599 = vpop.f32.mrf.mxu0
    %v2600 = vadd.f32 %v2366, %v2599
    %2601 = vmatprep.mubr.bf16.mxu0 %v2316
    %2602 = vmatmul.mubr.bf16.gmra.mxu0 %v2315
    %v2603 = vpop.f32.mrf.mxu0
    %v2604 = vadd.f32 %v2362, %v2603
    %v2605 = vpop.f32.mrf.mxu0
    %v2606 = vadd.f32 %v2366, %v2605
    %v2607 = vpop.f32.mrf.mxu0
    %v2608 = vadd.f32 %v2362, %v2607
    %v2609 = vpop.f32.mrf.mxu0
    %v2610 = vadd.f32 %v2366, %v2609
    %2611 = vmatprep.mubr.bf16.mxu0 %v2318
    %2612 = vmatmul.mubr.bf16.gmra.mxu0 %v2317
    %v2613 = vpop.f32.mrf.mxu0
    %v2614 = vadd.f32 %v2362, %v2613
    %v2615 = vpop.f32.mrf.mxu0
    %v2616 = vadd.f32 %v2366, %v2615
    %v2617 = vpop.f32.mrf.mxu0
    %v2618 = vadd.f32 %v2362, %v2617
    %v2619 = vpop.f32.mrf.mxu0
    %v2620 = vadd.f32 %v2366, %v2619
    %2621 = vmatprep.mubr.bf16.mxu0 %v2320
    %2622 = vmatmul.mubr.bf16.gmra.mxu0 %v2319
    %v2623 = vpop.f32.mrf.mxu0
    %v2624 = vadd.f32 %v2362, %v2623
    %v2625 = vpop.f32.mrf.mxu0
    %v2626 = vadd.f32 %v2366, %v2625
    %v2627 = vpop.f32.mrf.mxu0
    %v2628 = vadd.f32 %v2362, %v2627
    %v2629 = vpop.f32.mrf.mxu0
    %v2630 = vadd.f32 %v2366, %v2629
    %2631 = vmatprep.mubr.bf16.mxu0 %v2322
    %2632 = vmatmul.mubr.bf16.gmra.mxu0 %v2321
    %v2633 = vpop.f32.mrf.mxu0
    %v2634 = vadd.f32 %v2362, %v2633
    %v2635 = vpop.f32.mrf.mxu0
    %v2636 = vadd.f32 %v2366, %v2635
    %v2637 = vpop.f32.mrf.mxu0
    %v2638 = vadd.f32 %v2362, %v2637
    %v2639 = vpop.f32.mrf.mxu0
    %v2640 = vadd.f32 %v2366, %v2639
    %2641 = vdwg.mxu0
    %v2642 = vmax.f32 %v2564, 0.0
    %v2643 = vmax.f32 %v2566, 0.0
    %v2644 = vmax.f32 %v2568, 0.0
    %v2645 = vmax.f32 %v2570, 0.0
    %v2646 = vmax.f32 %v2574, 0.0
    %v2647 = vmax.f32 %v2576, 0.0
    %v2648 = vmax.f32 %v2578, 0.0
    %v2649 = vmax.f32 %v2580, 0.0
    %v2650 = vmax.f32 %v2584, 0.0
    %v2651 = vmax.f32 %v2586, 0.0
    %v2652 = vmax.f32 %v2588, 0.0
    %v2653 = vmax.f32 %v2590, 0.0
    %v2654 = vmax.f32 %v2594, 0.0
    %v2655 = vmax.f32 %v2596, 0.0
    %v2656 = vmax.f32 %v2598, 0.0
    %v2657 = vmax.f32 %v2600, 0.0
    %v2658 = vmax.f32 %v2604, 0.0
    %v2659 = vmax.f32 %v2606, 0.0
    %v2660 = vmax.f32 %v2608, 0.0
    %v2661 = vmax.f32 %v2610, 0.0
    %v2662 = vmax.f32 %v2614, 0.0
    %v2663 = vmax.f32 %v2616, 0.0
    %v2664 = vmax.f32 %v2618, 0.0
    %v2665 = vmax.f32 %v2620, 0.0
    %v2666 = vmax.f32 %v2624, 0.0
    %v2667 = vmax.f32 %v2626, 0.0
    %v2668 = vmax.f32 %v2628, 0.0
    %v2669 = vmax.f32 %v2630, 0.0
    %v2670 = vmax.f32 %v2634, 0.0
    %v2671 = vmax.f32 %v2636, 0.0
    %v2672 = vmax.f32 %v2638, 0.0
    %v2673 = vmax.f32 %v2640, 0.0
    %v2674 = vpack.c.bf16 %v2644, %v2642
    %v2675 = vpack.c.bf16 %v2645, %v2643
    %v2676 = vpack.c.bf16 %v2648, %v2646
    %v2677 = vpack.c.bf16 %v2649, %v2647
    %v2678 = vpack.c.bf16 %v2652, %v2650
    %v2679 = vpack.c.bf16 %v2653, %v2651
    %v2680 = vpack.c.bf16 %v2656, %v2654
    %v2681 = vpack.c.bf16 %v2657, %v2655
    %v2682 = vpack.c.bf16 %v2660, %v2658
    %v2683 = vpack.c.bf16 %v2661, %v2659
    %v2684 = vpack.c.bf16 %v2664, %v2662
    %v2685 = vpack.c.bf16 %v2665, %v2663
    %v2686 = vpack.c.bf16 %v2668, %v2666
    %v2687 = vpack.c.bf16 %v2669, %v2667
    %v2688 = vpack.c.bf16 %v2672, %v2670
    %v2689 = vpack.c.bf16 %v2673, %v2671
    %s2690 = scalar_lea.vmem [#allocation3], 1280
    %v2691 = vld [vmem:[%s2690] sm:$0xff]
    %v2692 = vld [vmem:[%s2690 + $0x8] sm:$0xff]
    %v2693 = vld [vmem:[%s2690 + $0x10] sm:$0xff]
    %v2694 = vld [vmem:[%s2690 + $0x18] sm:$0xff]
    %v2695 = vld [vmem:[%s2690 + $0x20] sm:$0xff]
    %v2696 = vld [vmem:[%s2690 + $0x28] sm:$0xff]
    %v2697 = vld [vmem:[%s2690 + $0x30] sm:$0xff]
    %v2698 = vld [vmem:[%s2690 + $0x38] sm:$0xff]
    %v2699 = vld [vmem:[%s2690 + $0x40] sm:$0xff]
    %v2700 = vld [vmem:[%s2690 + $0x48] sm:$0xff]
    %v2701 = vld [vmem:[%s2690 + $0x50] sm:$0xff]
    %v2702 = vld [vmem:[%s2690 + $0x58] sm:$0xff]
    %v2703 = vld [vmem:[%s2690 + $0x60] sm:$0xff]
    %v2704 = vld [vmem:[%s2690 + $0x68] sm:$0xff]
    %v2705 = vld [vmem:[%s2690 + $0x70] sm:$0xff]
    %v2706 = vld [vmem:[%s2690 + $0x78] sm:$0xff]
    %v2707 = vld [vmem:[%s2690 + $0x80] sm:$0xff]
    %v2708 = vld [vmem:[%s2690 + $0x88] sm:$0xff]
    %v2709 = vld [vmem:[%s2690 + $0x90] sm:$0xff]
    %v2710 = vld [vmem:[%s2690 + $0x98] sm:$0xff]
    %v2711 = vld [vmem:[%s2690 + $0xa0] sm:$0xff]
    %v2712 = vld [vmem:[%s2690 + $0xa8] sm:$0xff]
    %v2713 = vld [vmem:[%s2690 + $0xb0] sm:$0xff]
    %v2714 = vld [vmem:[%s2690 + $0xb8] sm:$0xff]
    %v2715 = vld [vmem:[%s2690 + $0xc0] sm:$0xff]
    %v2716 = vld [vmem:[%s2690 + $0xc8] sm:$0xff]
    %v2717 = vld [vmem:[%s2690 + $0xd0] sm:$0xff]
    %v2718 = vld [vmem:[%s2690 + $0xd8] sm:$0xff]
    %v2719 = vld [vmem:[%s2690 + $0xe0] sm:$0xff]
    %v2720 = vld [vmem:[%s2690 + $0xe8] sm:$0xff]
    %v2721 = vld [vmem:[%s2690 + $0xf0] sm:$0xff]
    %v2722 = vld [vmem:[%s2690 + $0xf8] sm:$0xff]
    %s2723 = scalar_lea.vmem %s4, 5
    %v2724 = vld [vmem:[%s2723] ss:$8 sm:$0x3]
    %v2726 = vlaneseq
    %v2727 = vshrl.u32 %v2726, 7
    %v2728 = vsub.s32 0, %v2727
    %v2729 = vrot.slane %v2724, %v2728
    %v2730 = vlaneseq
    %v2731 = vshrl.u32 %v2730, 7
    %v2732 = vsub.s32 1, %v2731
    %v2733 = vrot.slane %v2724, %v2732
    %v2768 = vunpack.c.l.b16 %v2691
    %v2769 = vunpack.c.h.b16 %v2691
    %v2770 = vunpack.c.l.b16 %v2692
    %v2771 = vunpack.c.h.b16 %v2692
    %v2772 = vunpack.c.l.b16 %v2693
    %v2773 = vunpack.c.h.b16 %v2693
    %v2774 = vunpack.c.l.b16 %v2694
    %v2775 = vunpack.c.h.b16 %v2694
    %v2776 = vunpack.c.l.b16 %v2695
    %v2777 = vunpack.c.h.b16 %v2695
    %v2778 = vunpack.c.l.b16 %v2696
    %v2779 = vunpack.c.h.b16 %v2696
    %v2780 = vunpack.c.l.b16 %v2697
    %v2781 = vunpack.c.h.b16 %v2697
    %v2782 = vunpack.c.l.b16 %v2698
    %v2783 = vunpack.c.h.b16 %v2698
    %v2784 = vunpack.c.l.b16 %v2699
    %v2785 = vunpack.c.h.b16 %v2699
    %v2786 = vunpack.c.l.b16 %v2700
    %v2787 = vunpack.c.h.b16 %v2700
    %v2788 = vunpack.c.l.b16 %v2701
    %v2789 = vunpack.c.h.b16 %v2701
    %v2790 = vunpack.c.l.b16 %v2702
    %v2791 = vunpack.c.h.b16 %v2702
    %v2792 = vunpack.c.l.b16 %v2703
    %v2793 = vunpack.c.h.b16 %v2703
    %v2794 = vunpack.c.l.b16 %v2704
    %v2795 = vunpack.c.h.b16 %v2704
    %v2796 = vunpack.c.l.b16 %v2705
    %v2797 = vunpack.c.h.b16 %v2705
    %v2798 = vunpack.c.l.b16 %v2706
    %v2799 = vunpack.c.h.b16 %v2706
    %v2800 = vunpack.c.l.b16 %v2707
    %v2801 = vunpack.c.h.b16 %v2707
    %v2802 = vunpack.c.l.b16 %v2708
    %v2803 = vunpack.c.h.b16 %v2708
    %v2804 = vunpack.c.l.b16 %v2709
    %v2805 = vunpack.c.h.b16 %v2709
    %v2806 = vunpack.c.l.b16 %v2710
    %v2807 = vunpack.c.h.b16 %v2710
    %v2808 = vunpack.c.l.b16 %v2711
    %v2809 = vunpack.c.h.b16 %v2711
    %v2810 = vunpack.c.l.b16 %v2712
    %v2811 = vunpack.c.h.b16 %v2712
    %v2812 = vunpack.c.l.b16 %v2713
    %v2813 = vunpack.c.h.b16 %v2713
    %v2814 = vunpack.c.l.b16 %v2714
    %v2815 = vunpack.c.h.b16 %v2714
    %v2816 = vunpack.c.l.b16 %v2715
    %v2817 = vunpack.c.h.b16 %v2715
    %v2818 = vunpack.c.l.b16 %v2716
    %v2819 = vunpack.c.h.b16 %v2716
    %v2820 = vunpack.c.l.b16 %v2717
    %v2821 = vunpack.c.h.b16 %v2717
    %v2822 = vunpack.c.l.b16 %v2718
    %v2823 = vunpack.c.h.b16 %v2718
    %v2824 = vunpack.c.l.b16 %v2719
    %v2825 = vunpack.c.h.b16 %v2719
    %v2826 = vunpack.c.l.b16 %v2720
    %v2827 = vunpack.c.h.b16 %v2720
    %v2828 = vunpack.c.l.b16 %v2721
    %v2829 = vunpack.c.h.b16 %v2721
    %v2830 = vunpack.c.l.b16 %v2722
    %v2831 = vunpack.c.h.b16 %v2722
    %v2832 = vpack.c.b16 %v2770, %v2768
    %v2833 = vpack.c.b16 %v2771, %v2769
    %v2834 = vpack.c.b16 %v2774, %v2772
    %v2835 = vpack.c.b16 %v2775, %v2773
    %v2836 = vpack.c.b16 %v2778, %v2776
    %v2837 = vpack.c.b16 %v2779, %v2777
    %v2838 = vpack.c.b16 %v2782, %v2780
    %v2839 = vpack.c.b16 %v2783, %v2781
    %v2840 = vpack.c.b16 %v2786, %v2784
    %v2841 = vpack.c.b16 %v2787, %v2785
    %v2842 = vpack.c.b16 %v2790, %v2788
    %v2843 = vpack.c.b16 %v2791, %v2789
    %v2844 = vpack.c.b16 %v2794, %v2792
    %v2845 = vpack.c.b16 %v2795, %v2793
    %v2846 = vpack.c.b16 %v2798, %v2796
    %v2847 = vpack.c.b16 %v2799, %v2797
    %v2848 = vpack.c.b16 %v2802, %v2800
    %v2849 = vpack.c.b16 %v2803, %v2801
    %v2850 = vpack.c.b16 %v2806, %v2804
    %v2851 = vpack.c.b16 %v2807, %v2805
    %v2852 = vpack.c.b16 %v2810, %v2808
    %v2853 = vpack.c.b16 %v2811, %v2809
    %v2854 = vpack.c.b16 %v2814, %v2812
    %v2855 = vpack.c.b16 %v2815, %v2813
    %v2856 = vpack.c.b16 %v2818, %v2816
    %v2857 = vpack.c.b16 %v2819, %v2817
    %v2858 = vpack.c.b16 %v2822, %v2820
    %v2859 = vpack.c.b16 %v2823, %v2821
    %v2860 = vpack.c.b16 %v2826, %v2824
    %v2861 = vpack.c.b16 %v2827, %v2825
    %v2862 = vpack.c.b16 %v2830, %v2828
    %v2863 = vpack.c.b16 %v2831, %v2829
    %2896 = vmatprep.subr.bf16.mxu0 %v2847
    %2897 = vmatpush1.bf16.msra.mxu0 %v2846
    %2898 = vmatprep.subr.bf16.mxu0 %v2845
    %2899 = vmatpush1.bf16.msra.mxu0 %v2844
    %2900 = vmatprep.subr.bf16.mxu0 %v2843
    %2901 = vmatpush1.bf16.msra.mxu0 %v2842
    %2902 = vmatprep.subr.bf16.mxu0 %v2841
    %2903 = vmatpush1.bf16.msra.mxu0 %v2840
    %2904 = vmatprep.subr.bf16.mxu0 %v2839
    %2905 = vmatpush1.bf16.msra.mxu0 %v2838
    %2906 = vmatprep.subr.bf16.mxu0 %v2837
    %2907 = vmatpush1.bf16.msra.mxu0 %v2836
    %2908 = vmatprep.subr.bf16.mxu0 %v2835
    %2909 = vmatpush1.bf16.msra.mxu0 %v2834
    %2910 = vmatprep.subr.bf16.mxu0 %v2833
    %2911 = vmatpush1.bf16.msra.mxu0 %v2832
    %2912 = vmatprep.subr.bf16.mxu0 %v2863
    %2913 = vmatpush2.bf16.msra.mxu0 %v2862
    %2914 = vmatprep.subr.bf16.mxu0 %v2861
    %2915 = vmatpush2.bf16.msra.mxu0 %v2860
    %2916 = vmatprep.subr.bf16.mxu0 %v2859
    %2917 = vmatpush2.bf16.msra.mxu0 %v2858
    %2918 = vmatprep.subr.bf16.mxu0 %v2857
    %2919 = vmatpush2.bf16.msra.mxu0 %v2856
    %2920 = vmatprep.subr.bf16.mxu0 %v2855
    %2921 = vmatpush2.bf16.msra.mxu0 %v2854
    %2922 = vmatprep.subr.bf16.mxu0 %v2853
    %2923 = vmatpush2.bf16.msra.mxu0 %v2852
    %2924 = vmatprep.subr.bf16.mxu0 %v2851
    %2925 = vmatpush2.bf16.msra.mxu0 %v2850
    %2926 = vmatprep.subr.bf16.mxu0 %v2849
    %2927 = vmatpush2.bf16.msra.mxu0 %v2848
    %2928 = vmatprep.mubr.bf16.mxu0 %v2675
    %2929 = vmatmul.mubr.bf16.gmra.mxu0 %v2674
    %v2930 = vpop.f32.mrf.mxu0
    %v2931 = vadd.f32 %v2729, %v2930
    %v2932 = vpop.f32.mrf.mxu0
    %v2933 = vadd.f32 %v2733, %v2932
    %v2934 = vpop.f32.mrf.mxu0
    %v2935 = vadd.f32 %v2729, %v2934
    %v2936 = vpop.f32.mrf.mxu0
    %v2937 = vadd.f32 %v2733, %v2936
    %2938 = vmatprep.mubr.bf16.mxu0 %v2677
    %2939 = vmatmul.mubr.bf16.gmra.mxu0 %v2676
    %v2940 = vpop.f32.mrf.mxu0
    %v2941 = vadd.f32 %v2729, %v2940
    %v2942 = vpop.f32.mrf.mxu0
    %v2943 = vadd.f32 %v2733, %v2942
    %v2944 = vpop.f32.mrf.mxu0
    %v2945 = vadd.f32 %v2729, %v2944
    %v2946 = vpop.f32.mrf.mxu0
    %v2947 = vadd.f32 %v2733, %v2946
    %2948 = vmatprep.mubr.bf16.mxu0 %v2679
    %2949 = vmatmul.mubr.bf16.gmra.mxu0 %v2678
    %v2950 = vpop.f32.mrf.mxu0
    %v2951 = vadd.f32 %v2729, %v2950
    %v2952 = vpop.f32.mrf.mxu0
    %v2953 = vadd.f32 %v2733, %v2952
    %v2954 = vpop.f32.mrf.mxu0
    %v2955 = vadd.f32 %v2729, %v2954
    %v2956 = vpop.f32.mrf.mxu0
    %v2957 = vadd.f32 %v2733, %v2956
    %2958 = vmatprep.mubr.bf16.mxu0 %v2681
    %2959 = vmatmul.mubr.bf16.gmra.mxu0 %v2680
    %v2960 = vpop.f32.mrf.mxu0
    %v2961 = vadd.f32 %v2729, %v2960
    %v2962 = vpop.f32.mrf.mxu0
    %v2963 = vadd.f32 %v2733, %v2962
    %v2964 = vpop.f32.mrf.mxu0
    %v2965 = vadd.f32 %v2729, %v2964
    %v2966 = vpop.f32.mrf.mxu0
    %v2967 = vadd.f32 %v2733, %v2966
    %2968 = vmatprep.mubr.bf16.mxu0 %v2683
    %2969 = vmatmul.mubr.bf16.gmra.mxu0 %v2682
    %v2970 = vpop.f32.mrf.mxu0
    %v2971 = vadd.f32 %v2729, %v2970
    %v2972 = vpop.f32.mrf.mxu0
    %v2973 = vadd.f32 %v2733, %v2972
    %v2974 = vpop.f32.mrf.mxu0
    %v2975 = vadd.f32 %v2729, %v2974
    %v2976 = vpop.f32.mrf.mxu0
    %v2977 = vadd.f32 %v2733, %v2976
    %2978 = vmatprep.mubr.bf16.mxu0 %v2685
    %2979 = vmatmul.mubr.bf16.gmra.mxu0 %v2684
    %v2980 = vpop.f32.mrf.mxu0
    %v2981 = vadd.f32 %v2729, %v2980
    %v2982 = vpop.f32.mrf.mxu0
    %v2983 = vadd.f32 %v2733, %v2982
    %v2984 = vpop.f32.mrf.mxu0
    %v2985 = vadd.f32 %v2729, %v2984
    %v2986 = vpop.f32.mrf.mxu0
    %v2987 = vadd.f32 %v2733, %v2986
    %2988 = vmatprep.mubr.bf16.mxu0 %v2687
    %2989 = vmatmul.mubr.bf16.gmra.mxu0 %v2686
    %v2990 = vpop.f32.mrf.mxu0
    %v2991 = vadd.f32 %v2729, %v2990
    %v2992 = vpop.f32.mrf.mxu0
    %v2993 = vadd.f32 %v2733, %v2992
    %v2994 = vpop.f32.mrf.mxu0
    %v2995 = vadd.f32 %v2729, %v2994
    %v2996 = vpop.f32.mrf.mxu0
    %v2997 = vadd.f32 %v2733, %v2996
    %2998 = vmatprep.mubr.bf16.mxu0 %v2689
    %2999 = vmatmul.mubr.bf16.gmra.mxu0 %v2688
    %v3000 = vpop.f32.mrf.mxu0
    %v3001 = vadd.f32 %v2729, %v3000
    %v3002 = vpop.f32.mrf.mxu0
    %v3003 = vadd.f32 %v2733, %v3002
    %v3004 = vpop.f32.mrf.mxu0
    %v3005 = vadd.f32 %v2729, %v3004
    %v3006 = vpop.f32.mrf.mxu0
    %v3007 = vadd.f32 %v2733, %v3006
    %3008 = vdwg.mxu0
    %v3009 = vmax.f32 %v2931, 0.0
    %v3010 = vmax.f32 %v2933, 0.0
    %v3011 = vmax.f32 %v2935, 0.0
    %v3012 = vmax.f32 %v2937, 0.0
    %v3013 = vmax.f32 %v2941, 0.0
    %v3014 = vmax.f32 %v2943, 0.0
    %v3015 = vmax.f32 %v2945, 0.0
    %v3016 = vmax.f32 %v2947, 0.0
    %v3017 = vmax.f32 %v2951, 0.0
    %v3018 = vmax.f32 %v2953, 0.0
    %v3019 = vmax.f32 %v2955, 0.0
    %v3020 = vmax.f32 %v2957, 0.0
    %v3021 = vmax.f32 %v2961, 0.0
    %v3022 = vmax.f32 %v2963, 0.0
    %v3023 = vmax.f32 %v2965, 0.0
    %v3024 = vmax.f32 %v2967, 0.0
    %v3025 = vmax.f32 %v2971, 0.0
    %v3026 = vmax.f32 %v2973, 0.0
    %v3027 = vmax.f32 %v2975, 0.0
    %v3028 = vmax.f32 %v2977, 0.0
    %v3029 = vmax.f32 %v2981, 0.0
    %v3030 = vmax.f32 %v2983, 0.0
    %v3031 = vmax.f32 %v2985, 0.0
    %v3032 = vmax.f32 %v2987, 0.0
    %v3033 = vmax.f32 %v2991, 0.0
    %v3034 = vmax.f32 %v2993, 0.0
    %v3035 = vmax.f32 %v2995, 0.0
    %v3036 = vmax.f32 %v2997, 0.0
    %v3037 = vmax.f32 %v3001, 0.0
    %v3038 = vmax.f32 %v3003, 0.0
    %v3039 = vmax.f32 %v3005, 0.0
    %v3040 = vmax.f32 %v3007, 0.0
    %v3041 = vpack.c.bf16 %v3011, %v3009
    %v3042 = vpack.c.bf16 %v3012, %v3010
    %v3043 = vpack.c.bf16 %v3015, %v3013
    %v3044 = vpack.c.bf16 %v3016, %v3014
    %v3045 = vpack.c.bf16 %v3019, %v3017
    %v3046 = vpack.c.bf16 %v3020, %v3018
    %v3047 = vpack.c.bf16 %v3023, %v3021
    %v3048 = vpack.c.bf16 %v3024, %v3022
    %v3049 = vpack.c.bf16 %v3027, %v3025
    %v3050 = vpack.c.bf16 %v3028, %v3026
    %v3051 = vpack.c.bf16 %v3031, %v3029
    %v3052 = vpack.c.bf16 %v3032, %v3030
    %v3053 = vpack.c.bf16 %v3035, %v3033
    %v3054 = vpack.c.bf16 %v3036, %v3034
    %v3055 = vpack.c.bf16 %v3039, %v3037
    %v3056 = vpack.c.bf16 %v3040, %v3038
    %s3057 = scalar_lea.vmem [#allocation3], 1536
    %v3058 = vld [vmem:[%s3057] sm:$0xff]
    %v3059 = vld [vmem:[%s3057 + $0x8] sm:$0xff]
    %v3060 = vld [vmem:[%s3057 + $0x10] sm:$0xff]
    %v3061 = vld [vmem:[%s3057 + $0x18] sm:$0xff]
    %v3062 = vld [vmem:[%s3057 + $0x20] sm:$0xff]
    %v3063 = vld [vmem:[%s3057 + $0x28] sm:$0xff]
    %v3064 = vld [vmem:[%s3057 + $0x30] sm:$0xff]
    %v3065 = vld [vmem:[%s3057 + $0x38] sm:$0xff]
    %v3066 = vld [vmem:[%s3057 + $0x40] sm:$0xff]
    %v3067 = vld [vmem:[%s3057 + $0x48] sm:$0xff]
    %v3068 = vld [vmem:[%s3057 + $0x50] sm:$0xff]
    %v3069 = vld [vmem:[%s3057 + $0x58] sm:$0xff]
    %v3070 = vld [vmem:[%s3057 + $0x60] sm:$0xff]
    %v3071 = vld [vmem:[%s3057 + $0x68] sm:$0xff]
    %v3072 = vld [vmem:[%s3057 + $0x70] sm:$0xff]
    %v3073 = vld [vmem:[%s3057 + $0x78] sm:$0xff]
    %v3074 = vld [vmem:[%s3057 + $0x80] sm:$0xff]
    %v3075 = vld [vmem:[%s3057 + $0x88] sm:$0xff]
    %v3076 = vld [vmem:[%s3057 + $0x90] sm:$0xff]
    %v3077 = vld [vmem:[%s3057 + $0x98] sm:$0xff]
    %v3078 = vld [vmem:[%s3057 + $0xa0] sm:$0xff]
    %v3079 = vld [vmem:[%s3057 + $0xa8] sm:$0xff]
    %v3080 = vld [vmem:[%s3057 + $0xb0] sm:$0xff]
    %v3081 = vld [vmem:[%s3057 + $0xb8] sm:$0xff]
    %v3082 = vld [vmem:[%s3057 + $0xc0] sm:$0xff]
    %v3083 = vld [vmem:[%s3057 + $0xc8] sm:$0xff]
    %v3084 = vld [vmem:[%s3057 + $0xd0] sm:$0xff]
    %v3085 = vld [vmem:[%s3057 + $0xd8] sm:$0xff]
    %v3086 = vld [vmem:[%s3057 + $0xe0] sm:$0xff]
    %v3087 = vld [vmem:[%s3057 + $0xe8] sm:$0xff]
    %v3088 = vld [vmem:[%s3057 + $0xf0] sm:$0xff]
    %v3089 = vld [vmem:[%s3057 + $0xf8] sm:$0xff]
    %s3090 = scalar_lea.vmem %s4, 6
    %v3091 = vld [vmem:[%s3090] ss:$8 sm:$0x3]
    %v3093 = vlaneseq
    %v3094 = vshrl.u32 %v3093, 7
    %v3095 = vsub.s32 0, %v3094
    %v3096 = vrot.slane %v3091, %v3095
    %v3097 = vlaneseq
    %v3098 = vshrl.u32 %v3097, 7
    %v3099 = vsub.s32 1, %v3098
    %v3100 = vrot.slane %v3091, %v3099
    %v3135 = vunpack.c.l.b16 %v3058
    %v3136 = vunpack.c.h.b16 %v3058
    %v3137 = vunpack.c.l.b16 %v3059
    %v3138 = vunpack.c.h.b16 %v3059
    %v3139 = vunpack.c.l.b16 %v3060
    %v3140 = vunpack.c.h.b16 %v3060
    %v3141 = vunpack.c.l.b16 %v3061
    %v3142 = vunpack.c.h.b16 %v3061
    %v3143 = vunpack.c.l.b16 %v3062
    %v3144 = vunpack.c.h.b16 %v3062
    %v3145 = vunpack.c.l.b16 %v3063
    %v3146 = vunpack.c.h.b16 %v3063
    %v3147 = vunpack.c.l.b16 %v3064
    %v3148 = vunpack.c.h.b16 %v3064
    %v3149 = vunpack.c.l.b16 %v3065
    %v3150 = vunpack.c.h.b16 %v3065
    %v3151 = vunpack.c.l.b16 %v3066
    %v3152 = vunpack.c.h.b16 %v3066
    %v3153 = vunpack.c.l.b16 %v3067
    %v3154 = vunpack.c.h.b16 %v3067
    %v3155 = vunpack.c.l.b16 %v3068
    %v3156 = vunpack.c.h.b16 %v3068
    %v3157 = vunpack.c.l.b16 %v3069
    %v3158 = vunpack.c.h.b16 %v3069
    %v3159 = vunpack.c.l.b16 %v3070
    %v3160 = vunpack.c.h.b16 %v3070
    %v3161 = vunpack.c.l.b16 %v3071
    %v3162 = vunpack.c.h.b16 %v3071
    %v3163 = vunpack.c.l.b16 %v3072
    %v3164 = vunpack.c.h.b16 %v3072
    %v3165 = vunpack.c.l.b16 %v3073
    %v3166 = vunpack.c.h.b16 %v3073
    %v3167 = vunpack.c.l.b16 %v3074
    %v3168 = vunpack.c.h.b16 %v3074
    %v3169 = vunpack.c.l.b16 %v3075
    %v3170 = vunpack.c.h.b16 %v3075
    %v3171 = vunpack.c.l.b16 %v3076
    %v3172 = vunpack.c.h.b16 %v3076
    %v3173 = vunpack.c.l.b16 %v3077
    %v3174 = vunpack.c.h.b16 %v3077
    %v3175 = vunpack.c.l.b16 %v3078
    %v3176 = vunpack.c.h.b16 %v3078
    %v3177 = vunpack.c.l.b16 %v3079
    %v3178 = vunpack.c.h.b16 %v3079
    %v3179 = vunpack.c.l.b16 %v3080
    %v3180 = vunpack.c.h.b16 %v3080
    %v3181 = vunpack.c.l.b16 %v3081
    %v3182 = vunpack.c.h.b16 %v3081
    %v3183 = vunpack.c.l.b16 %v3082
    %v3184 = vunpack.c.h.b16 %v3082
    %v3185 = vunpack.c.l.b16 %v3083
    %v3186 = vunpack.c.h.b16 %v3083
    %v3187 = vunpack.c.l.b16 %v3084
    %v3188 = vunpack.c.h.b16 %v3084
    %v3189 = vunpack.c.l.b16 %v3085
    %v3190 = vunpack.c.h.b16 %v3085
    %v3191 = vunpack.c.l.b16 %v3086
    %v3192 = vunpack.c.h.b16 %v3086
    %v3193 = vunpack.c.l.b16 %v3087
    %v3194 = vunpack.c.h.b16 %v3087
    %v3195 = vunpack.c.l.b16 %v3088
    %v3196 = vunpack.c.h.b16 %v3088
    %v3197 = vunpack.c.l.b16 %v3089
    %v3198 = vunpack.c.h.b16 %v3089
    %v3199 = vpack.c.b16 %v3137, %v3135
    %v3200 = vpack.c.b16 %v3138, %v3136
    %v3201 = vpack.c.b16 %v3141, %v3139
    %v3202 = vpack.c.b16 %v3142, %v3140
    %v3203 = vpack.c.b16 %v3145, %v3143
    %v3204 = vpack.c.b16 %v3146, %v3144
    %v3205 = vpack.c.b16 %v3149, %v3147
    %v3206 = vpack.c.b16 %v3150, %v3148
    %v3207 = vpack.c.b16 %v3153, %v3151
    %v3208 = vpack.c.b16 %v3154, %v3152
    %v3209 = vpack.c.b16 %v3157, %v3155
    %v3210 = vpack.c.b16 %v3158, %v3156
    %v3211 = vpack.c.b16 %v3161, %v3159
    %v3212 = vpack.c.b16 %v3162, %v3160
    %v3213 = vpack.c.b16 %v3165, %v3163
    %v3214 = vpack.c.b16 %v3166, %v3164
    %v3215 = vpack.c.b16 %v3169, %v3167
    %v3216 = vpack.c.b16 %v3170, %v3168
    %v3217 = vpack.c.b16 %v3173, %v3171
    %v3218 = vpack.c.b16 %v3174, %v3172
    %v3219 = vpack.c.b16 %v3177, %v3175
    %v3220 = vpack.c.b16 %v3178, %v3176
    %v3221 = vpack.c.b16 %v3181, %v3179
    %v3222 = vpack.c.b16 %v3182, %v3180
    %v3223 = vpack.c.b16 %v3185, %v3183
    %v3224 = vpack.c.b16 %v3186, %v3184
    %v3225 = vpack.c.b16 %v3189, %v3187
    %v3226 = vpack.c.b16 %v3190, %v3188
    %v3227 = vpack.c.b16 %v3193, %v3191
    %v3228 = vpack.c.b16 %v3194, %v3192
    %v3229 = vpack.c.b16 %v3197, %v3195
    %v3230 = vpack.c.b16 %v3198, %v3196
    %3263 = vmatprep.subr.bf16.mxu0 %v3214
    %3264 = vmatpush1.bf16.msra.mxu0 %v3213
    %3265 = vmatprep.subr.bf16.mxu0 %v3212
    %3266 = vmatpush1.bf16.msra.mxu0 %v3211
    %3267 = vmatprep.subr.bf16.mxu0 %v3210
    %3268 = vmatpush1.bf16.msra.mxu0 %v3209
    %3269 = vmatprep.subr.bf16.mxu0 %v3208
    %3270 = vmatpush1.bf16.msra.mxu0 %v3207
    %3271 = vmatprep.subr.bf16.mxu0 %v3206
    %3272 = vmatpush1.bf16.msra.mxu0 %v3205
    %3273 = vmatprep.subr.bf16.mxu0 %v3204
    %3274 = vmatpush1.bf16.msra.mxu0 %v3203
    %3275 = vmatprep.subr.bf16.mxu0 %v3202
    %3276 = vmatpush1.bf16.msra.mxu0 %v3201
    %3277 = vmatprep.subr.bf16.mxu0 %v3200
    %3278 = vmatpush1.bf16.msra.mxu0 %v3199
    %3279 = vmatprep.subr.bf16.mxu0 %v3230
    %3280 = vmatpush2.bf16.msra.mxu0 %v3229
    %3281 = vmatprep.subr.bf16.mxu0 %v3228
    %3282 = vmatpush2.bf16.msra.mxu0 %v3227
    %3283 = vmatprep.subr.bf16.mxu0 %v3226
    %3284 = vmatpush2.bf16.msra.mxu0 %v3225
    %3285 = vmatprep.subr.bf16.mxu0 %v3224
    %3286 = vmatpush2.bf16.msra.mxu0 %v3223
    %3287 = vmatprep.subr.bf16.mxu0 %v3222
    %3288 = vmatpush2.bf16.msra.mxu0 %v3221
    %3289 = vmatprep.subr.bf16.mxu0 %v3220
    %3290 = vmatpush2.bf16.msra.mxu0 %v3219
    %3291 = vmatprep.subr.bf16.mxu0 %v3218
    %3292 = vmatpush2.bf16.msra.mxu0 %v3217
    %3293 = vmatprep.subr.bf16.mxu0 %v3216
    %3294 = vmatpush2.bf16.msra.mxu0 %v3215
    %3295 = vmatprep.mubr.bf16.mxu0 %v3042
    %3296 = vmatmul.mubr.bf16.gmra.mxu0 %v3041
    %v3297 = vpop.f32.mrf.mxu0
    %v3298 = vadd.f32 %v3096, %v3297
    %v3299 = vpop.f32.mrf.mxu0
    %v3300 = vadd.f32 %v3100, %v3299
    %v3301 = vpop.f32.mrf.mxu0
    %v3302 = vadd.f32 %v3096, %v3301
    %v3303 = vpop.f32.mrf.mxu0
    %v3304 = vadd.f32 %v3100, %v3303
    %3305 = vmatprep.mubr.bf16.mxu0 %v3044
    %3306 = vmatmul.mubr.bf16.gmra.mxu0 %v3043
    %v3307 = vpop.f32.mrf.mxu0
    %v3308 = vadd.f32 %v3096, %v3307
    %v3309 = vpop.f32.mrf.mxu0
    %v3310 = vadd.f32 %v3100, %v3309
    %v3311 = vpop.f32.mrf.mxu0
    %v3312 = vadd.f32 %v3096, %v3311
    %v3313 = vpop.f32.mrf.mxu0
    %v3314 = vadd.f32 %v3100, %v3313
    %3315 = vmatprep.mubr.bf16.mxu0 %v3046
    %3316 = vmatmul.mubr.bf16.gmra.mxu0 %v3045
    %v3317 = vpop.f32.mrf.mxu0
    %v3318 = vadd.f32 %v3096, %v3317
    %v3319 = vpop.f32.mrf.mxu0
    %v3320 = vadd.f32 %v3100, %v3319
    %v3321 = vpop.f32.mrf.mxu0
    %v3322 = vadd.f32 %v3096, %v3321
    %v3323 = vpop.f32.mrf.mxu0
    %v3324 = vadd.f32 %v3100, %v3323
    %3325 = vmatprep.mubr.bf16.mxu0 %v3048
    %3326 = vmatmul.mubr.bf16.gmra.mxu0 %v3047
    %v3327 = vpop.f32.mrf.mxu0
    %v3328 = vadd.f32 %v3096, %v3327
    %v3329 = vpop.f32.mrf.mxu0
    %v3330 = vadd.f32 %v3100, %v3329
    %v3331 = vpop.f32.mrf.mxu0
    %v3332 = vadd.f32 %v3096, %v3331
    %v3333 = vpop.f32.mrf.mxu0
    %v3334 = vadd.f32 %v3100, %v3333
    %3335 = vmatprep.mubr.bf16.mxu0 %v3050
    %3336 = vmatmul.mubr.bf16.gmra.mxu0 %v3049
    %v3337 = vpop.f32.mrf.mxu0
    %v3338 = vadd.f32 %v3096, %v3337
    %v3339 = vpop.f32.mrf.mxu0
    %v3340 = vadd.f32 %v3100, %v3339
    %v3341 = vpop.f32.mrf.mxu0
    %v3342 = vadd.f32 %v3096, %v3341
    %v3343 = vpop.f32.mrf.mxu0
    %v3344 = vadd.f32 %v3100, %v3343
    %3345 = vmatprep.mubr.bf16.mxu0 %v3052
    %3346 = vmatmul.mubr.bf16.gmra.mxu0 %v3051
    %v3347 = vpop.f32.mrf.mxu0
    %v3348 = vadd.f32 %v3096, %v3347
    %v3349 = vpop.f32.mrf.mxu0
    %v3350 = vadd.f32 %v3100, %v3349
    %v3351 = vpop.f32.mrf.mxu0
    %v3352 = vadd.f32 %v3096, %v3351
    %v3353 = vpop.f32.mrf.mxu0
    %v3354 = vadd.f32 %v3100, %v3353
    %3355 = vmatprep.mubr.bf16.mxu0 %v3054
    %3356 = vmatmul.mubr.bf16.gmra.mxu0 %v3053
    %v3357 = vpop.f32.mrf.mxu0
    %v3358 = vadd.f32 %v3096, %v3357
    %v3359 = vpop.f32.mrf.mxu0
    %v3360 = vadd.f32 %v3100, %v3359
    %v3361 = vpop.f32.mrf.mxu0
    %v3362 = vadd.f32 %v3096, %v3361
    %v3363 = vpop.f32.mrf.mxu0
    %v3364 = vadd.f32 %v3100, %v3363
    %3365 = vmatprep.mubr.bf16.mxu0 %v3056
    %3366 = vmatmul.mubr.bf16.gmra.mxu0 %v3055
    %v3367 = vpop.f32.mrf.mxu0
    %v3368 = vadd.f32 %v3096, %v3367
    %v3369 = vpop.f32.mrf.mxu0
    %v3370 = vadd.f32 %v3100, %v3369
    %v3371 = vpop.f32.mrf.mxu0
    %v3372 = vadd.f32 %v3096, %v3371
    %v3373 = vpop.f32.mrf.mxu0
    %v3374 = vadd.f32 %v3100, %v3373
    %3375 = vdwg.mxu0
    %v3376 = vmax.f32 %v3298, 0.0
    %v3377 = vmax.f32 %v3300, 0.0
    %v3378 = vmax.f32 %v3302, 0.0
    %v3379 = vmax.f32 %v3304, 0.0
    %v3380 = vmax.f32 %v3308, 0.0
    %v3381 = vmax.f32 %v3310, 0.0
    %v3382 = vmax.f32 %v3312, 0.0
    %v3383 = vmax.f32 %v3314, 0.0
    %v3384 = vmax.f32 %v3318, 0.0
    %v3385 = vmax.f32 %v3320, 0.0
    %v3386 = vmax.f32 %v3322, 0.0
    %v3387 = vmax.f32 %v3324, 0.0
    %v3388 = vmax.f32 %v3328, 0.0
    %v3389 = vmax.f32 %v3330, 0.0
    %v3390 = vmax.f32 %v3332, 0.0
    %v3391 = vmax.f32 %v3334, 0.0
    %v3392 = vmax.f32 %v3338, 0.0
    %v3393 = vmax.f32 %v3340, 0.0
    %v3394 = vmax.f32 %v3342, 0.0
    %v3395 = vmax.f32 %v3344, 0.0
    %v3396 = vmax.f32 %v3348, 0.0
    %v3397 = vmax.f32 %v3350, 0.0
    %v3398 = vmax.f32 %v3352, 0.0
    %v3399 = vmax.f32 %v3354, 0.0
    %v3400 = vmax.f32 %v3358, 0.0
    %v3401 = vmax.f32 %v3360, 0.0
    %v3402 = vmax.f32 %v3362, 0.0
    %v3403 = vmax.f32 %v3364, 0.0
    %v3404 = vmax.f32 %v3368, 0.0
    %v3405 = vmax.f32 %v3370, 0.0
    %v3406 = vmax.f32 %v3372, 0.0
    %v3407 = vmax.f32 %v3374, 0.0
    %v3408 = vpack.c.bf16 %v3378, %v3376
    %v3409 = vpack.c.bf16 %v3379, %v3377
    %v3410 = vpack.c.bf16 %v3382, %v3380
    %v3411 = vpack.c.bf16 %v3383, %v3381
    %v3412 = vpack.c.bf16 %v3386, %v3384
    %v3413 = vpack.c.bf16 %v3387, %v3385
    %v3414 = vpack.c.bf16 %v3390, %v3388
    %v3415 = vpack.c.bf16 %v3391, %v3389
    %v3416 = vpack.c.bf16 %v3394, %v3392
    %v3417 = vpack.c.bf16 %v3395, %v3393
    %v3418 = vpack.c.bf16 %v3398, %v3396
    %v3419 = vpack.c.bf16 %v3399, %v3397
    %v3420 = vpack.c.bf16 %v3402, %v3400
    %v3421 = vpack.c.bf16 %v3403, %v3401
    %v3422 = vpack.c.bf16 %v3406, %v3404
    %v3423 = vpack.c.bf16 %v3407, %v3405
    %v3424 = vld [vmem:[%s6] sm:$0x3]
    %v3425 = vunpack.c.l.bf16 %v3408
    %v3426 = vunpack.c.l.bf16 %v3409
    %v3427 = vunpack.c.h.bf16 %v3408
    %v3428 = vunpack.c.h.bf16 %v3409
    %v3429 = vunpack.c.l.bf16 %v3410
    %v3430 = vunpack.c.l.bf16 %v3411
    %v3431 = vunpack.c.h.bf16 %v3410
    %v3432 = vunpack.c.h.bf16 %v3411
    %v3433 = vunpack.c.l.bf16 %v3412
    %v3434 = vunpack.c.l.bf16 %v3413
    %v3435 = vunpack.c.h.bf16 %v3412
    %v3436 = vunpack.c.h.bf16 %v3413
    %v3437 = vunpack.c.l.bf16 %v3414
    %v3438 = vunpack.c.l.bf16 %v3415
    %v3439 = vunpack.c.h.bf16 %v3414
    %v3440 = vunpack.c.h.bf16 %v3415
    %v3441 = vunpack.c.l.bf16 %v3416
    %v3442 = vunpack.c.l.bf16 %v3417
    %v3443 = vunpack.c.h.bf16 %v3416
    %v3444 = vunpack.c.h.bf16 %v3417
    %v3445 = vunpack.c.l.bf16 %v3418
    %v3446 = vunpack.c.l.bf16 %v3419
    %v3447 = vunpack.c.h.bf16 %v3418
    %v3448 = vunpack.c.h.bf16 %v3419
    %v3449 = vunpack.c.l.bf16 %v3420
    %v3450 = vunpack.c.l.bf16 %v3421
    %v3451 = vunpack.c.h.bf16 %v3420
    %v3452 = vunpack.c.h.bf16 %v3421
    %v3453 = vunpack.c.l.bf16 %v3422
    %v3454 = vunpack.c.l.bf16 %v3423
    %v3455 = vunpack.c.h.bf16 %v3422
    %v3456 = vunpack.c.h.bf16 %v3423
    %v3458 = vlaneseq
    %v3459 = vshrl.u32 %v3458, 7
    %v3460 = vsub.s32 0, %v3459
    %v3461 = vrot.slane %v3424, %v3460
    %v3462 = vlaneseq
    %v3463 = vshrl.u32 %v3462, 7
    %v3464 = vsub.s32 1, %v3463
    %v3465 = vrot.slane %v3424, %v3464
    %v3468 = vmul.f32 %v3425, %v3461
    %v3469 = vmul.f32 %v3426, %v3465
    %v3470 = vmul.f32 %v3427, %v3461
    %v3471 = vmul.f32 %v3428, %v3465
    %v3472 = vmul.f32 %v3429, %v3461
    %v3473 = vmul.f32 %v3430, %v3465
    %v3474 = vmul.f32 %v3431, %v3461
    %v3475 = vmul.f32 %v3432, %v3465
    %v3476 = vmul.f32 %v3433, %v3461
    %v3477 = vmul.f32 %v3434, %v3465
    %v3478 = vmul.f32 %v3435, %v3461
    %v3479 = vmul.f32 %v3436, %v3465
    %v3480 = vmul.f32 %v3437, %v3461
    %v3481 = vmul.f32 %v3438, %v3465
    %v3482 = vmul.f32 %v3439, %v3461
    %v3483 = vmul.f32 %v3440, %v3465
    %v3484 = vmul.f32 %v3441, %v3461
    %v3485 = vmul.f32 %v3442, %v3465
    %v3486 = vmul.f32 %v3443, %v3461
    %v3487 = vmul.f32 %v3444, %v3465
    %v3488 = vmul.f32 %v3445, %v3461
    %v3489 = vmul.f32 %v3446, %v3465
    %v3490 = vmul.f32 %v3447, %v3461
    %v3491 = vmul.f32 %v3448, %v3465
    %v3492 = vmul.f32 %v3449, %v3461
    %v3493 = vmul.f32 %v3450, %v3465
    %v3494 = vmul.f32 %v3451, %v3461
    %v3495 = vmul.f32 %v3452, %v3465
    %v3496 = vmul.f32 %v3453, %v3461
    %v3497 = vmul.f32 %v3454, %v3465
    %v3498 = vmul.f32 %v3455, %v3461
    %v3499 = vmul.f32 %v3456, %v3465
    %v3500 = vadd.f32 %v3468, %v3469
    %3501 = vadd.xlane.f32.xlu0 %v3500
    %v3502 = vpop.xlane.xlu0 %3501
    %v3503 = vadd.f32 %v3470, %v3471
    %3504 = vadd.xlane.f32.xlu0 %v3503
    %v3505 = vpop.xlane.xlu0 %3504
    %v3506 = vadd.f32 %v3472, %v3473
    %3507 = vadd.xlane.f32.xlu0 %v3506
    %v3508 = vpop.xlane.xlu0 %3507
    %v3509 = vadd.f32 %v3474, %v3475
    %3510 = vadd.xlane.f32.xlu0 %v3509
    %v3511 = vpop.xlane.xlu0 %3510
    %v3512 = vadd.f32 %v3476, %v3477
    %3513 = vadd.xlane.f32.xlu0 %v3512
    %v3514 = vpop.xlane.xlu0 %3513
    %v3515 = vadd.f32 %v3478, %v3479
    %3516 = vadd.xlane.f32.xlu0 %v3515
    %v3517 = vpop.xlane.xlu0 %3516
    %v3518 = vadd.f32 %v3480, %v3481
    %3519 = vadd.xlane.f32.xlu0 %v3518
    %v3520 = vpop.xlane.xlu0 %3519
    %v3521 = vadd.f32 %v3482, %v3483
    %3522 = vadd.xlane.f32.xlu0 %v3521
    %v3523 = vpop.xlane.xlu0 %3522
    %v3524 = vadd.f32 %v3484, %v3485
    %3525 = vadd.xlane.f32.xlu0 %v3524
    %v3526 = vpop.xlane.xlu0 %3525
    %v3527 = vadd.f32 %v3486, %v3487
    %3528 = vadd.xlane.f32.xlu0 %v3527
    %v3529 = vpop.xlane.xlu0 %3528
    %v3530 = vadd.f32 %v3488, %v3489
    %3531 = vadd.xlane.f32.xlu0 %v3530
    %v3532 = vpop.xlane.xlu0 %3531
    %v3533 = vadd.f32 %v3490, %v3491
    %3534 = vadd.xlane.f32.xlu0 %v3533
    %v3535 = vpop.xlane.xlu0 %3534
    %v3536 = vadd.f32 %v3492, %v3493
    %3537 = vadd.xlane.f32.xlu0 %v3536
    %v3538 = vpop.xlane.xlu0 %3537
    %v3539 = vadd.f32 %v3494, %v3495
    %3540 = vadd.xlane.f32.xlu0 %v3539
    %v3541 = vpop.xlane.xlu0 %3540
    %v3542 = vadd.f32 %v3496, %v3497
    %3543 = vadd.xlane.f32.xlu0 %v3542
    %v3544 = vpop.xlane.xlu0 %3543
    %v3545 = vadd.f32 %v3498, %v3499
    %3546 = vadd.xlane.f32.xlu0 %v3545
    %v3547 = vpop.xlane.xlu0 %3546
    %v3548 = vld [vmem:[#allocation2] sm:$0x1]
    %v3550 = vlaneseq
    %v3551 = vshrl.u32 %v3550, 7
    %v3552 = vsub.s32 0, %v3551
    %v3553 = vrot.slane %v3548, %v3552
    %v3555 = vadd.f32 %v3502, %v3553
    %v3556 = vadd.f32 %v3505, %v3553
    %v3557 = vadd.f32 %v3508, %v3553
    %v3558 = vadd.f32 %v3511, %v3553
    %v3559 = vadd.f32 %v3514, %v3553
    %v3560 = vadd.f32 %v3517, %v3553
    %v3561 = vadd.f32 %v3520, %v3553
    %v3562 = vadd.f32 %v3523, %v3553
    %v3563 = vadd.f32 %v3526, %v3553
    %v3564 = vadd.f32 %v3529, %v3553
    %v3565 = vadd.f32 %v3532, %v3553
    %v3566 = vadd.f32 %v3535, %v3553
    %v3567 = vadd.f32 %v3538, %v3553
    %v3568 = vadd.f32 %v3541, %v3553
    %v3569 = vadd.f32 %v3544, %v3553
    %v3570 = vadd.f32 %v3547, %v3553
    %vm3571 = vcmask 7168
    %3572 = vst.msk [vmem:[%s8] sm:$0xff] %vm3571, %v3555
    %3573 = vst.msk [vmem:[%s8 + $0x8] sm:$0xff] %vm3571, %v3556
    %3574 = vst.msk [vmem:[%s8 + $0x10] sm:$0xff] %vm3571, %v3557
    %3575 = vst.msk [vmem:[%s8 + $0x18] sm:$0xff] %vm3571, %v3558
    %3576 = vst.msk [vmem:[%s8 + $0x20] sm:$0xff] %vm3571, %v3559
    %3577 = vst.msk [vmem:[%s8 + $0x28] sm:$0xff] %vm3571, %v3560
    %3578 = vst.msk [vmem:[%s8 + $0x30] sm:$0xff] %vm3571, %v3561
    %3579 = vst.msk [vmem:[%s8 + $0x38] sm:$0xff] %vm3571, %v3562
    %3580 = vst.msk [vmem:[%s8 + $0x40] sm:$0xff] %vm3571, %v3563
    %3581 = vst.msk [vmem:[%s8 + $0x48] sm:$0xff] %vm3571, %v3564
    %3582 = vst.msk [vmem:[%s8 + $0x50] sm:$0xff] %vm3571, %v3565
    %3583 = vst.msk [vmem:[%s8 + $0x58] sm:$0xff] %vm3571, %v3566
    %3584 = vst.msk [vmem:[%s8 + $0x60] sm:$0xff] %vm3571, %v3567
    %3585 = vst.msk [vmem:[%s8 + $0x68] sm:$0xff] %vm3571, %v3568
    %3586 = vst.msk [vmem:[%s8 + $0x70] sm:$0xff] %vm3571, %v3569
    %3587 = vst.msk [vmem:[%s8 + $0x78] sm:$0xff] %vm3571, %v3570
    // Predicated region
    $region38: #{tpu_custom_call.1} parent=1 // pred_check
      _
    $region39: #{tpu_custom_call.1} parent=1 // pred_check_branch
      %3589 = sbr.rel (0) target = $region41
    $region40: #{tpu_custom_call.1} parent=1 // pred_region
      _
    $region41: #{tpu_custom_call.1} parent=1 // pred_fallthru
      _
    // Predicated region
    $region42: #{tpu_custom_call.1} parent=1 // pred_check
      _
    $region43: #{tpu_custom_call.1} parent=1 // pred_check_branch
      %3591 = sbr.rel (0) target = $region45
    $region44: #{tpu_custom_call.1} parent=1 // pred_region
      _
    $region45: #{tpu_custom_call.1} parent=1 // pred_fallthru
      _
    %3592 = vsyncpa [#allocation4], 1

</llo_original>
